<compile_context>
chip_gen: v6e
topology: v6e:2x2x1
jax: 0.10.0
libtpu: 0.0.40
codegen_flags: <defaults>
</compile_context>

<pallas_src>
import jax
import jax.numpy as jnp
from jax.experimental import pallas as pl
from jax.experimental.pallas import tpu as pltpu


# ---------------------------------------------------------------------------
# Fused kernel factory (shapes baked in as Python constants)
# ---------------------------------------------------------------------------
def _make_kernel(Hp, Wp, Cin, Cout):
    R = Hp * Wp                    # rows of the flat padded frame
    R1 = R - 4 * Wp - 4            # conv1 rows computable without OOB tap reads
    OFF1 = 2 * Wp + 2              # flat position of first computed conv1 row
    SOFF = Wp + 1                  # halo offset inside the act1 scratch
    K1 = 9 * Cin                   # packed K for conv1
    K2 = 9 * Cout + Cin            # packed K for conv2 (+ 1x1 shortcut)

    def kernel(xf_ref, mask_ref, w1p_ref, b1_ref, w2p_ref, b2_ref,
               o_ref, kpack1, act1s, kpack2):
        # ------------- stage 1: conv1 (3x3, dil=2, pad=2) + BN + ReLU -------
        # Pack the 9 row-shifted taps along the channel (K) axis in VMEM, then
        # run one deep-K matmul on the MXU.
        for t in range(9):
            kh, kw = t // 3, t % 3
            off = 2 * (kh * Wp + kw)
            kpack1[:, t * Cin:(t + 1) * Cin] = xf_ref[0, off:off + R1, :]
        a1 = jnp.dot(kpack1[...], w1p_ref[...],
                     preferred_element_type=jnp.float32)
        # Folded-BN bias + ReLU; mask zeroes every non-image position so that
        # conv2 sees exactly PyTorch's zero padding of act1.
        a1 = jnp.maximum(a1 + b1_ref[...], 0.0) * mask_ref[...]

        # act1 lives only in VMEM, stored in a haloed flat frame (zero border).
        act1s[...] = jnp.zeros(act1s.shape, jnp.float32)
        act1s[OFF1 + SOFF:OFF1 + SOFF + R1, :] = a1

        # ------------- stage 2: conv2 (3x3, pad=1) + BN, shortcut, add, ReLU -
        # The 9 act1 taps and the 1x1 shortcut input are packed as one K axis
        # so the whole second stage (incl. residual branch) is one matmul.
        for t in range(9):
            kh, kw = t // 3, t % 3
            off = kh * Wp + kw
            kpack2[:, t * Cout:(t + 1) * Cout] = act1s[off:off + R, :]
        kpack2[:, 9 * Cout:9 * Cout + Cin] = xf_ref[0]
        y = jnp.dot(kpack2[...], w2p_ref[...],
                    preferred_element_type=jnp.float32)
        o_ref[0] = jnp.maximum(y + b2_ref[...], 0.0).astype(o_ref.dtype)

    return kernel, R, R1, OFF1, K1, K2


def _fold_bn(gamma, beta, mean, var, conv_bias, eps=1e-5):
    scale = gamma / jnp.sqrt(var + eps)
    bias = beta + scale * (conv_bias - mean)
    return scale, bias


# ---------------------------------------------------------------------------
# Forward pass (NCHW in / NCHW out, like the PyTorch module in eval mode)
# ---------------------------------------------------------------------------
@jax.jit
def resnet_forward(x_nchw, params):
    N, Cin, H, W = x_nchw.shape
    Cout = params["w1"].shape[0]
    PAD = 2                               # covers conv1's pad=2 + conv2's halo
    Hp, Wp = H + 2 * PAD, W + 2 * PAD

    kernel, R, R1, OFF1, K1, K2 = _make_kernel(Hp, Wp, Cin, Cout)

    # NCHW -> NHWC, zero-pad spatially, flatten (H, W): cheap host glue, no
    # data duplication.
    x_nhwc = jnp.transpose(x_nchw, (0, 2, 3, 1))
    xp = jnp.pad(x_nhwc, ((0, 0), (PAD, PAD), (PAD, PAD), (0, 0)))
    xf = xp.reshape(N, R, Cin)

    # Valid-pixel mask for the conv1 output range.
    pidx = jnp.arange(OFF1, OFF1 + R1, dtype=jnp.int32)
    row, col = pidx // Wp, pidx % Wp
    valid = (row >= PAD) & (row < PAD + H) & (col >= PAD) & (col < PAD + W)
    mask1 = valid.astype(jnp.float32)[:, None]                    # (R1, 1)

    # Fold eval-mode BatchNorm scales into the conv weights.
    s1, b1f = _fold_bn(params["bn1_g"], params["bn1_b"],
                       params["bn1_m"], params["bn1_v"], params["b1"])
    s2, b2f = _fold_bn(params["bn2_g"], params["bn2_b"],
                       params["bn2_m"], params["bn2_v"], params["b2"])
    ssc, bscf = _fold_bn(params["bnsc_g"], params["bnsc_b"],
                         params["bnsc_m"], params["bnsc_v"], params["bsc"])

    w1s = params["w1"] * s1[:, None, None, None]                  # (Cout,Cin,3,3)
    w1p = jnp.transpose(w1s, (2, 3, 1, 0)).reshape(K1, Cout)      # (9*Cin,Cout)

    w2s = params["w2"] * s2[:, None, None, None]                  # (Cout,Cout,3,3)
    w2p = jnp.transpose(w2s, (2, 3, 1, 0)).reshape(9 * Cout, Cout)
    wscs = (params["wsc"] * ssc[:, None, None, None])[:, :, 0, 0]  # (Cout,Cin)
    w2p = jnp.concatenate([w2p, wscs.T], axis=0)                  # (K2, Cout)

    b1v = b1f.reshape(1, Cout)
    b2v = (b2f + bscf).reshape(1, Cout)

    out_flat = pl.pallas_call(
        kernel,
        out_shape=jax.ShapeDtypeStruct((N, R, Cout), jnp.float32),
        grid=(N,),  # batch loop; for bigger images add a row-band axis
        in_specs=[
            pl.BlockSpec((1, R, Cin), lambda n: (n, 0, 0)),       # flat input
            pl.BlockSpec((R1, 1), lambda n: (0, 0)),              # valid mask
            pl.BlockSpec((K1, Cout), lambda n: (0, 0)),           # packed w1
            pl.BlockSpec((1, Cout), lambda n: (0, 0)),            # folded b1
            pl.BlockSpec((K2, Cout), lambda n: (0, 0)),           # packed w2+wsc
            pl.BlockSpec((1, Cout), lambda n: (0, 0)),            # folded b2+bsc
        ],
        out_specs=pl.BlockSpec((1, R, Cout), lambda n: (n, 0, 0)),
        scratch_shapes=[
            pltpu.VMEM((R1, K1), jnp.float32),                    # conv1 K-pack
            pltpu.VMEM((R + 2 * Wp + 2, Cout), jnp.float32),      # haloed act1
            pltpu.VMEM((R, K2), jnp.float32),                     # conv2 K-pack
        ],
        compiler_params=pltpu.CompilerParams(
            dimension_semantics=("parallel",),
            vmem_limit_bytes=64 * 1024 * 1024),  # cap w/ headroom; ~1 MiB used
    )(xf, mask1, w1p, b1v, w2p, b2v)

    out = out_flat.reshape(N, Hp, Wp, Cout)[:, PAD:PAD + H, PAD:PAD + W, :]
    return jnp.transpose(out, (0, 3, 1, 2))   # back to NCHW like PyTorch


# ---------------------------------------------------------------------------
# Pure-JAX reference (eval-mode BatchNorm), for correctness check
# ---------------------------------------------------------------------------
def _ref_conv(x, w, b, pad, dil):
    out = jax.lax.conv_general_dilated(
        x, w, window_strides=(1, 1),
        padding=[(pad, pad), (pad, pad)],
        rhs_dilation=(dil, dil),
        dimension_numbers=("NCHW", "OIHW", "NCHW"))
    return out + b[None, :, None, None]


def _ref_bn(x, g, b, m, v, eps=1e-5):
    return (x - m[None, :, None, None]) / jnp.sqrt(v[None, :, None, None] + eps) \
        * g[None, :, None, None] + b[None, :, None, None]


def resnet_reference(x, p):
    c1 = _ref_conv(x, p["w1"], p["b1"], pad=2, dil=2)
    act1 = jax.nn.relu(_ref_bn(c1, p["bn1_g"], p["bn1_b"], p["bn1_m"], p["bn1_v"]))
    c2 = _ref_conv(act1, p["w2"], p["b2"], pad=1, dil=1)
    b2 = _ref_bn(c2, p["bn2_g"], p["bn2_b"], p["bn2_m"], p["bn2_v"])
    sc = _ref_conv(x, p["wsc"], p["bsc"], pad=0, dil=1)
    bsc = _ref_bn(sc, p["bnsc_g"], p["bnsc_b"], p["bnsc_m"], p["bnsc_v"])
    return jax.nn.relu(bsc + b2)


def make_params(key, cin, cout):
    ks = jax.random.split(key, 16)
    u = lambda k, shape, s=0.2: jax.random.normal(k, shape, jnp.float32) * s
    return {
        "w1": u(ks[0], (cout, cin, 3, 3)),  "b1": u(ks[1], (cout,)),
        "w2": u(ks[2], (cout, cout, 3, 3)), "b2": u(ks[3], (cout,)),
        "wsc": u(ks[4], (cout, cin, 1, 1)), "bsc": u(ks[5], (cout,)),
        "bn1_g": 1.0 + u(ks[6], (cout,)),  "bn1_b": u(ks[7], (cout,)),
        "bn1_m": u(ks[8], (cout,)),        "bn1_v": 0.5 + jax.random.uniform(ks[9], (cout,)),
        "bn2_g": 1.0 + u(ks[10], (cout,)), "bn2_b": u(ks[11], (cout,)),
        "bn2_m": u(ks[12], (cout,)),       "bn2_v": 0.5 + jax.random.uniform(ks[13], (cout,)),
        "bnsc_g": 1.0 + u(ks[14], (cout,)), "bnsc_b": u(ks[15], (cout,)),
        "bnsc_m": jnp.zeros((cout,), jnp.float32),
        "bnsc_v": jnp.ones((cout,), jnp.float32),
    }


if __name__ == "__main__":
    key = jax.random.PRNGKey(0)
    kx, kp = jax.random.split(key)

    N, Cin, Cout, H, W = 2, 4, 8, 16, 16
    x = jax.random.normal(kx, (N, Cin, H, W), jnp.float32)
    params = make_params(kp, Cin, Cout)

    out = resnet_forward(x, params)
    out = jax.block_until_ready(out)

    ref = jax.block_until_ready(resnet_reference(x, params))
    assert out.shape == (N, Cout, H, W), out.shape
    assert jnp.allclose(out, ref, atol=1e-4, rtol=1e-4), \
        float(jnp.max(jnp.abs(out - ref)))

    print("KERNEL_OK")
</pallas_src>

<mosaic_0001>
module attributes {stable_mosaic.version = 11 : i64} {
  func.func @kernel(%arg0: i32, %arg1: memref<1x400x4xf32, #tpu.memory_space<vmem>>, %arg2: memref<316x1xf32, #tpu.memory_space<vmem>>, %arg3: memref<36x8xf32, #tpu.memory_space<vmem>>, %arg4: memref<1x8xf32, #tpu.memory_space<vmem>>, %arg5: memref<76x8xf32, #tpu.memory_space<vmem>>, %arg6: memref<1x8xf32, #tpu.memory_space<vmem>>, %arg7: memref<1x400x8xf32, #tpu.memory_space<vmem>>, %arg8: memref<316x36xf32, #tpu.memory_space<vmem>>, %arg9: memref<442x8xf32, #tpu.memory_space<vmem>>, %arg10: memref<400x76xf32, #tpu.memory_space<vmem>>) attributes {dimension_semantics = [#tpu.dimension_semantics<parallel>], iteration_bounds = array<i64: 2>, scalar_prefetch = 0 : i64, scratch_operands = 3 : i64, tpu.core_type = #tpu.core_type<tc>, window_params = [{transform_indices = @transform_0, window_bounds = array<i64: 1, 400, 4>}, {pipeline_mode = #tpu.pipeline_mode<synchronous>, transform_indices = @transform_1, window_bounds = array<i64: 316, 1>}, {pipeline_mode = #tpu.pipeline_mode<synchronous>, transform_indices = @transform_2, window_bounds = array<i64: 36, 8>}, {pipeline_mode = #tpu.pipeline_mode<synchronous>, transform_indices = @transform_3, window_bounds = array<i64: 1, 8>}, {pipeline_mode = #tpu.pipeline_mode<synchronous>, transform_indices = @transform_4, window_bounds = array<i64: 76, 8>}, {pipeline_mode = #tpu.pipeline_mode<synchronous>, transform_indices = @transform_5, window_bounds = array<i64: 1, 8>}, {transform_indices = @transform_6, window_bounds = array<i64: 1, 400, 8>}]} {
    %c0 = arith.constant 0 : index
    %c0_0 = arith.constant 0 : index
    %c0_1 = arith.constant 0 : index
    %0 = vector.load %arg1[%c0, %c0_0, %c0_1] : memref<1x400x4xf32, #tpu.memory_space<vmem>>, vector<1x316x4xf32>
    %1 = vector.shape_cast %0 : vector<1x316x4xf32> to vector<316x4xf32>
    %c0_2 = arith.constant 0 : index
    %c0_3 = arith.constant 0 : index
    %2 = vector.load %arg8[%c0_2, %c0_3] : memref<316x36xf32, #tpu.memory_space<vmem>>, vector<316x4xf32>
    tpu.vector_store %arg8[%c0_2, %c0_3], %1 {strides = array<i32>} : memref<316x36xf32, #tpu.memory_space<vmem>>, vector<316x4xf32>,
    %c0_4 = arith.constant 0 : index
    %c2 = arith.constant 2 : index
    %c0_5 = arith.constant 0 : index
    %3 = vector.load %arg1[%c0_4, %c2, %c0_5] : memref<1x400x4xf32, #tpu.memory_space<vmem>>, vector<1x316x4xf32>
    %4 = vector.shape_cast %3 : vector<1x316x4xf32> to vector<316x4xf32>
    %c0_6 = arith.constant 0 : index
    %c4 = arith.constant 4 : index
    %5 = vector.load %arg8[%c0_6, %c4] : memref<316x36xf32, #tpu.memory_space<vmem>>, vector<316x4xf32>
    tpu.vector_store %arg8[%c0_6, %c4], %4 {strides = array<i32>} : memref<316x36xf32, #tpu.memory_space<vmem>>, vector<316x4xf32>,
    %c0_7 = arith.constant 0 : index
    %c4_8 = arith.constant 4 : index
    %c0_9 = arith.constant 0 : index
    %6 = vector.load %arg1[%c0_7, %c4_8, %c0_9] : memref<1x400x4xf32, #tpu.memory_space<vmem>>, vector<1x316x4xf32>
    %7 = vector.shape_cast %6 : vector<1x316x4xf32> to vector<316x4xf32>
    %c0_10 = arith.constant 0 : index
    %c8 = arith.constant 8 : index
    %8 = vector.load %arg8[%c0_10, %c8] : memref<316x36xf32, #tpu.memory_space<vmem>>, vector<316x4xf32>
    tpu.vector_store %arg8[%c0_10, %c8], %7 {strides = array<i32>} : memref<316x36xf32, #tpu.memory_space<vmem>>, vector<316x4xf32>,
    %c0_11 = arith.constant 0 : index
    %c40 = arith.constant 40 : index
    %c0_12 = arith.constant 0 : index
    %9 = vector.load %arg1[%c0_11, %c40, %c0_12] : memref<1x400x4xf32, #tpu.memory_space<vmem>>, vector<1x316x4xf32>
    %10 = vector.shape_cast %9 : vector<1x316x4xf32> to vector<316x4xf32>
    %c0_13 = arith.constant 0 : index
    %c12 = arith.constant 12 : index
    %11 = vector.load %arg8[%c0_13, %c12] : memref<316x36xf32, #tpu.memory_space<vmem>>, vector<316x4xf32>
    tpu.vector_store %arg8[%c0_13, %c12], %10 {strides = array<i32>} : memref<316x36xf32, #tpu.memory_space<vmem>>, vector<316x4xf32>,
    %c0_14 = arith.constant 0 : index
    %c42 = arith.constant 42 : index
    %c0_15 = arith.constant 0 : index
    %12 = vector.load %arg1[%c0_14, %c42, %c0_15] : memref<1x400x4xf32, #tpu.memory_space<vmem>>, vector<1x316x4xf32>
    %13 = vector.shape_cast %12 : vector<1x316x4xf32> to vector<316x4xf32>
    %c0_16 = arith.constant 0 : index
    %c16 = arith.constant 16 : index
    %14 = vector.load %arg8[%c0_16, %c16] : memref<316x36xf32, #tpu.memory_space<vmem>>, vector<316x4xf32>
    tpu.vector_store %arg8[%c0_16, %c16], %13 {strides = array<i32>} : memref<316x36xf32, #tpu.memory_space<vmem>>, vector<316x4xf32>,
    %c0_17 = arith.constant 0 : index
    %c44 = arith.constant 44 : index
    %c0_18 = arith.constant 0 : index
    %15 = vector.load %arg1[%c0_17, %c44, %c0_18] : memref<1x400x4xf32, #tpu.memory_space<vmem>>, vector<1x316x4xf32>
    %16 = vector.shape_cast %15 : vector<1x316x4xf32> to vector<316x4xf32>
    %c0_19 = arith.constant 0 : index
    %c20 = arith.constant 20 : index
    %17 = vector.load %arg8[%c0_19, %c20] : memref<316x36xf32, #tpu.memory_space<vmem>>, vector<316x4xf32>
    tpu.vector_store %arg8[%c0_19, %c20], %16 {strides = array<i32>} : memref<316x36xf32, #tpu.memory_space<vmem>>, vector<316x4xf32>,
    %c0_20 = arith.constant 0 : index
    %c80 = arith.constant 80 : index
    %c0_21 = arith.constant 0 : index
    %18 = vector.load %arg1[%c0_20, %c80, %c0_21] : memref<1x400x4xf32, #tpu.memory_space<vmem>>, vector<1x316x4xf32>
    %19 = vector.shape_cast %18 : vector<1x316x4xf32> to vector<316x4xf32>
    %c0_22 = arith.constant 0 : index
    %c24 = arith.constant 24 : index
    %20 = vector.load %arg8[%c0_22, %c24] : memref<316x36xf32, #tpu.memory_space<vmem>>, vector<316x4xf32>
    tpu.vector_store %arg8[%c0_22, %c24], %19 {strides = array<i32>} : memref<316x36xf32, #tpu.memory_space<vmem>>, vector<316x4xf32>,
    %c0_23 = arith.constant 0 : index
    %c82 = arith.constant 82 : index
    %c0_24 = arith.constant 0 : index
    %21 = vector.load %arg1[%c0_23, %c82, %c0_24] : memref<1x400x4xf32, #tpu.memory_space<vmem>>, vector<1x316x4xf32>
    %22 = vector.shape_cast %21 : vector<1x316x4xf32> to vector<316x4xf32>
    %c0_25 = arith.constant 0 : index
    %c28 = arith.constant 28 : index
    %23 = vector.load %arg8[%c0_25, %c28] : memref<316x36xf32, #tpu.memory_space<vmem>>, vector<316x4xf32>
    tpu.vector_store %arg8[%c0_25, %c28], %22 {strides = array<i32>} : memref<316x36xf32, #tpu.memory_space<vmem>>, vector<316x4xf32>,
    %c0_26 = arith.constant 0 : index
    %c84 = arith.constant 84 : index
    %c0_27 = arith.constant 0 : index
    %24 = vector.load %arg1[%c0_26, %c84, %c0_27] : memref<1x400x4xf32, #tpu.memory_space<vmem>>, vector<1x316x4xf32>
    %25 = vector.shape_cast %24 : vector<1x316x4xf32> to vector<316x4xf32>
    %c0_28 = arith.constant 0 : index
    %c32 = arith.constant 32 : index
    %26 = vector.load %arg8[%c0_28, %c32] : memref<316x36xf32, #tpu.memory_space<vmem>>, vector<316x4xf32>
    tpu.vector_store %arg8[%c0_28, %c32], %25 {strides = array<i32>} : memref<316x36xf32, #tpu.memory_space<vmem>>, vector<316x4xf32>,
    %c0_29 = arith.constant 0 : index
    %c0_30 = arith.constant 0 : index
    %27 = vector.load %arg8[%c0_29, %c0_30] : memref<316x36xf32, #tpu.memory_space<vmem>>, vector<316x36xf32>
    %c0_31 = arith.constant 0 : index
    %c0_32 = arith.constant 0 : index
    %28 = vector.load %arg3[%c0_31, %c0_32] : memref<36x8xf32, #tpu.memory_space<vmem>>, vector<36x8xf32>
    %cst = arith.constant dense<0.000000e+00> : vector<316x8xf32>
    %29 = tpu.matmul %27, %28, %cst {dimension_numbers = #tpu.dot_dimension_numbers<[1], [0], [0], [1], [0, 0, 1, 1], [], []>} : vector<316x36xf32>, vector<36x8xf32>, vector<316x8xf32> -> vector<316x8xf32>
    %c0_33 = arith.constant 0 : index
    %c0_34 = arith.constant 0 : index
    %30 = vector.load %arg4[%c0_33, %c0_34] : memref<1x8xf32, #tpu.memory_space<vmem>>, vector<1x8xf32>
    %31 = vector.broadcast %30 : vector<1x8xf32> to vector<316x8xf32>
    %32 = arith.addf %29, %31 : vector<316x8xf32>
    %cst_35 = arith.constant 0.000000e+00 : f32
    %33 = vector.broadcast %cst_35 : f32 to vector<316x8xf32>
    %34 = arith.maximumf %32, %33 : vector<316x8xf32>
    %c0_36 = arith.constant 0 : index
    %c0_37 = arith.constant 0 : index
    %35 = vector.load %arg2[%c0_36, %c0_37] : memref<316x1xf32, #tpu.memory_space<vmem>>, vector<316x1xf32>
    %36 = vector.broadcast %35 : vector<316x1xf32> to vector<316x8xf32>
    %37 = arith.mulf %34, %36 : vector<316x8xf32>
    %cst_38 = arith.constant 0.000000e+00 : f32
    %38 = vector.broadcast %cst_38 : f32 to vector<442x8xf32>
    %c0_39 = arith.constant 0 : index
    %c0_40 = arith.constant 0 : index
    %39 = vector.load %arg9[%c0_39, %c0_40] : memref<442x8xf32, #tpu.memory_space<vmem>>, vector<442x8xf32>
    tpu.vector_store %arg9[%c0_39, %c0_40], %38 {strides = array<i32>} : memref<442x8xf32, #tpu.memory_space<vmem>>, vector<442x8xf32>,
    %c63 = arith.constant 63 : index
    %c0_41 = arith.constant 0 : index
    %40 = vector.load %arg9[%c63, %c0_41] : memref<442x8xf32, #tpu.memory_space<vmem>>, vector<316x8xf32>
    tpu.vector_store %arg9[%c63, %c0_41], %37 {strides = array<i32>} : memref<442x8xf32, #tpu.memory_space<vmem>>, vector<316x8xf32>,
    %c0_42 = arith.constant 0 : index
    %c0_43 = arith.constant 0 : index
    %41 = vector.load %arg9[%c0_42, %c0_43] : memref<442x8xf32, #tpu.memory_space<vmem>>, vector<400x8xf32>
    %c0_44 = arith.constant 0 : index
    %c0_45 = arith.constant 0 : index
    %42 = vector.load %arg10[%c0_44, %c0_45] : memref<400x76xf32, #tpu.memory_space<vmem>>, vector<400x8xf32>
    tpu.vector_store %arg10[%c0_44, %c0_45], %41 {strides = array<i32>} : memref<400x76xf32, #tpu.memory_space<vmem>>, vector<400x8xf32>,
    %c1 = arith.constant 1 : index
    %c0_46 = arith.constant 0 : index
    %43 = vector.load %arg9[%c1, %c0_46] : memref<442x8xf32, #tpu.memory_space<vmem>>, vector<400x8xf32>
    %c0_47 = arith.constant 0 : index
    %c8_48 = arith.constant 8 : index
    %44 = vector.load %arg10[%c0_47, %c8_48] : memref<400x76xf32, #tpu.memory_space<vmem>>, vector<400x8xf32>
    tpu.vector_store %arg10[%c0_47, %c8_48], %43 {strides = array<i32>} : memref<400x76xf32, #tpu.memory_space<vmem>>, vector<400x8xf32>,
    %c2_49 = arith.constant 2 : index
    %c0_50 = arith.constant 0 : index
    %45 = vector.load %arg9[%c2_49, %c0_50] : memref<442x8xf32, #tpu.memory_space<vmem>>, vector<400x8xf32>
    %c0_51 = arith.constant 0 : index
    %c16_52 = arith.constant 16 : index
    %46 = vector.load %arg10[%c0_51, %c16_52] : memref<400x76xf32, #tpu.memory_space<vmem>>, vector<400x8xf32>
    tpu.vector_store %arg10[%c0_51, %c16_52], %45 {strides = array<i32>} : memref<400x76xf32, #tpu.memory_space<vmem>>, vector<400x8xf32>,
    %c20_53 = arith.constant 20 : index
    %c0_54 = arith.constant 0 : index
    %47 = vector.load %arg9[%c20_53, %c0_54] : memref<442x8xf32, #tpu.memory_space<vmem>>, vector<400x8xf32>
    %c0_55 = arith.constant 0 : index
    %c24_56 = arith.constant 24 : index
    %48 = vector.load %arg10[%c0_55, %c24_56] : memref<400x76xf32, #tpu.memory_space<vmem>>, vector<400x8xf32>
    tpu.vector_store %arg10[%c0_55, %c24_56], %47 {strides = array<i32>} : memref<400x76xf32, #tpu.memory_space<vmem>>, vector<400x8xf32>,
    %c21 = arith.constant 21 : index
    %c0_57 = arith.constant 0 : index
    %49 = vector.load %arg9[%c21, %c0_57] : memref<442x8xf32, #tpu.memory_space<vmem>>, vector<400x8xf32>
    %c0_58 = arith.constant 0 : index
    %c32_59 = arith.constant 32 : index
    %50 = vector.load %arg10[%c0_58, %c32_59] : memref<400x76xf32, #tpu.memory_space<vmem>>, vector<400x8xf32>
    tpu.vector_store %arg10[%c0_58, %c32_59], %49 {strides = array<i32>} : memref<400x76xf32, #tpu.memory_space<vmem>>, vector<400x8xf32>,
    %c22 = arith.constant 22 : index
    %c0_60 = arith.constant 0 : index
    %51 = vector.load %arg9[%c22, %c0_60] : memref<442x8xf32, #tpu.memory_space<vmem>>, vector<400x8xf32>
    %c0_61 = arith.constant 0 : index
    %c40_62 = arith.constant 40 : index
    %52 = vector.load %arg10[%c0_61, %c40_62] : memref<400x76xf32, #tpu.memory_space<vmem>>, vector<400x8xf32>
    tpu.vector_store %arg10[%c0_61, %c40_62], %51 {strides = array<i32>} : memref<400x76xf32, #tpu.memory_space<vmem>>, vector<400x8xf32>,
    %c40_63 = arith.constant 40 : index
    %c0_64 = arith.constant 0 : index
    %53 = vector.load %arg9[%c40_63, %c0_64] : memref<442x8xf32, #tpu.memory_space<vmem>>, vector<400x8xf32>
    %c0_65 = arith.constant 0 : index
    %c48 = arith.constant 48 : index
    %54 = vector.load %arg10[%c0_65, %c48] : memref<400x76xf32, #tpu.memory_space<vmem>>, vector<400x8xf32>
    tpu.vector_store %arg10[%c0_65, %c48], %53 {strides = array<i32>} : memref<400x76xf32, #tpu.memory_space<vmem>>, vector<400x8xf32>,
    %c41 = arith.constant 41 : index
    %c0_66 = arith.constant 0 : index
    %55 = vector.load %arg9[%c41, %c0_66] : memref<442x8xf32, #tpu.memory_space<vmem>>, vector<400x8xf32>
    %c0_67 = arith.constant 0 : index
    %c56 = arith.constant 56 : index
    %56 = vector.load %arg10[%c0_67, %c56] : memref<400x76xf32, #tpu.memory_space<vmem>>, vector<400x8xf32>
    tpu.vector_store %arg10[%c0_67, %c56], %55 {strides = array<i32>} : memref<400x76xf32, #tpu.memory_space<vmem>>, vector<400x8xf32>,
    %c42_68 = arith.constant 42 : index
    %c0_69 = arith.constant 0 : index
    %57 = vector.load %arg9[%c42_68, %c0_69] : memref<442x8xf32, #tpu.memory_space<vmem>>, vector<400x8xf32>
    %c0_70 = arith.constant 0 : index
    %c64 = arith.constant 64 : index
    %58 = vector.load %arg10[%c0_70, %c64] : memref<400x76xf32, #tpu.memory_space<vmem>>, vector<400x8xf32>
    tpu.vector_store %arg10[%c0_70, %c64], %57 {strides = array<i32>} : memref<400x76xf32, #tpu.memory_space<vmem>>, vector<400x8xf32>,
    %c0_71 = arith.constant 0 : index
    %c0_72 = arith.constant 0 : index
    %c0_73 = arith.constant 0 : index
    %59 = vector.load %arg1[%c0_71, %c0_72, %c0_73] : memref<1x400x4xf32, #tpu.memory_space<vmem>>, vector<1x400x4xf32>
    %60 = vector.shape_cast %59 : vector<1x400x4xf32> to vector<400x4xf32>
    %c0_74 = arith.constant 0 : index
    %c72 = arith.constant 72 : index
    %61 = vector.load %arg10[%c0_74, %c72] : memref<400x76xf32, #tpu.memory_space<vmem>>, vector<400x4xf32>
    tpu.vector_store %arg10[%c0_74, %c72], %60 {strides = array<i32>} : memref<400x76xf32, #tpu.memory_space<vmem>>, vector<400x4xf32>,
    %c0_75 = arith.constant 0 : index
    %c0_76 = arith.constant 0 : index
    %62 = vector.load %arg10[%c0_75, %c0_76] : memref<400x76xf32, #tpu.memory_space<vmem>>, vector<400x76xf32>
    %c0_77 = arith.constant 0 : index
    %c0_78 = arith.constant 0 : index
    %63 = vector.load %arg5[%c0_77, %c0_78] : memref<76x8xf32, #tpu.memory_space<vmem>>, vector<76x8xf32>
    %cst_79 = arith.constant dense<0.000000e+00> : vector<400x8xf32>
    %64 = tpu.matmul %62, %63, %cst_79 {dimension_numbers = #tpu.dot_dimension_numbers<[1], [0], [0], [1], [0, 0, 1, 1], [], []>} : vector<400x76xf32>, vector<76x8xf32>, vector<400x8xf32> -> vector<400x8xf32>
    %c0_80 = arith.constant 0 : index
    %c0_81 = arith.constant 0 : index
    %65 = vector.load %arg6[%c0_80, %c0_81] : memref<1x8xf32, #tpu.memory_space<vmem>>, vector<1x8xf32>
    %66 = vector.broadcast %65 : vector<1x8xf32> to vector<400x8xf32>
    %67 = arith.addf %64, %66 : vector<400x8xf32>
    %cst_82 = arith.constant 0.000000e+00 : f32
    %68 = vector.broadcast %cst_82 : f32 to vector<400x8xf32>
    %69 = arith.maximumf %67, %68 : vector<400x8xf32>
    %c0_83 = arith.constant 0 : index
    %c0_84 = arith.constant 0 : index
    %c0_85 = arith.constant 0 : index
    %70 = vector.load %arg7[%c0_83, %c0_84, %c0_85] : memref<1x400x8xf32, #tpu.memory_space<vmem>>, vector<1x400x8xf32>
    %71 = vector.shape_cast %70 : vector<1x400x8xf32> to vector<400x8xf32>
    %72 = vector.shape_cast %69 : vector<400x8xf32> to vector<1x400x8xf32>
    tpu.vector_store %arg7[%c0_83, %c0_84, %c0_85], %72 {strides = array<i32>} : memref<1x400x8xf32, #tpu.memory_space<vmem>>, vector<1x400x8xf32>,
    return
  }
  func.func @transform_0(%arg0: i32) -> (i32, i32, i32) {
    %c0_i32 = arith.constant 0 : i32
    %c0_i32_0 = arith.constant 0 : i32
    %c0_i32_1 = arith.constant 0 : i32
    return %arg0, %c0_i32, %c0_i32_0 : i32, i32, i32
  }
  func.func @transform_1(%arg0: i32) -> (i32, i32) {
    %c0_i32 = arith.constant 0 : i32
    %c0_i32_0 = arith.constant 0 : i32
    %c0_i32_1 = arith.constant 0 : i32
    return %c0_i32, %c0_i32_0 : i32, i32
  }
  func.func @transform_2(%arg0: i32) -> (i32, i32) {
    %c0_i32 = arith.constant 0 : i32
    %c0_i32_0 = arith.constant 0 : i32
    %c0_i32_1 = arith.constant 0 : i32
    return %c0_i32, %c0_i32_0 : i32, i32
  }
  func.func @transform_3(%arg0: i32) -> (i32, i32) {
    %c0_i32 = arith.constant 0 : i32
    %c0_i32_0 = arith.constant 0 : i32
    %c0_i32_1 = arith.constant 0 : i32
    return %c0_i32, %c0_i32_0 : i32, i32
  }
  func.func @transform_4(%arg0: i32) -> (i32, i32) {
    %c0_i32 = arith.constant 0 : i32
    %c0_i32_0 = arith.constant 0 : i32
    %c0_i32_1 = arith.constant 0 : i32
    return %c0_i32, %c0_i32_0 : i32, i32
  }
  func.func @transform_5(%arg0: i32) -> (i32, i32) {
    %c0_i32 = arith.constant 0 : i32
    %c0_i32_0 = arith.constant 0 : i32
    %c0_i32_1 = arith.constant 0 : i32
    return %c0_i32, %c0_i32_0 : i32, i32
  }
  func.func @transform_6(%arg0: i32) -> (i32, i32, i32) {
    %c0_i32 = arith.constant 0 : i32
    %c0_i32_0 = arith.constant 0 : i32
    %c0_i32_1 = arith.constant 0 : i32
    return %arg0, %c0_i32, %c0_i32_0 : i32, i32, i32
  }
}

</mosaic_0001>

<llo_original>
// kernel: resnet_forward.1
$region0: #{resnet_forward.1}
  #allocation0 [shape = 'u32[]', space=smem, size = 0x4, offset = 0x4, fixed_abs, tag = 'smem constant byte address 0x4 - core index']
  #allocation1 [shape = 'u32[144,128]{1,0:T(1,128)}', space=vmem, size = 0x12000, scoped, tag = 'internal scratch']
  #allocation2 [shape = 'f32[316,36]{1,0:T(8,128)}', space=vmem, size = 0x28000, scoped, tag = 'scratch operand']
  #allocation3 [shape = 'f32[442,8]{1,0:T(8,128)}', space=vmem, size = 0x38000, scoped, tag = 'scratch operand']
  #allocation4 [shape = 'f32[400,76]{1,0:T(8,128)}', space=vmem, size = 0x32000, scoped, tag = 'scratch operand']
  %s0 = inlined_call_operand.vmem [shape: f32[2,400,4], index: 0, kind: input, shape index: {}]
  %s1 = inlined_call_operand.vmem [shape: f32[316,1], index: 1, kind: input, shape index: {}]
  %s2 = inlined_call_operand.vmem [shape: f32[36,8], index: 2, kind: input, shape index: {}]
  %s3 = inlined_call_operand.vmem [shape: f32[1,8], index: 3, kind: input, shape index: {}]
  %s4 = inlined_call_operand.vmem [shape: f32[76,8], index: 4, kind: input, shape index: {}]
  %s5 = inlined_call_operand.vmem [shape: f32[1,8], index: 5, kind: input, shape index: {}]
  %s6 = inlined_call_operand.vmem [shape: f32[2,400,8], index: 6, kind: output, shape index: {}]
  %s7 = sld [smem:[#allocation0]]
  $region57: #{resnet_forward.1} parent=0
    _
  %s9 = ssub.s32 1, %s7
  %s10 = scalar_select 0, %s9, %s7
  loop: start=0, step=1, limit=4
  $region2: #{resnet_forward.1} parent=0 // loop_pre_header
    _
  $region3: #{resnet_forward.1} parent=0 // loop_header
    %s12 = sphi 0, %s16
    %p13 = scmp.ge.s32.totalorder %s12, 4
    %s22 = sphi 0, %s24
    %s25 = sphi 0, %s22
    %s26 = sphi 0, %s25
    %s42 = sphi 0, %s26
    %s46 = sphi 0, %s46
    %s48 = sphi 0, %s46
    %s49 = sphi 0, %s48
    %s63 = sphi 0, %s49
    %s67 = sphi 0, %s67
    %s69 = sphi 0, %s67
    %s70 = sphi 0, %s69
    %s84 = sphi 0, %s70
    %s88 = sphi 0, %s88
    %s90 = sphi 0, %s88
    %s91 = sphi 0, %s90
    %s105 = sphi 0, %s91
    %s109 = sphi 0, %s109
    %s111 = sphi 0, %s109
    %s112 = sphi 0, %s111
    %s126 = sphi 0, %s112
    %s130 = sphi 0, %s130
    %s132 = sphi 0, %s130
    %s133 = sphi 0, %s132
    %s147 = sphi 0, %s133
    %s153 = sphi 0, %s155
    %s156 = sphi 0, %s153
    %s157 = sphi 0, %s156
    %s173 = sphi 0, %s157
  $region4: #{resnet_forward.1} parent=0 // loop_header_branch
    %15 = sbr.rel (%p13) target = $region8
  $region5: #{resnet_forward.1} parent=0 // loop_body
    %s17 = ssub.s32 %s12, 1
    %s18 = ssub.s32 %s12, 2
    %s19 = sadd.s32 %s12, 1
    %s20 = ssub.s32 %s12, %s19
    %p21 = scmp.eq.s32.totalorder %s20, 0
    %s23 = sadd.s32 %s22, 1
    %s24 = scalar_select %p21, %s22, %s23
    %p27 = pneg %p21
    %p28 = scmp.eq.s32.totalorder %s12, 1
    %p29 = por %p27, %p28
    %p30 = scmp.ne.s32.totalorder %s22, %s25
    %p31 = scmp.eq.s32.totalorder %s12, 0
    %p32 = por %p30, %p31
    %p33 = scmp.ne.s32.totalorder %s22, %s25
    %p34 = scmp.eq.s32.totalorder %s17, 1
    %p35 = por %p33, %p34
    %p36 = scmp.ne.s32.totalorder %s25, %s26
    %p37 = scmp.eq.s32.totalorder %s17, 0
    %p38 = por %p36, %p37
    %p39 = scmp.ne.s32.totalorder %s25, %s26
    %p40 = scmp.eq.s32.totalorder %s18, 1
    %p41 = por %p39, %p40
    %p43 = scmp.ne.s32.totalorder %s26, %s42
    %p44 = scmp.eq.s32.totalorder %s18, 0
    %p45 = por %p43, %p44
    %s47 = sadd.s32 %s46, 1
    %p50 = scmp.eq.s32.totalorder %s12, 1
    %p51 = scmp.ne.s32.totalorder %s46, %s48
    %p52 = scmp.eq.s32.totalorder %s12, 0
    %p53 = por %p51, %p52
    %p54 = scmp.ne.s32.totalorder %s46, %s48
    %p55 = scmp.eq.s32.totalorder %s17, 1
    %p56 = por %p54, %p55
    %p57 = scmp.ne.s32.totalorder %s48, %s49
    %p58 = scmp.eq.s32.totalorder %s17, 0
    %p59 = por %p57, %p58
    %p60 = scmp.ne.s32.totalorder %s48, %s49
    %p61 = scmp.eq.s32.totalorder %s18, 1
    %p62 = por %p60, %p61
    %p64 = scmp.ne.s32.totalorder %s49, %s63
    %p65 = scmp.eq.s32.totalorder %s18, 0
    %p66 = por %p64, %p65
    %s68 = sadd.s32 %s67, 1
    %p71 = scmp.eq.s32.totalorder %s12, 1
    %p72 = scmp.ne.s32.totalorder %s67, %s69
    %p73 = scmp.eq.s32.totalorder %s12, 0
    %p74 = por %p72, %p73
    %p75 = scmp.ne.s32.totalorder %s67, %s69
    %p76 = scmp.eq.s32.totalorder %s17, 1
    %p77 = por %p75, %p76
    %p78 = scmp.ne.s32.totalorder %s69, %s70
    %p79 = scmp.eq.s32.totalorder %s17, 0
    %p80 = por %p78, %p79
    %p81 = scmp.ne.s32.totalorder %s69, %s70
    %p82 = scmp.eq.s32.totalorder %s18, 1
    %p83 = por %p81, %p82
    %p85 = scmp.ne.s32.totalorder %s70, %s84
    %p86 = scmp.eq.s32.totalorder %s18, 0
    %p87 = por %p85, %p86
    %s89 = sadd.s32 %s88, 1
    %p92 = scmp.eq.s32.totalorder %s12, 1
    %p93 = scmp.ne.s32.totalorder %s88, %s90
    %p94 = scmp.eq.s32.totalorder %s12, 0
    %p95 = por %p93, %p94
    %p96 = scmp.ne.s32.totalorder %s88, %s90
    %p97 = scmp.eq.s32.totalorder %s17, 1
    %p98 = por %p96, %p97
    %p99 = scmp.ne.s32.totalorder %s90, %s91
    %p100 = scmp.eq.s32.totalorder %s17, 0
    %p101 = por %p99, %p100
    %p102 = scmp.ne.s32.totalorder %s90, %s91
    %p103 = scmp.eq.s32.totalorder %s18, 1
    %p104 = por %p102, %p103
    %p106 = scmp.ne.s32.totalorder %s91, %s105
    %p107 = scmp.eq.s32.totalorder %s18, 0
    %p108 = por %p106, %p107
    %s110 = sadd.s32 %s109, 1
    %p113 = scmp.eq.s32.totalorder %s12, 1
    %p114 = scmp.ne.s32.totalorder %s109, %s111
    %p115 = scmp.eq.s32.totalorder %s12, 0
    %p116 = por %p114, %p115
    %p117 = scmp.ne.s32.totalorder %s109, %s111
    %p118 = scmp.eq.s32.totalorder %s17, 1
    %p119 = por %p117, %p118
    %p120 = scmp.ne.s32.totalorder %s111, %s112
    %p121 = scmp.eq.s32.totalorder %s17, 0
    %p122 = por %p120, %p121
    %p123 = scmp.ne.s32.totalorder %s111, %s112
    %p124 = scmp.eq.s32.totalorder %s18, 1
    %p125 = por %p123, %p124
    %p127 = scmp.ne.s32.totalorder %s112, %s126
    %p128 = scmp.eq.s32.totalorder %s18, 0
    %p129 = por %p127, %p128
    %s131 = sadd.s32 %s130, 1
    %p134 = scmp.eq.s32.totalorder %s12, 1
    %p135 = scmp.ne.s32.totalorder %s130, %s132
    %p136 = scmp.eq.s32.totalorder %s12, 0
    %p137 = por %p135, %p136
    %p138 = scmp.ne.s32.totalorder %s130, %s132
    %p139 = scmp.eq.s32.totalorder %s17, 1
    %p140 = por %p138, %p139
    %p141 = scmp.ne.s32.totalorder %s132, %s133
    %p142 = scmp.eq.s32.totalorder %s17, 0
    %p143 = por %p141, %p142
    %p144 = scmp.ne.s32.totalorder %s132, %s133
    %p145 = scmp.eq.s32.totalorder %s18, 1
    %p146 = por %p144, %p145
    %p148 = scmp.ne.s32.totalorder %s133, %s147
    %p149 = scmp.eq.s32.totalorder %s18, 0
    %p150 = por %p148, %p149
    %s151 = ssub.s32 %s12, %s19
    %p152 = scmp.eq.s32.totalorder %s151, 0
    %s154 = sadd.s32 %s153, 1
    %s155 = scalar_select %p152, %s153, %s154
    %p158 = pneg %p152
    %p159 = scmp.eq.s32.totalorder %s12, 1
    %p160 = por %p158, %p159
    %p161 = scmp.ne.s32.totalorder %s153, %s156
    %p162 = scmp.eq.s32.totalorder %s12, 0
    %p163 = por %p161, %p162
    %p164 = scmp.ne.s32.totalorder %s153, %s156
    %p165 = scmp.eq.s32.totalorder %s17, 1
    %p166 = por %p164, %p165
    %p167 = scmp.ne.s32.totalorder %s156, %s157
    %p168 = scmp.eq.s32.totalorder %s17, 0
    %p169 = por %p167, %p168
    %p170 = scmp.ne.s32.totalorder %s156, %s157
    %p171 = scmp.eq.s32.totalorder %s18, 1
    %p172 = por %p170, %p171
    %p174 = scmp.ne.s32.totalorder %s157, %s173
    %p175 = scmp.eq.s32.totalorder %s18, 0
    %p176 = por %p174, %p175
    %p177 = scmp.le.s32.totalorder 1, %s12
    %p178 = scmp.lt.s32.totalorder %s12, 3
    %p179 = pnand %p177, %p178
    %p180 = pneg %p179
    // Predicated region
    $region9: #{resnet_forward.1} parent=5 // pred_check
      _
    $region10: #{resnet_forward.1} parent=5 // pred_check_branch
      %182 = sbr.rel (%p179) target = $region12
    $region11: #{resnet_forward.1} parent=5 // pred_region
      %s183 = ssub.s32 %s12, 1
      // Predicated region
      $region13: #{resnet_forward.1} parent=11 // pred_check
        %p184 = pneg %p59
      $region14: #{resnet_forward.1} parent=11 // pred_check_branch
        %186 = sbr.rel (%p184) target = $region16
      $region15: #{resnet_forward.1} parent=11 // pred_region
        _
      $region16: #{resnet_forward.1} parent=11 // pred_fallthru
        _
      // Predicated region
      $region17: #{resnet_forward.1} parent=11 // pred_check
        %p187 = pneg %p80
      $region18: #{resnet_forward.1} parent=11 // pred_check_branch
        %189 = sbr.rel (%p187) target = $region20
      $region19: #{resnet_forward.1} parent=11 // pred_region
        _
      $region20: #{resnet_forward.1} parent=11 // pred_fallthru
        _
      // Predicated region
      $region21: #{resnet_forward.1} parent=11 // pred_check
        %p190 = pneg %p101
      $region22: #{resnet_forward.1} parent=11 // pred_check_branch
        %192 = sbr.rel (%p190) target = $region24
      $region23: #{resnet_forward.1} parent=11 // pred_region
        _
      $region24: #{resnet_forward.1} parent=11 // pred_fallthru
        _
      // Predicated region
      $region25: #{resnet_forward.1} parent=11 // pred_check
        %p193 = pneg %p122
      $region26: #{resnet_forward.1} parent=11 // pred_check_branch
        %195 = sbr.rel (%p193) target = $region28
      $region27: #{resnet_forward.1} parent=11 // pred_region
        _
      $region28: #{resnet_forward.1} parent=11 // pred_fallthru
        _
      // Predicated region
      $region29: #{resnet_forward.1} parent=11 // pred_check
        %p196 = pneg %p143
      $region30: #{resnet_forward.1} parent=11 // pred_check_branch
        %198 = sbr.rel (%p196) target = $region32
      $region31: #{resnet_forward.1} parent=11 // pred_region
        _
      $region32: #{resnet_forward.1} parent=11 // pred_fallthru
        _
    $region12: #{resnet_forward.1} parent=5 // pred_fallthru
      _
    %p199 = scmp.lt.s32.totalorder %s12, 2
    // Predicated region
    $region33: #{resnet_forward.1} parent=5 // pred_check
      %p200 = pneg %p199
    $region34: #{resnet_forward.1} parent=5 // pred_check_branch
      %202 = sbr.rel (%p200) target = $region36
    $region35: #{resnet_forward.1} parent=5 // pred_region
      // Predicated region
      $region37: #{resnet_forward.1} parent=35 // pred_check
        %p203 = pneg %p32
      $region38: #{resnet_forward.1} parent=35 // pred_check_branch
        %205 = sbr.rel (%p203) target = $region40
      $region39: #{resnet_forward.1} parent=35 // pred_region
        %p206 = scmp.lt.s32.totalorder %s12, 1
        %s207 = scalar_select %p206, %s12, 1
        %s208 = smul.addr %s207, 50
        %s209 = smul.addr %s208, 8
        %s210 = scalar_lea.vmem %s0, %s209
      $region40: #{resnet_forward.1} parent=35 // pred_fallthru
        _
    $region36: #{resnet_forward.1} parent=5 // pred_fallthru
      _
    %p211 = scmp.le.s32.totalorder 1, %s12
    %p212 = scmp.lt.s32.totalorder %s12, 3
    %p213 = pnand %p211, %p212
    %p214 = pneg %p213
    // Predicated region
    $region41: #{resnet_forward.1} parent=5 // pred_check
      _
    $region42: #{resnet_forward.1} parent=5 // pred_check_branch
      %216 = sbr.rel (%p213) target = $region44
    $region43: #{resnet_forward.1} parent=5 // pred_region
      %s217 = ssub.s32 %s12, 1
      %p218 = scmp.lt.s32.totalorder %s17, 1
      %s219 = scalar_select %p218, %s17, 1
      %s220 = smul.addr %s219, 50
      %s221 = smul.addr %s220, 8
      %s222 = scalar_lea.vmem %s0, %s221
      %p223 = pneg %p38
      %p224 = pneg %p35
      %p225 = pneg %p59
      %p226 = pneg %p56
      %p227 = pneg %p80
      %p228 = pneg %p77
      %p229 = pneg %p101
      %p230 = pneg %p98
      %p231 = pneg %p122
      %p232 = pneg %p119
      %p233 = pneg %p143
      %p234 = pneg %p140
      %p235 = pneg %p169
      %p236 = pneg %p166
      %p237 = scmp.lt.s32.totalorder %s17, 1
      %s238 = scalar_select %p237, %s17, 1
      %s239 = smul.addr %s238, 50
      %s240 = smul.addr %s239, 8
      %s241 = scalar_lea.vmem %s6, %s240
      %p242 = scmp.lt.s32.totalorder %s17, 1
      %s243 = scalar_select %p242, %s17, 1
      %s244 = smul.addr %s243, 50
      %s245 = smul.addr %s244, 8
      %s246 = scalar_lea.vmem %s0, %s245
      %p247 = scmp.lt.s32.totalorder %s17, 1
      %s248 = scalar_select %p247, %s17, 1
      %s249 = smul.addr %s248, 50
      %s250 = smul.addr %s249, 8
      %s251 = scalar_lea.vmem %s6, %s250
      %v252 = vld [vmem:[%s246] sm:$0xff]
      %v253 = vld [vmem:[%s246 + $0x8] sm:$0xff]
      %v254 = vld [vmem:[%s246 + $0x10] sm:$0xff]
      %v255 = vld [vmem:[%s246 + $0x18] sm:$0xff]
      %v256 = vld [vmem:[%s246 + $0x20] sm:$0xff]
      %v257 = vld [vmem:[%s246 + $0x28] sm:$0xff]
      %v258 = vld [vmem:[%s246 + $0x30] sm:$0xff]
      %v259 = vld [vmem:[%s246 + $0x38] sm:$0xff]
      %v260 = vld [vmem:[%s246 + $0x40] sm:$0xff]
      %v261 = vld [vmem:[%s246 + $0x48] sm:$0xff]
      %v262 = vld [vmem:[%s246 + $0x50] sm:$0xff]
      %v263 = vld [vmem:[%s246 + $0x58] sm:$0xff]
      %v264 = vld [vmem:[%s246 + $0x60] sm:$0xff]
      %v265 = vld [vmem:[%s246 + $0x68] sm:$0xff]
      %v266 = vld [vmem:[%s246 + $0x70] sm:$0xff]
      %v267 = vld [vmem:[%s246 + $0x78] sm:$0xff]
      %v268 = vld [vmem:[%s246 + $0x80] sm:$0xff]
      %v269 = vld [vmem:[%s246 + $0x88] sm:$0xff]
      %v270 = vld [vmem:[%s246 + $0x90] sm:$0xff]
      %v271 = vld [vmem:[%s246 + $0x98] sm:$0xff]
      %v272 = vld [vmem:[%s246 + $0xa0] sm:$0xff]
      %v273 = vld [vmem:[%s246 + $0xa8] sm:$0xff]
      %v274 = vld [vmem:[%s246 + $0xb0] sm:$0xff]
      %v275 = vld [vmem:[%s246 + $0xb8] sm:$0xff]
      %v276 = vld [vmem:[%s246 + $0xc0] sm:$0xff]
      %v277 = vld [vmem:[%s246 + $0xc8] sm:$0xff]
      %v278 = vld [vmem:[%s246 + $0xd0] sm:$0xff]
      %v279 = vld [vmem:[%s246 + $0xd8] sm:$0xff]
      %v280 = vld [vmem:[%s246 + $0xe0] sm:$0xff]
      %v281 = vld [vmem:[%s246 + $0xe8] sm:$0xff]
      %v282 = vld [vmem:[%s246 + $0xf0] sm:$0xff]
      %v283 = vld [vmem:[%s246 + $0xf8] sm:$0xff]
      %v284 = vld [vmem:[%s246 + $0x100] sm:$0xff]
      %v285 = vld [vmem:[%s246 + $0x108] sm:$0xff]
      %v286 = vld [vmem:[%s246 + $0x110] sm:$0xff]
      %v287 = vld [vmem:[%s246 + $0x118] sm:$0xff]
      %v288 = vld [vmem:[%s246 + $0x120] sm:$0xff]
      %v289 = vld [vmem:[%s246 + $0x128] sm:$0xff]
      %v290 = vld [vmem:[%s246 + $0x130] sm:$0xff]
      %v291 = vld [vmem:[%s246 + $0x138] sm:$0xf]
      %vm292 = vcmask 31744
      %293 = vst.msk [vmem:[#allocation2] sm:$0xff] %vm292, %v252
      %294 = vst.msk [vmem:[#allocation2 + $0x8] sm:$0xff] %vm292, %v253
      %295 = vst.msk [vmem:[#allocation2 + $0x10] sm:$0xff] %vm292, %v254
      %296 = vst.msk [vmem:[#allocation2 + $0x18] sm:$0xff] %vm292, %v255
      %297 = vst.msk [vmem:[#allocation2 + $0x20] sm:$0xff] %vm292, %v256
      %298 = vst.msk [vmem:[#allocation2 + $0x28] sm:$0xff] %vm292, %v257
      %299 = vst.msk [vmem:[#allocation2 + $0x30] sm:$0xff] %vm292, %v258
      %300 = vst.msk [vmem:[#allocation2 + $0x38] sm:$0xff] %vm292, %v259
      %301 = vst.msk [vmem:[#allocation2 + $0x40] sm:$0xff] %vm292, %v260
      %302 = vst.msk [vmem:[#allocation2 + $0x48] sm:$0xff] %vm292, %v261
      %303 = vst.msk [vmem:[#allocation2 + $0x50] sm:$0xff] %vm292, %v262
      %304 = vst.msk [vmem:[#allocation2 + $0x58] sm:$0xff] %vm292, %v263
      %305 = vst.msk [vmem:[#allocation2 + $0x60] sm:$0xff] %vm292, %v264
      %306 = vst.msk [vmem:[#allocation2 + $0x68] sm:$0xff] %vm292, %v265
      %307 = vst.msk [vmem:[#allocation2 + $0x70] sm:$0xff] %vm292, %v266
      %308 = vst.msk [vmem:[#allocation2 + $0x78] sm:$0xff] %vm292, %v267
      %309 = vst.msk [vmem:[#allocation2 + $0x80] sm:$0xff] %vm292, %v268
      %310 = vst.msk [vmem:[#allocation2 + $0x88] sm:$0xff] %vm292, %v269
      %311 = vst.msk [vmem:[#allocation2 + $0x90] sm:$0xff] %vm292, %v270
      %312 = vst.msk [vmem:[#allocation2 + $0x98] sm:$0xff] %vm292, %v271
      %313 = vst.msk [vmem:[#allocation2 + $0xa0] sm:$0xff] %vm292, %v272
      %314 = vst.msk [vmem:[#allocation2 + $0xa8] sm:$0xff] %vm292, %v273
      %315 = vst.msk [vmem:[#allocation2 + $0xb0] sm:$0xff] %vm292, %v274
      %316 = vst.msk [vmem:[#allocation2 + $0xb8] sm:$0xff] %vm292, %v275
      %317 = vst.msk [vmem:[#allocation2 + $0xc0] sm:$0xff] %vm292, %v276
      %318 = vst.msk [vmem:[#allocation2 + $0xc8] sm:$0xff] %vm292, %v277
      %319 = vst.msk [vmem:[#allocation2 + $0xd0] sm:$0xff] %vm292, %v278
      %320 = vst.msk [vmem:[#allocation2 + $0xd8] sm:$0xff] %vm292, %v279
      %321 = vst.msk [vmem:[#allocation2 + $0xe0] sm:$0xff] %vm292, %v280
      %322 = vst.msk [vmem:[#allocation2 + $0xe8] sm:$0xff] %vm292, %v281
      %323 = vst.msk [vmem:[#allocation2 + $0xf0] sm:$0xff] %vm292, %v282
      %324 = vst.msk [vmem:[#allocation2 + $0xf8] sm:$0xff] %vm292, %v283
      %325 = vst.msk [vmem:[#allocation2 + $0x100] sm:$0xff] %vm292, %v284
      %326 = vst.msk [vmem:[#allocation2 + $0x108] sm:$0xff] %vm292, %v285
      %327 = vst.msk [vmem:[#allocation2 + $0x110] sm:$0xff] %vm292, %v286
      %328 = vst.msk [vmem:[#allocation2 + $0x118] sm:$0xff] %vm292, %v287
      %329 = vst.msk [vmem:[#allocation2 + $0x120] sm:$0xff] %vm292, %v288
      %330 = vst.msk [vmem:[#allocation2 + $0x128] sm:$0xff] %vm292, %v289
      %331 = vst.msk [vmem:[#allocation2 + $0x130] sm:$0xff] %vm292, %v290
      %vm332 = vcmask 27648
      %333 = vst.msk [vmem:[#allocation2 + $0x138] sm:$0xf] %vm332, %v291
      %v334 = vld [vmem:[%s246 + $0x2] sm:$0xff]
      %v335 = vld [vmem:[%s246 + $0xa] sm:$0xff]
      %v336 = vld [vmem:[%s246 + $0x12] sm:$0xff]
      %v337 = vld [vmem:[%s246 + $0x1a] sm:$0xff]
      %v338 = vld [vmem:[%s246 + $0x22] sm:$0xff]
      %v339 = vld [vmem:[%s246 + $0x2a] sm:$0xff]
      %v340 = vld [vmem:[%s246 + $0x32] sm:$0xff]
      %v341 = vld [vmem:[%s246 + $0x3a] sm:$0xff]
      %v342 = vld [vmem:[%s246 + $0x42] sm:$0xff]
      %v343 = vld [vmem:[%s246 + $0x4a] sm:$0xff]
      %v344 = vld [vmem:[%s246 + $0x52] sm:$0xff]
      %v345 = vld [vmem:[%s246 + $0x5a] sm:$0xff]
      %v346 = vld [vmem:[%s246 + $0x62] sm:$0xff]
      %v347 = vld [vmem:[%s246 + $0x6a] sm:$0xff]
      %v348 = vld [vmem:[%s246 + $0x72] sm:$0xff]
      %v349 = vld [vmem:[%s246 + $0x7a] sm:$0xff]
      %v350 = vld [vmem:[%s246 + $0x82] sm:$0xff]
      %v351 = vld [vmem:[%s246 + $0x8a] sm:$0xff]
      %v352 = vld [vmem:[%s246 + $0x92] sm:$0xff]
      %v353 = vld [vmem:[%s246 + $0x9a] sm:$0xff]
      %v354 = vld [vmem:[%s246 + $0xa2] sm:$0xff]
      %v355 = vld [vmem:[%s246 + $0xaa] sm:$0xff]
      %v356 = vld [vmem:[%s246 + $0xb2] sm:$0xff]
      %v357 = vld [vmem:[%s246 + $0xba] sm:$0xff]
      %v358 = vld [vmem:[%s246 + $0xc2] sm:$0xff]
      %v359 = vld [vmem:[%s246 + $0xca] sm:$0xff]
      %v360 = vld [vmem:[%s246 + $0xd2] sm:$0xff]
      %v361 = vld [vmem:[%s246 + $0xda] sm:$0xff]
      %v362 = vld [vmem:[%s246 + $0xe2] sm:$0xff]
      %v363 = vld [vmem:[%s246 + $0xea] sm:$0xff]
      %v364 = vld [vmem:[%s246 + $0xf2] sm:$0xff]
      %v365 = vld [vmem:[%s246 + $0xfa] sm:$0xff]
      %v366 = vld [vmem:[%s246 + $0x102] sm:$0xff]
      %v367 = vld [vmem:[%s246 + $0x10a] sm:$0xff]
      %v368 = vld [vmem:[%s246 + $0x112] sm:$0xff]
      %v369 = vld [vmem:[%s246 + $0x11a] sm:$0xff]
      %v370 = vld [vmem:[%s246 + $0x122] sm:$0xff]
      %v371 = vld [vmem:[%s246 + $0x12a] sm:$0xff]
      %v372 = vld [vmem:[%s246 + $0x132] sm:$0xff]
      %v373 = vld [vmem:[%s246 + $0x13a] sm:$0xf]
      %414 = vrot.lane.b32.xlu0 %v334, 4
      %v415 = vpop.permute.xlu0 %414
      %416 = vrot.lane.b32.xlu0 %v335, 4
      %v417 = vpop.permute.xlu0 %416
      %418 = vrot.lane.b32.xlu0 %v336, 4
      %v419 = vpop.permute.xlu0 %418
      %420 = vrot.lane.b32.xlu0 %v337, 4
      %v421 = vpop.permute.xlu0 %420
      %422 = vrot.lane.b32.xlu0 %v338, 4
      %v423 = vpop.permute.xlu0 %422
      %424 = vrot.lane.b32.xlu0 %v339, 4
      %v425 = vpop.permute.xlu0 %424
      %426 = vrot.lane.b32.xlu0 %v340, 4
      %v427 = vpop.permute.xlu0 %426
      %428 = vrot.lane.b32.xlu0 %v341, 4
      %v429 = vpop.permute.xlu0 %428
      %430 = vrot.lane.b32.xlu0 %v342, 4
      %v431 = vpop.permute.xlu0 %430
      %432 = vrot.lane.b32.xlu0 %v343, 4
      %v433 = vpop.permute.xlu0 %432
      %434 = vrot.lane.b32.xlu0 %v344, 4
      %v435 = vpop.permute.xlu0 %434
      %436 = vrot.lane.b32.xlu0 %v345, 4
      %v437 = vpop.permute.xlu0 %436
      %438 = vrot.lane.b32.xlu0 %v346, 4
      %v439 = vpop.permute.xlu0 %438
      %440 = vrot.lane.b32.xlu0 %v347, 4
      %v441 = vpop.permute.xlu0 %440
      %442 = vrot.lane.b32.xlu0 %v348, 4
      %v443 = vpop.permute.xlu0 %442
      %444 = vrot.lane.b32.xlu0 %v349, 4
      %v445 = vpop.permute.xlu0 %444
      %446 = vrot.lane.b32.xlu0 %v350, 4
      %v447 = vpop.permute.xlu0 %446
      %448 = vrot.lane.b32.xlu0 %v351, 4
      %v449 = vpop.permute.xlu0 %448
      %450 = vrot.lane.b32.xlu0 %v352, 4
      %v451 = vpop.permute.xlu0 %450
      %452 = vrot.lane.b32.xlu0 %v353, 4
      %v453 = vpop.permute.xlu0 %452
      %454 = vrot.lane.b32.xlu0 %v354, 4
      %v455 = vpop.permute.xlu0 %454
      %456 = vrot.lane.b32.xlu0 %v355, 4
      %v457 = vpop.permute.xlu0 %456
      %458 = vrot.lane.b32.xlu0 %v356, 4
      %v459 = vpop.permute.xlu0 %458
      %460 = vrot.lane.b32.xlu0 %v357, 4
      %v461 = vpop.permute.xlu0 %460
      %462 = vrot.lane.b32.xlu0 %v358, 4
      %v463 = vpop.permute.xlu0 %462
      %464 = vrot.lane.b32.xlu0 %v359, 4
      %v465 = vpop.permute.xlu0 %464
      %466 = vrot.lane.b32.xlu0 %v360, 4
      %v467 = vpop.permute.xlu0 %466
      %468 = vrot.lane.b32.xlu0 %v361, 4
      %v469 = vpop.permute.xlu0 %468
      %470 = vrot.lane.b32.xlu0 %v362, 4
      %v471 = vpop.permute.xlu0 %470
      %472 = vrot.lane.b32.xlu0 %v363, 4
      %v473 = vpop.permute.xlu0 %472
      %474 = vrot.lane.b32.xlu0 %v364, 4
      %v475 = vpop.permute.xlu0 %474
      %476 = vrot.lane.b32.xlu0 %v365, 4
      %v477 = vpop.permute.xlu0 %476
      %478 = vrot.lane.b32.xlu0 %v366, 4
      %v479 = vpop.permute.xlu0 %478
      %480 = vrot.lane.b32.xlu0 %v367, 4
      %v481 = vpop.permute.xlu0 %480
      %482 = vrot.lane.b32.xlu0 %v368, 4
      %v483 = vpop.permute.xlu0 %482
      %484 = vrot.lane.b32.xlu0 %v369, 4
      %v485 = vpop.permute.xlu0 %484
      %486 = vrot.lane.b32.xlu0 %v370, 4
      %v487 = vpop.permute.xlu0 %486
      %488 = vrot.lane.b32.xlu0 %v371, 4
      %v489 = vpop.permute.xlu0 %488
      %490 = vrot.lane.b32.xlu0 %v372, 4
      %v491 = vpop.permute.xlu0 %490
      %492 = vrot.lane.b32.xlu0 %v373, 4
      %v493 = vpop.permute.xlu0 %492
      %vm534 = vcmask 64544
      %535 = vst.msk [vmem:[#allocation2] sm:$0xff] %vm534, %v415
      %536 = vst.msk [vmem:[#allocation2 + $0x8] sm:$0xff] %vm534, %v417
      %537 = vst.msk [vmem:[#allocation2 + $0x10] sm:$0xff] %vm534, %v419
      %538 = vst.msk [vmem:[#allocation2 + $0x18] sm:$0xff] %vm534, %v421
      %539 = vst.msk [vmem:[#allocation2 + $0x20] sm:$0xff] %vm534, %v423
      %540 = vst.msk [vmem:[#allocation2 + $0x28] sm:$0xff] %vm534, %v425
      %541 = vst.msk [vmem:[#allocation2 + $0x30] sm:$0xff] %vm534, %v427
      %542 = vst.msk [vmem:[#allocation2 + $0x38] sm:$0xff] %vm534, %v429
      %543 = vst.msk [vmem:[#allocation2 + $0x40] sm:$0xff] %vm534, %v431
      %544 = vst.msk [vmem:[#allocation2 + $0x48] sm:$0xff] %vm534, %v433
      %545 = vst.msk [vmem:[#allocation2 + $0x50] sm:$0xff] %vm534, %v435
      %546 = vst.msk [vmem:[#allocation2 + $0x58] sm:$0xff] %vm534, %v437
      %547 = vst.msk [vmem:[#allocation2 + $0x60] sm:$0xff] %vm534, %v439
      %548 = vst.msk [vmem:[#allocation2 + $0x68] sm:$0xff] %vm534, %v441
      %549 = vst.msk [vmem:[#allocation2 + $0x70] sm:$0xff] %vm534, %v443
      %550 = vst.msk [vmem:[#allocation2 + $0x78] sm:$0xff] %vm534, %v445
      %551 = vst.msk [vmem:[#allocation2 + $0x80] sm:$0xff] %vm534, %v447
      %552 = vst.msk [vmem:[#allocation2 + $0x88] sm:$0xff] %vm534, %v449
      %553 = vst.msk [vmem:[#allocation2 + $0x90] sm:$0xff] %vm534, %v451
      %554 = vst.msk [vmem:[#allocation2 + $0x98] sm:$0xff] %vm534, %v453
      %555 = vst.msk [vmem:[#allocation2 + $0xa0] sm:$0xff] %vm534, %v455
      %556 = vst.msk [vmem:[#allocation2 + $0xa8] sm:$0xff] %vm534, %v457
      %557 = vst.msk [vmem:[#allocation2 + $0xb0] sm:$0xff] %vm534, %v459
      %558 = vst.msk [vmem:[#allocation2 + $0xb8] sm:$0xff] %vm534, %v461
      %559 = vst.msk [vmem:[#allocation2 + $0xc0] sm:$0xff] %vm534, %v463
      %560 = vst.msk [vmem:[#allocation2 + $0xc8] sm:$0xff] %vm534, %v465
      %561 = vst.msk [vmem:[#allocation2 + $0xd0] sm:$0xff] %vm534, %v467
      %562 = vst.msk [vmem:[#allocation2 + $0xd8] sm:$0xff] %vm534, %v469
      %563 = vst.msk [vmem:[#allocation2 + $0xe0] sm:$0xff] %vm534, %v471
      %564 = vst.msk [vmem:[#allocation2 + $0xe8] sm:$0xff] %vm534, %v473
      %565 = vst.msk [vmem:[#allocation2 + $0xf0] sm:$0xff] %vm534, %v475
      %566 = vst.msk [vmem:[#allocation2 + $0xf8] sm:$0xff] %vm534, %v477
      %567 = vst.msk [vmem:[#allocation2 + $0x100] sm:$0xff] %vm534, %v479
      %568 = vst.msk [vmem:[#allocation2 + $0x108] sm:$0xff] %vm534, %v481
      %569 = vst.msk [vmem:[#allocation2 + $0x110] sm:$0xff] %vm534, %v483
      %570 = vst.msk [vmem:[#allocation2 + $0x118] sm:$0xff] %vm534, %v485
      %571 = vst.msk [vmem:[#allocation2 + $0x120] sm:$0xff] %vm534, %v487
      %572 = vst.msk [vmem:[#allocation2 + $0x128] sm:$0xff] %vm534, %v489
      %573 = vst.msk [vmem:[#allocation2 + $0x130] sm:$0xff] %vm534, %v491
      %vm574 = vcmask 60448
      %575 = vst.msk [vmem:[#allocation2 + $0x138] sm:$0xf] %vm574, %v493
      %v576 = vld [vmem:[%s246 + $0x4] sm:$0xff]
      %v577 = vld [vmem:[%s246 + $0xc] sm:$0xff]
      %v578 = vld [vmem:[%s246 + $0x14] sm:$0xff]
      %v579 = vld [vmem:[%s246 + $0x1c] sm:$0xff]
      %v580 = vld [vmem:[%s246 + $0x24] sm:$0xff]
      %v581 = vld [vmem:[%s246 + $0x2c] sm:$0xff]
      %v582 = vld [vmem:[%s246 + $0x34] sm:$0xff]
      %v583 = vld [vmem:[%s246 + $0x3c] sm:$0xff]
      %v584 = vld [vmem:[%s246 + $0x44] sm:$0xff]
      %v585 = vld [vmem:[%s246 + $0x4c] sm:$0xff]
      %v586 = vld [vmem:[%s246 + $0x54] sm:$0xff]
      %v587 = vld [vmem:[%s246 + $0x5c] sm:$0xff]
      %v588 = vld [vmem:[%s246 + $0x64] sm:$0xff]
      %v589 = vld [vmem:[%s246 + $0x6c] sm:$0xff]
      %v590 = vld [vmem:[%s246 + $0x74] sm:$0xff]
      %v591 = vld [vmem:[%s246 + $0x7c] sm:$0xff]
      %v592 = vld [vmem:[%s246 + $0x84] sm:$0xff]
      %v593 = vld [vmem:[%s246 + $0x8c] sm:$0xff]
      %v594 = vld [vmem:[%s246 + $0x94] sm:$0xff]
      %v595 = vld [vmem:[%s246 + $0x9c] sm:$0xff]
      %v596 = vld [vmem:[%s246 + $0xa4] sm:$0xff]
      %v597 = vld [vmem:[%s246 + $0xac] sm:$0xff]
      %v598 = vld [vmem:[%s246 + $0xb4] sm:$0xff]
      %v599 = vld [vmem:[%s246 + $0xbc] sm:$0xff]
      %v600 = vld [vmem:[%s246 + $0xc4] sm:$0xff]
      %v601 = vld [vmem:[%s246 + $0xcc] sm:$0xff]
      %v602 = vld [vmem:[%s246 + $0xd4] sm:$0xff]
      %v603 = vld [vmem:[%s246 + $0xdc] sm:$0xff]
      %v604 = vld [vmem:[%s246 + $0xe4] sm:$0xff]
      %v605 = vld [vmem:[%s246 + $0xec] sm:$0xff]
      %v606 = vld [vmem:[%s246 + $0xf4] sm:$0xff]
      %v607 = vld [vmem:[%s246 + $0xfc] sm:$0xff]
      %v608 = vld [vmem:[%s246 + $0x104] sm:$0xff]
      %v609 = vld [vmem:[%s246 + $0x10c] sm:$0xff]
      %v610 = vld [vmem:[%s246 + $0x114] sm:$0xff]
      %v611 = vld [vmem:[%s246 + $0x11c] sm:$0xff]
      %v612 = vld [vmem:[%s246 + $0x124] sm:$0xff]
      %v613 = vld [vmem:[%s246 + $0x12c] sm:$0xff]
      %v614 = vld [vmem:[%s246 + $0x134] sm:$0xff]
      %v615 = vld [vmem:[%s246 + $0x13c] sm:$0xf]
      %656 = vrot.lane.b32.xlu0 %v576, 8
      %v657 = vpop.permute.xlu0 %656
      %658 = vrot.lane.b32.xlu0 %v577, 8
      %v659 = vpop.permute.xlu0 %658
      %660 = vrot.lane.b32.xlu0 %v578, 8
      %v661 = vpop.permute.xlu0 %660
      %662 = vrot.lane.b32.xlu0 %v579, 8
      %v663 = vpop.permute.xlu0 %662
      %664 = vrot.lane.b32.xlu0 %v580, 8
      %v665 = vpop.permute.xlu0 %664
      %666 = vrot.lane.b32.xlu0 %v581, 8
      %v667 = vpop.permute.xlu0 %666
      %668 = vrot.lane.b32.xlu0 %v582, 8
      %v669 = vpop.permute.xlu0 %668
      %670 = vrot.lane.b32.xlu0 %v583, 8
      %v671 = vpop.permute.xlu0 %670
      %672 = vrot.lane.b32.xlu0 %v584, 8
      %v673 = vpop.permute.xlu0 %672
      %674 = vrot.lane.b32.xlu0 %v585, 8
      %v675 = vpop.permute.xlu0 %674
      %676 = vrot.lane.b32.xlu0 %v586, 8
      %v677 = vpop.permute.xlu0 %676
      %678 = vrot.lane.b32.xlu0 %v587, 8
      %v679 = vpop.permute.xlu0 %678
      %680 = vrot.lane.b32.xlu0 %v588, 8
      %v681 = vpop.permute.xlu0 %680
      %682 = vrot.lane.b32.xlu0 %v589, 8
      %v683 = vpop.permute.xlu0 %682
      %684 = vrot.lane.b32.xlu0 %v590, 8
      %v685 = vpop.permute.xlu0 %684
      %686 = vrot.lane.b32.xlu0 %v591, 8
      %v687 = vpop.permute.xlu0 %686
      %688 = vrot.lane.b32.xlu0 %v592, 8
      %v689 = vpop.permute.xlu0 %688
      %690 = vrot.lane.b32.xlu0 %v593, 8
      %v691 = vpop.permute.xlu0 %690
      %692 = vrot.lane.b32.xlu0 %v594, 8
      %v693 = vpop.permute.xlu0 %692
      %694 = vrot.lane.b32.xlu0 %v595, 8
      %v695 = vpop.permute.xlu0 %694
      %696 = vrot.lane.b32.xlu0 %v596, 8
      %v697 = vpop.permute.xlu0 %696
      %698 = vrot.lane.b32.xlu0 %v597, 8
      %v699 = vpop.permute.xlu0 %698
      %700 = vrot.lane.b32.xlu0 %v598, 8
      %v701 = vpop.permute.xlu0 %700
      %702 = vrot.lane.b32.xlu0 %v599, 8
      %v703 = vpop.permute.xlu0 %702
      %704 = vrot.lane.b32.xlu0 %v600, 8
      %v705 = vpop.permute.xlu0 %704
      %706 = vrot.lane.b32.xlu0 %v601, 8
      %v707 = vpop.permute.xlu0 %706
      %708 = vrot.lane.b32.xlu0 %v602, 8
      %v709 = vpop.permute.xlu0 %708
      %710 = vrot.lane.b32.xlu0 %v603, 8
      %v711 = vpop.permute.xlu0 %710
      %712 = vrot.lane.b32.xlu0 %v604, 8
      %v713 = vpop.permute.xlu0 %712
      %714 = vrot.lane.b32.xlu0 %v605, 8
      %v715 = vpop.permute.xlu0 %714
      %716 = vrot.lane.b32.xlu0 %v606, 8
      %v717 = vpop.permute.xlu0 %716
      %718 = vrot.lane.b32.xlu0 %v607, 8
      %v719 = vpop.permute.xlu0 %718
      %720 = vrot.lane.b32.xlu0 %v608, 8
      %v721 = vpop.permute.xlu0 %720
      %722 = vrot.lane.b32.xlu0 %v609, 8
      %v723 = vpop.permute.xlu0 %722
      %724 = vrot.lane.b32.xlu0 %v610, 8
      %v725 = vpop.permute.xlu0 %724
      %726 = vrot.lane.b32.xlu0 %v611, 8
      %v727 = vpop.permute.xlu0 %726
      %728 = vrot.lane.b32.xlu0 %v612, 8
      %v729 = vpop.permute.xlu0 %728
      %730 = vrot.lane.b32.xlu0 %v613, 8
      %v731 = vpop.permute.xlu0 %730
      %732 = vrot.lane.b32.xlu0 %v614, 8
      %v733 = vpop.permute.xlu0 %732
      %734 = vrot.lane.b32.xlu0 %v615, 8
      %v735 = vpop.permute.xlu0 %734
      %vm776 = vcmask 97344
      %777 = vst.msk [vmem:[#allocation2] sm:$0xff] %vm776, %v657
      %778 = vst.msk [vmem:[#allocation2 + $0x8] sm:$0xff] %vm776, %v659
      %779 = vst.msk [vmem:[#allocation2 + $0x10] sm:$0xff] %vm776, %v661
      %780 = vst.msk [vmem:[#allocation2 + $0x18] sm:$0xff] %vm776, %v663
      %781 = vst.msk [vmem:[#allocation2 + $0x20] sm:$0xff] %vm776, %v665
      %782 = vst.msk [vmem:[#allocation2 + $0x28] sm:$0xff] %vm776, %v667
      %783 = vst.msk [vmem:[#allocation2 + $0x30] sm:$0xff] %vm776, %v669
      %784 = vst.msk [vmem:[#allocation2 + $0x38] sm:$0xff] %vm776, %v671
      %785 = vst.msk [vmem:[#allocation2 + $0x40] sm:$0xff] %vm776, %v673
      %786 = vst.msk [vmem:[#allocation2 + $0x48] sm:$0xff] %vm776, %v675
      %787 = vst.msk [vmem:[#allocation2 + $0x50] sm:$0xff] %vm776, %v677
      %788 = vst.msk [vmem:[#allocation2 + $0x58] sm:$0xff] %vm776, %v679
      %789 = vst.msk [vmem:[#allocation2 + $0x60] sm:$0xff] %vm776, %v681
      %790 = vst.msk [vmem:[#allocation2 + $0x68] sm:$0xff] %vm776, %v683
      %791 = vst.msk [vmem:[#allocation2 + $0x70] sm:$0xff] %vm776, %v685
      %792 = vst.msk [vmem:[#allocation2 + $0x78] sm:$0xff] %vm776, %v687
      %793 = vst.msk [vmem:[#allocation2 + $0x80] sm:$0xff] %vm776, %v689
      %794 = vst.msk [vmem:[#allocation2 + $0x88] sm:$0xff] %vm776, %v691
      %795 = vst.msk [vmem:[#allocation2 + $0x90] sm:$0xff] %vm776, %v693
      %796 = vst.msk [vmem:[#allocation2 + $0x98] sm:$0xff] %vm776, %v695
      %797 = vst.msk [vmem:[#allocation2 + $0xa0] sm:$0xff] %vm776, %v697
      %798 = vst.msk [vmem:[#allocation2 + $0xa8] sm:$0xff] %vm776, %v699
      %799 = vst.msk [vmem:[#allocation2 + $0xb0] sm:$0xff] %vm776, %v701
      %800 = vst.msk [vmem:[#allocation2 + $0xb8] sm:$0xff] %vm776, %v703
      %801 = vst.msk [vmem:[#allocation2 + $0xc0] sm:$0xff] %vm776, %v705
      %802 = vst.msk [vmem:[#allocation2 + $0xc8] sm:$0xff] %vm776, %v707
      %803 = vst.msk [vmem:[#allocation2 + $0xd0] sm:$0xff] %vm776, %v709
      %804 = vst.msk [vmem:[#allocation2 + $0xd8] sm:$0xff] %vm776, %v711
      %805 = vst.msk [vmem:[#allocation2 + $0xe0] sm:$0xff] %vm776, %v713
      %806 = vst.msk [vmem:[#allocation2 + $0xe8] sm:$0xff] %vm776, %v715
      %807 = vst.msk [vmem:[#allocation2 + $0xf0] sm:$0xff] %vm776, %v717
      %808 = vst.msk [vmem:[#allocation2 + $0xf8] sm:$0xff] %vm776, %v719
      %809 = vst.msk [vmem:[#allocation2 + $0x100] sm:$0xff] %vm776, %v721
      %810 = vst.msk [vmem:[#allocation2 + $0x108] sm:$0xff] %vm776, %v723
      %811 = vst.msk [vmem:[#allocation2 + $0x110] sm:$0xff] %vm776, %v725
      %812 = vst.msk [vmem:[#allocation2 + $0x118] sm:$0xff] %vm776, %v727
      %813 = vst.msk [vmem:[#allocation2 + $0x120] sm:$0xff] %vm776, %v729
      %814 = vst.msk [vmem:[#allocation2 + $0x128] sm:$0xff] %vm776, %v731
      %815 = vst.msk [vmem:[#allocation2 + $0x130] sm:$0xff] %vm776, %v733
      %vm816 = vcmask 93248
      %817 = vst.msk [vmem:[#allocation2 + $0x138] sm:$0xf] %vm816, %v735
      %v818 = vld [vmem:[%s246 + $0x28] sm:$0xff]
      %v819 = vld [vmem:[%s246 + $0x30] sm:$0xff]
      %v820 = vld [vmem:[%s246 + $0x38] sm:$0xff]
      %v821 = vld [vmem:[%s246 + $0x40] sm:$0xff]
      %v822 = vld [vmem:[%s246 + $0x48] sm:$0xff]
      %v823 = vld [vmem:[%s246 + $0x50] sm:$0xff]
      %v824 = vld [vmem:[%s246 + $0x58] sm:$0xff]
      %v825 = vld [vmem:[%s246 + $0x60] sm:$0xff]
      %v826 = vld [vmem:[%s246 + $0x68] sm:$0xff]
      %v827 = vld [vmem:[%s246 + $0x70] sm:$0xff]
      %v828 = vld [vmem:[%s246 + $0x78] sm:$0xff]
      %v829 = vld [vmem:[%s246 + $0x80] sm:$0xff]
      %v830 = vld [vmem:[%s246 + $0x88] sm:$0xff]
      %v831 = vld [vmem:[%s246 + $0x90] sm:$0xff]
      %v832 = vld [vmem:[%s246 + $0x98] sm:$0xff]
      %v833 = vld [vmem:[%s246 + $0xa0] sm:$0xff]
      %v834 = vld [vmem:[%s246 + $0xa8] sm:$0xff]
      %v835 = vld [vmem:[%s246 + $0xb0] sm:$0xff]
      %v836 = vld [vmem:[%s246 + $0xb8] sm:$0xff]
      %v837 = vld [vmem:[%s246 + $0xc0] sm:$0xff]
      %v838 = vld [vmem:[%s246 + $0xc8] sm:$0xff]
      %v839 = vld [vmem:[%s246 + $0xd0] sm:$0xff]
      %v840 = vld [vmem:[%s246 + $0xd8] sm:$0xff]
      %v841 = vld [vmem:[%s246 + $0xe0] sm:$0xff]
      %v842 = vld [vmem:[%s246 + $0xe8] sm:$0xff]
      %v843 = vld [vmem:[%s246 + $0xf0] sm:$0xff]
      %v844 = vld [vmem:[%s246 + $0xf8] sm:$0xff]
      %v845 = vld [vmem:[%s246 + $0x100] sm:$0xff]
      %v846 = vld [vmem:[%s246 + $0x108] sm:$0xff]
      %v847 = vld [vmem:[%s246 + $0x110] sm:$0xff]
      %v848 = vld [vmem:[%s246 + $0x118] sm:$0xff]
      %v849 = vld [vmem:[%s246 + $0x120] sm:$0xff]
      %v850 = vld [vmem:[%s246 + $0x128] sm:$0xff]
      %v851 = vld [vmem:[%s246 + $0x130] sm:$0xff]
      %v852 = vld [vmem:[%s246 + $0x138] sm:$0xff]
      %v853 = vld [vmem:[%s246 + $0x140] sm:$0xff]
      %v854 = vld [vmem:[%s246 + $0x148] sm:$0xff]
      %v855 = vld [vmem:[%s246 + $0x150] sm:$0xff]
      %v856 = vld [vmem:[%s246 + $0x158] sm:$0xff]
      %v857 = vld [vmem:[%s246 + $0x160] sm:$0xf]
      %898 = vrot.lane.b32.xlu0 %v818, 12
      %v899 = vpop.permute.xlu0 %898
      %900 = vrot.lane.b32.xlu0 %v819, 12
      %v901 = vpop.permute.xlu0 %900
      %902 = vrot.lane.b32.xlu0 %v820, 12
      %v903 = vpop.permute.xlu0 %902
      %904 = vrot.lane.b32.xlu0 %v821, 12
      %v905 = vpop.permute.xlu0 %904
      %906 = vrot.lane.b32.xlu0 %v822, 12
      %v907 = vpop.permute.xlu0 %906
      %908 = vrot.lane.b32.xlu0 %v823, 12
      %v909 = vpop.permute.xlu0 %908
      %910 = vrot.lane.b32.xlu0 %v824, 12
      %v911 = vpop.permute.xlu0 %910
      %912 = vrot.lane.b32.xlu0 %v825, 12
      %v913 = vpop.permute.xlu0 %912
      %914 = vrot.lane.b32.xlu0 %v826, 12
      %v915 = vpop.permute.xlu0 %914
      %916 = vrot.lane.b32.xlu0 %v827, 12
      %v917 = vpop.permute.xlu0 %916
      %918 = vrot.lane.b32.xlu0 %v828, 12
      %v919 = vpop.permute.xlu0 %918
      %920 = vrot.lane.b32.xlu0 %v829, 12
      %v921 = vpop.permute.xlu0 %920
      %922 = vrot.lane.b32.xlu0 %v830, 12
      %v923 = vpop.permute.xlu0 %922
      %924 = vrot.lane.b32.xlu0 %v831, 12
      %v925 = vpop.permute.xlu0 %924
      %926 = vrot.lane.b32.xlu0 %v832, 12
      %v927 = vpop.permute.xlu0 %926
      %928 = vrot.lane.b32.xlu0 %v833, 12
      %v929 = vpop.permute.xlu0 %928
      %930 = vrot.lane.b32.xlu0 %v834, 12
      %v931 = vpop.permute.xlu0 %930
      %932 = vrot.lane.b32.xlu0 %v835, 12
      %v933 = vpop.permute.xlu0 %932
      %934 = vrot.lane.b32.xlu0 %v836, 12
      %v935 = vpop.permute.xlu0 %934
      %936 = vrot.lane.b32.xlu0 %v837, 12
      %v937 = vpop.permute.xlu0 %936
      %938 = vrot.lane.b32.xlu0 %v838, 12
      %v939 = vpop.permute.xlu0 %938
      %940 = vrot.lane.b32.xlu0 %v839, 12
      %v941 = vpop.permute.xlu0 %940
      %942 = vrot.lane.b32.xlu0 %v840, 12
      %v943 = vpop.permute.xlu0 %942
      %944 = vrot.lane.b32.xlu0 %v841, 12
      %v945 = vpop.permute.xlu0 %944
      %946 = vrot.lane.b32.xlu0 %v842, 12
      %v947 = vpop.permute.xlu0 %946
      %948 = vrot.lane.b32.xlu0 %v843, 12
      %v949 = vpop.permute.xlu0 %948
      %950 = vrot.lane.b32.xlu0 %v844, 12
      %v951 = vpop.permute.xlu0 %950
      %952 = vrot.lane.b32.xlu0 %v845, 12
      %v953 = vpop.permute.xlu0 %952
      %954 = vrot.lane.b32.xlu0 %v846, 12
      %v955 = vpop.permute.xlu0 %954
      %956 = vrot.lane.b32.xlu0 %v847, 12
      %v957 = vpop.permute.xlu0 %956
      %958 = vrot.lane.b32.xlu0 %v848, 12
      %v959 = vpop.permute.xlu0 %958
      %960 = vrot.lane.b32.xlu0 %v849, 12
      %v961 = vpop.permute.xlu0 %960
      %962 = vrot.lane.b32.xlu0 %v850, 12
      %v963 = vpop.permute.xlu0 %962
      %964 = vrot.lane.b32.xlu0 %v851, 12
      %v965 = vpop.permute.xlu0 %964
      %966 = vrot.lane.b32.xlu0 %v852, 12
      %v967 = vpop.permute.xlu0 %966
      %968 = vrot.lane.b32.xlu0 %v853, 12
      %v969 = vpop.permute.xlu0 %968
      %970 = vrot.lane.b32.xlu0 %v854, 12
      %v971 = vpop.permute.xlu0 %970
      %972 = vrot.lane.b32.xlu0 %v855, 12
      %v973 = vpop.permute.xlu0 %972
      %974 = vrot.lane.b32.xlu0 %v856, 12
      %v975 = vpop.permute.xlu0 %974
      %976 = vrot.lane.b32.xlu0 %v857, 12
      %v977 = vpop.permute.xlu0 %976
      %vm1018 = vcmask 130144
      %1019 = vst.msk [vmem:[#allocation2] sm:$0xff] %vm1018, %v899
      %1020 = vst.msk [vmem:[#allocation2 + $0x8] sm:$0xff] %vm1018, %v901
      %1021 = vst.msk [vmem:[#allocation2 + $0x10] sm:$0xff] %vm1018, %v903
      %1022 = vst.msk [vmem:[#allocation2 + $0x18] sm:$0xff] %vm1018, %v905
      %1023 = vst.msk [vmem:[#allocation2 + $0x20] sm:$0xff] %vm1018, %v907
      %1024 = vst.msk [vmem:[#allocation2 + $0x28] sm:$0xff] %vm1018, %v909
      %1025 = vst.msk [vmem:[#allocation2 + $0x30] sm:$0xff] %vm1018, %v911
      %1026 = vst.msk [vmem:[#allocation2 + $0x38] sm:$0xff] %vm1018, %v913
      %1027 = vst.msk [vmem:[#allocation2 + $0x40] sm:$0xff] %vm1018, %v915
      %1028 = vst.msk [vmem:[#allocation2 + $0x48] sm:$0xff] %vm1018, %v917
      %1029 = vst.msk [vmem:[#allocation2 + $0x50] sm:$0xff] %vm1018, %v919
      %1030 = vst.msk [vmem:[#allocation2 + $0x58] sm:$0xff] %vm1018, %v921
      %1031 = vst.msk [vmem:[#allocation2 + $0x60] sm:$0xff] %vm1018, %v923
      %1032 = vst.msk [vmem:[#allocation2 + $0x68] sm:$0xff] %vm1018, %v925
      %1033 = vst.msk [vmem:[#allocation2 + $0x70] sm:$0xff] %vm1018, %v927
      %1034 = vst.msk [vmem:[#allocation2 + $0x78] sm:$0xff] %vm1018, %v929
      %1035 = vst.msk [vmem:[#allocation2 + $0x80] sm:$0xff] %vm1018, %v931
      %1036 = vst.msk [vmem:[#allocation2 + $0x88] sm:$0xff] %vm1018, %v933
      %1037 = vst.msk [vmem:[#allocation2 + $0x90] sm:$0xff] %vm1018, %v935
      %1038 = vst.msk [vmem:[#allocation2 + $0x98] sm:$0xff] %vm1018, %v937
      %1039 = vst.msk [vmem:[#allocation2 + $0xa0] sm:$0xff] %vm1018, %v939
      %1040 = vst.msk [vmem:[#allocation2 + $0xa8] sm:$0xff] %vm1018, %v941
      %1041 = vst.msk [vmem:[#allocation2 + $0xb0] sm:$0xff] %vm1018, %v943
      %1042 = vst.msk [vmem:[#allocation2 + $0xb8] sm:$0xff] %vm1018, %v945
      %1043 = vst.msk [vmem:[#allocation2 + $0xc0] sm:$0xff] %vm1018, %v947
      %1044 = vst.msk [vmem:[#allocation2 + $0xc8] sm:$0xff] %vm1018, %v949
      %1045 = vst.msk [vmem:[#allocation2 + $0xd0] sm:$0xff] %vm1018, %v951
      %1046 = vst.msk [vmem:[#allocation2 + $0xd8] sm:$0xff] %vm1018, %v953
      %1047 = vst.msk [vmem:[#allocation2 + $0xe0] sm:$0xff] %vm1018, %v955
      %1048 = vst.msk [vmem:[#allocation2 + $0xe8] sm:$0xff] %vm1018, %v957
      %1049 = vst.msk [vmem:[#allocation2 + $0xf0] sm:$0xff] %vm1018, %v959
      %1050 = vst.msk [vmem:[#allocation2 + $0xf8] sm:$0xff] %vm1018, %v961
      %1051 = vst.msk [vmem:[#allocation2 + $0x100] sm:$0xff] %vm1018, %v963
      %1052 = vst.msk [vmem:[#allocation2 + $0x108] sm:$0xff] %vm1018, %v965
      %1053 = vst.msk [vmem:[#allocation2 + $0x110] sm:$0xff] %vm1018, %v967
      %1054 = vst.msk [vmem:[#allocation2 + $0x118] sm:$0xff] %vm1018, %v969
      %1055 = vst.msk [vmem:[#allocation2 + $0x120] sm:$0xff] %vm1018, %v971
      %1056 = vst.msk [vmem:[#allocation2 + $0x128] sm:$0xff] %vm1018, %v973
      %1057 = vst.msk [vmem:[#allocation2 + $0x130] sm:$0xff] %vm1018, %v975
      %vm1058 = vcmask 126048
      %1059 = vst.msk [vmem:[#allocation2 + $0x138] sm:$0xf] %vm1058, %v977
      %v1060 = vld [vmem:[%s246 + $0x2a] sm:$0xff]
      %v1061 = vld [vmem:[%s246 + $0x32] sm:$0xff]
      %v1062 = vld [vmem:[%s246 + $0x3a] sm:$0xff]
      %v1063 = vld [vmem:[%s246 + $0x42] sm:$0xff]
      %v1064 = vld [vmem:[%s246 + $0x4a] sm:$0xff]
      %v1065 = vld [vmem:[%s246 + $0x52] sm:$0xff]
      %v1066 = vld [vmem:[%s246 + $0x5a] sm:$0xff]
      %v1067 = vld [vmem:[%s246 + $0x62] sm:$0xff]
      %v1068 = vld [vmem:[%s246 + $0x6a] sm:$0xff]
      %v1069 = vld [vmem:[%s246 + $0x72] sm:$0xff]
      %v1070 = vld [vmem:[%s246 + $0x7a] sm:$0xff]
      %v1071 = vld [vmem:[%s246 + $0x82] sm:$0xff]
      %v1072 = vld [vmem:[%s246 + $0x8a] sm:$0xff]
      %v1073 = vld [vmem:[%s246 + $0x92] sm:$0xff]
      %v1074 = vld [vmem:[%s246 + $0x9a] sm:$0xff]
      %v1075 = vld [vmem:[%s246 + $0xa2] sm:$0xff]
      %v1076 = vld [vmem:[%s246 + $0xaa] sm:$0xff]
      %v1077 = vld [vmem:[%s246 + $0xb2] sm:$0xff]
      %v1078 = vld [vmem:[%s246 + $0xba] sm:$0xff]
      %v1079 = vld [vmem:[%s246 + $0xc2] sm:$0xff]
      %v1080 = vld [vmem:[%s246 + $0xca] sm:$0xff]
      %v1081 = vld [vmem:[%s246 + $0xd2] sm:$0xff]
      %v1082 = vld [vmem:[%s246 + $0xda] sm:$0xff]
      %v1083 = vld [vmem:[%s246 + $0xe2] sm:$0xff]
      %v1084 = vld [vmem:[%s246 + $0xea] sm:$0xff]
      %v1085 = vld [vmem:[%s246 + $0xf2] sm:$0xff]
      %v1086 = vld [vmem:[%s246 + $0xfa] sm:$0xff]
      %v1087 = vld [vmem:[%s246 + $0x102] sm:$0xff]
      %v1088 = vld [vmem:[%s246 + $0x10a] sm:$0xff]
      %v1089 = vld [vmem:[%s246 + $0x112] sm:$0xff]
      %v1090 = vld [vmem:[%s246 + $0x11a] sm:$0xff]
      %v1091 = vld [vmem:[%s246 + $0x122] sm:$0xff]
      %v1092 = vld [vmem:[%s246 + $0x12a] sm:$0xff]
      %v1093 = vld [vmem:[%s246 + $0x132] sm:$0xff]
      %v1094 = vld [vmem:[%s246 + $0x13a] sm:$0xff]
      %v1095 = vld [vmem:[%s246 + $0x142] sm:$0xff]
      %v1096 = vld [vmem:[%s246 + $0x14a] sm:$0xff]
      %v1097 = vld [vmem:[%s246 + $0x152] sm:$0xff]
      %v1098 = vld [vmem:[%s246 + $0x15a] sm:$0xff]
      %v1099 = vld [vmem:[%s246 + $0x162] sm:$0xf]
      %1140 = vrot.lane.b32.xlu0 %v1060, 16
      %v1141 = vpop.permute.xlu0 %1140
      %1142 = vrot.lane.b32.xlu0 %v1061, 16
      %v1143 = vpop.permute.xlu0 %1142
      %1144 = vrot.lane.b32.xlu0 %v1062, 16
      %v1145 = vpop.permute.xlu0 %1144
      %1146 = vrot.lane.b32.xlu0 %v1063, 16
      %v1147 = vpop.permute.xlu0 %1146
      %1148 = vrot.lane.b32.xlu0 %v1064, 16
      %v1149 = vpop.permute.xlu0 %1148
      %1150 = vrot.lane.b32.xlu0 %v1065, 16
      %v1151 = vpop.permute.xlu0 %1150
      %1152 = vrot.lane.b32.xlu0 %v1066, 16
      %v1153 = vpop.permute.xlu0 %1152
      %1154 = vrot.lane.b32.xlu0 %v1067, 16
      %v1155 = vpop.permute.xlu0 %1154
      %1156 = vrot.lane.b32.xlu0 %v1068, 16
      %v1157 = vpop.permute.xlu0 %1156
      %1158 = vrot.lane.b32.xlu0 %v1069, 16
      %v1159 = vpop.permute.xlu0 %1158
      %1160 = vrot.lane.b32.xlu0 %v1070, 16
      %v1161 = vpop.permute.xlu0 %1160
      %1162 = vrot.lane.b32.xlu0 %v1071, 16
      %v1163 = vpop.permute.xlu0 %1162
      %1164 = vrot.lane.b32.xlu0 %v1072, 16
      %v1165 = vpop.permute.xlu0 %1164
      %1166 = vrot.lane.b32.xlu0 %v1073, 16
      %v1167 = vpop.permute.xlu0 %1166
      %1168 = vrot.lane.b32.xlu0 %v1074, 16
      %v1169 = vpop.permute.xlu0 %1168
      %1170 = vrot.lane.b32.xlu0 %v1075, 16
      %v1171 = vpop.permute.xlu0 %1170
      %1172 = vrot.lane.b32.xlu0 %v1076, 16
      %v1173 = vpop.permute.xlu0 %1172
      %1174 = vrot.lane.b32.xlu0 %v1077, 16
      %v1175 = vpop.permute.xlu0 %1174
      %1176 = vrot.lane.b32.xlu0 %v1078, 16
      %v1177 = vpop.permute.xlu0 %1176
      %1178 = vrot.lane.b32.xlu0 %v1079, 16
      %v1179 = vpop.permute.xlu0 %1178
      %1180 = vrot.lane.b32.xlu0 %v1080, 16
      %v1181 = vpop.permute.xlu0 %1180
      %1182 = vrot.lane.b32.xlu0 %v1081, 16
      %v1183 = vpop.permute.xlu0 %1182
      %1184 = vrot.lane.b32.xlu0 %v1082, 16
      %v1185 = vpop.permute.xlu0 %1184
      %1186 = vrot.lane.b32.xlu0 %v1083, 16
      %v1187 = vpop.permute.xlu0 %1186
      %1188 = vrot.lane.b32.xlu0 %v1084, 16
      %v1189 = vpop.permute.xlu0 %1188
      %1190 = vrot.lane.b32.xlu0 %v1085, 16
      %v1191 = vpop.permute.xlu0 %1190
      %1192 = vrot.lane.b32.xlu0 %v1086, 16
      %v1193 = vpop.permute.xlu0 %1192
      %1194 = vrot.lane.b32.xlu0 %v1087, 16
      %v1195 = vpop.permute.xlu0 %1194
      %1196 = vrot.lane.b32.xlu0 %v1088, 16
      %v1197 = vpop.permute.xlu0 %1196
      %1198 = vrot.lane.b32.xlu0 %v1089, 16
      %v1199 = vpop.permute.xlu0 %1198
      %1200 = vrot.lane.b32.xlu0 %v1090, 16
      %v1201 = vpop.permute.xlu0 %1200
      %1202 = vrot.lane.b32.xlu0 %v1091, 16
      %v1203 = vpop.permute.xlu0 %1202
      %1204 = vrot.lane.b32.xlu0 %v1092, 16
      %v1205 = vpop.permute.xlu0 %1204
      %1206 = vrot.lane.b32.xlu0 %v1093, 16
      %v1207 = vpop.permute.xlu0 %1206
      %1208 = vrot.lane.b32.xlu0 %v1094, 16
      %v1209 = vpop.permute.xlu0 %1208
      %1210 = vrot.lane.b32.xlu0 %v1095, 16
      %v1211 = vpop.permute.xlu0 %1210
      %1212 = vrot.lane.b32.xlu0 %v1096, 16
      %v1213 = vpop.permute.xlu0 %1212
      %1214 = vrot.lane.b32.xlu0 %v1097, 16
      %v1215 = vpop.permute.xlu0 %1214
      %1216 = vrot.lane.b32.xlu0 %v1098, 16
      %v1217 = vpop.permute.xlu0 %1216
      %1218 = vrot.lane.b32.xlu0 %v1099, 16
      %v1219 = vpop.permute.xlu0 %1218
      %vm1260 = vcmask 162944
      %1261 = vst.msk [vmem:[#allocation2] sm:$0xff] %vm1260, %v1141
      %1262 = vst.msk [vmem:[#allocation2 + $0x8] sm:$0xff] %vm1260, %v1143
      %1263 = vst.msk [vmem:[#allocation2 + $0x10] sm:$0xff] %vm1260, %v1145
      %1264 = vst.msk [vmem:[#allocation2 + $0x18] sm:$0xff] %vm1260, %v1147
      %1265 = vst.msk [vmem:[#allocation2 + $0x20] sm:$0xff] %vm1260, %v1149
      %1266 = vst.msk [vmem:[#allocation2 + $0x28] sm:$0xff] %vm1260, %v1151
      %1267 = vst.msk [vmem:[#allocation2 + $0x30] sm:$0xff] %vm1260, %v1153
      %1268 = vst.msk [vmem:[#allocation2 + $0x38] sm:$0xff] %vm1260, %v1155
      %1269 = vst.msk [vmem:[#allocation2 + $0x40] sm:$0xff] %vm1260, %v1157
      %1270 = vst.msk [vmem:[#allocation2 + $0x48] sm:$0xff] %vm1260, %v1159
      %1271 = vst.msk [vmem:[#allocation2 + $0x50] sm:$0xff] %vm1260, %v1161
      %1272 = vst.msk [vmem:[#allocation2 + $0x58] sm:$0xff] %vm1260, %v1163
      %1273 = vst.msk [vmem:[#allocation2 + $0x60] sm:$0xff] %vm1260, %v1165
      %1274 = vst.msk [vmem:[#allocation2 + $0x68] sm:$0xff] %vm1260, %v1167
      %1275 = vst.msk [vmem:[#allocation2 + $0x70] sm:$0xff] %vm1260, %v1169
      %1276 = vst.msk [vmem:[#allocation2 + $0x78] sm:$0xff] %vm1260, %v1171
      %1277 = vst.msk [vmem:[#allocation2 + $0x80] sm:$0xff] %vm1260, %v1173
      %1278 = vst.msk [vmem:[#allocation2 + $0x88] sm:$0xff] %vm1260, %v1175
      %1279 = vst.msk [vmem:[#allocation2 + $0x90] sm:$0xff] %vm1260, %v1177
      %1280 = vst.msk [vmem:[#allocation2 + $0x98] sm:$0xff] %vm1260, %v1179
      %1281 = vst.msk [vmem:[#allocation2 + $0xa0] sm:$0xff] %vm1260, %v1181
      %1282 = vst.msk [vmem:[#allocation2 + $0xa8] sm:$0xff] %vm1260, %v1183
      %1283 = vst.msk [vmem:[#allocation2 + $0xb0] sm:$0xff] %vm1260, %v1185
      %1284 = vst.msk [vmem:[#allocation2 + $0xb8] sm:$0xff] %vm1260, %v1187
      %1285 = vst.msk [vmem:[#allocation2 + $0xc0] sm:$0xff] %vm1260, %v1189
      %1286 = vst.msk [vmem:[#allocation2 + $0xc8] sm:$0xff] %vm1260, %v1191
      %1287 = vst.msk [vmem:[#allocation2 + $0xd0] sm:$0xff] %vm1260, %v1193
      %1288 = vst.msk [vmem:[#allocation2 + $0xd8] sm:$0xff] %vm1260, %v1195
      %1289 = vst.msk [vmem:[#allocation2 + $0xe0] sm:$0xff] %vm1260, %v1197
      %1290 = vst.msk [vmem:[#allocation2 + $0xe8] sm:$0xff] %vm1260, %v1199
      %1291 = vst.msk [vmem:[#allocation2 + $0xf0] sm:$0xff] %vm1260, %v1201
      %1292 = vst.msk [vmem:[#allocation2 + $0xf8] sm:$0xff] %vm1260, %v1203
      %1293 = vst.msk [vmem:[#allocation2 + $0x100] sm:$0xff] %vm1260, %v1205
      %1294 = vst.msk [vmem:[#allocation2 + $0x108] sm:$0xff] %vm1260, %v1207
      %1295 = vst.msk [vmem:[#allocation2 + $0x110] sm:$0xff] %vm1260, %v1209
      %1296 = vst.msk [vmem:[#allocation2 + $0x118] sm:$0xff] %vm1260, %v1211
      %1297 = vst.msk [vmem:[#allocation2 + $0x120] sm:$0xff] %vm1260, %v1213
      %1298 = vst.msk [vmem:[#allocation2 + $0x128] sm:$0xff] %vm1260, %v1215
      %1299 = vst.msk [vmem:[#allocation2 + $0x130] sm:$0xff] %vm1260, %v1217
      %vm1300 = vcmask 158848
      %1301 = vst.msk [vmem:[#allocation2 + $0x138] sm:$0xf] %vm1300, %v1219
      %v1302 = vld [vmem:[%s246 + $0x2c] sm:$0xff]
      %v1303 = vld [vmem:[%s246 + $0x34] sm:$0xff]
      %v1304 = vld [vmem:[%s246 + $0x3c] sm:$0xff]
      %v1305 = vld [vmem:[%s246 + $0x44] sm:$0xff]
      %v1306 = vld [vmem:[%s246 + $0x4c] sm:$0xff]
      %v1307 = vld [vmem:[%s246 + $0x54] sm:$0xff]
      %v1308 = vld [vmem:[%s246 + $0x5c] sm:$0xff]
      %v1309 = vld [vmem:[%s246 + $0x64] sm:$0xff]
      %v1310 = vld [vmem:[%s246 + $0x6c] sm:$0xff]
      %v1311 = vld [vmem:[%s246 + $0x74] sm:$0xff]
      %v1312 = vld [vmem:[%s246 + $0x7c] sm:$0xff]
      %v1313 = vld [vmem:[%s246 + $0x84] sm:$0xff]
      %v1314 = vld [vmem:[%s246 + $0x8c] sm:$0xff]
      %v1315 = vld [vmem:[%s246 + $0x94] sm:$0xff]
      %v1316 = vld [vmem:[%s246 + $0x9c] sm:$0xff]
      %v1317 = vld [vmem:[%s246 + $0xa4] sm:$0xff]
      %v1318 = vld [vmem:[%s246 + $0xac] sm:$0xff]
      %v1319 = vld [vmem:[%s246 + $0xb4] sm:$0xff]
      %v1320 = vld [vmem:[%s246 + $0xbc] sm:$0xff]
      %v1321 = vld [vmem:[%s246 + $0xc4] sm:$0xff]
      %v1322 = vld [vmem:[%s246 + $0xcc] sm:$0xff]
      %v1323 = vld [vmem:[%s246 + $0xd4] sm:$0xff]
      %v1324 = vld [vmem:[%s246 + $0xdc] sm:$0xff]
      %v1325 = vld [vmem:[%s246 + $0xe4] sm:$0xff]
      %v1326 = vld [vmem:[%s246 + $0xec] sm:$0xff]
      %v1327 = vld [vmem:[%s246 + $0xf4] sm:$0xff]
      %v1328 = vld [vmem:[%s246 + $0xfc] sm:$0xff]
      %v1329 = vld [vmem:[%s246 + $0x104] sm:$0xff]
      %v1330 = vld [vmem:[%s246 + $0x10c] sm:$0xff]
      %v1331 = vld [vmem:[%s246 + $0x114] sm:$0xff]
      %v1332 = vld [vmem:[%s246 + $0x11c] sm:$0xff]
      %v1333 = vld [vmem:[%s246 + $0x124] sm:$0xff]
      %v1334 = vld [vmem:[%s246 + $0x12c] sm:$0xff]
      %v1335 = vld [vmem:[%s246 + $0x134] sm:$0xff]
      %v1336 = vld [vmem:[%s246 + $0x13c] sm:$0xff]
      %v1337 = vld [vmem:[%s246 + $0x144] sm:$0xff]
      %v1338 = vld [vmem:[%s246 + $0x14c] sm:$0xff]
      %v1339 = vld [vmem:[%s246 + $0x154] sm:$0xff]
      %v1340 = vld [vmem:[%s246 + $0x15c] sm:$0xff]
      %v1341 = vld [vmem:[%s246 + $0x164] sm:$0xf]
      %1382 = vrot.lane.b32.xlu0 %v1302, 20
      %v1383 = vpop.permute.xlu0 %1382
      %1384 = vrot.lane.b32.xlu0 %v1303, 20
      %v1385 = vpop.permute.xlu0 %1384
      %1386 = vrot.lane.b32.xlu0 %v1304, 20
      %v1387 = vpop.permute.xlu0 %1386
      %1388 = vrot.lane.b32.xlu0 %v1305, 20
      %v1389 = vpop.permute.xlu0 %1388
      %1390 = vrot.lane.b32.xlu0 %v1306, 20
      %v1391 = vpop.permute.xlu0 %1390
      %1392 = vrot.lane.b32.xlu0 %v1307, 20
      %v1393 = vpop.permute.xlu0 %1392
      %1394 = vrot.lane.b32.xlu0 %v1308, 20
      %v1395 = vpop.permute.xlu0 %1394
      %1396 = vrot.lane.b32.xlu0 %v1309, 20
      %v1397 = vpop.permute.xlu0 %1396
      %1398 = vrot.lane.b32.xlu0 %v1310, 20
      %v1399 = vpop.permute.xlu0 %1398
      %1400 = vrot.lane.b32.xlu0 %v1311, 20
      %v1401 = vpop.permute.xlu0 %1400
      %1402 = vrot.lane.b32.xlu0 %v1312, 20
      %v1403 = vpop.permute.xlu0 %1402
      %1404 = vrot.lane.b32.xlu0 %v1313, 20
      %v1405 = vpop.permute.xlu0 %1404
      %1406 = vrot.lane.b32.xlu0 %v1314, 20
      %v1407 = vpop.permute.xlu0 %1406
      %1408 = vrot.lane.b32.xlu0 %v1315, 20
      %v1409 = vpop.permute.xlu0 %1408
      %1410 = vrot.lane.b32.xlu0 %v1316, 20
      %v1411 = vpop.permute.xlu0 %1410
      %1412 = vrot.lane.b32.xlu0 %v1317, 20
      %v1413 = vpop.permute.xlu0 %1412
      %1414 = vrot.lane.b32.xlu0 %v1318, 20
      %v1415 = vpop.permute.xlu0 %1414
      %1416 = vrot.lane.b32.xlu0 %v1319, 20
      %v1417 = vpop.permute.xlu0 %1416
      %1418 = vrot.lane.b32.xlu0 %v1320, 20
      %v1419 = vpop.permute.xlu0 %1418
      %1420 = vrot.lane.b32.xlu0 %v1321, 20
      %v1421 = vpop.permute.xlu0 %1420
      %1422 = vrot.lane.b32.xlu0 %v1322, 20
      %v1423 = vpop.permute.xlu0 %1422
      %1424 = vrot.lane.b32.xlu0 %v1323, 20
      %v1425 = vpop.permute.xlu0 %1424
      %1426 = vrot.lane.b32.xlu0 %v1324, 20
      %v1427 = vpop.permute.xlu0 %1426
      %1428 = vrot.lane.b32.xlu0 %v1325, 20
      %v1429 = vpop.permute.xlu0 %1428
      %1430 = vrot.lane.b32.xlu0 %v1326, 20
      %v1431 = vpop.permute.xlu0 %1430
      %1432 = vrot.lane.b32.xlu0 %v1327, 20
      %v1433 = vpop.permute.xlu0 %1432
      %1434 = vrot.lane.b32.xlu0 %v1328, 20
      %v1435 = vpop.permute.xlu0 %1434
      %1436 = vrot.lane.b32.xlu0 %v1329, 20
      %v1437 = vpop.permute.xlu0 %1436
      %1438 = vrot.lane.b32.xlu0 %v1330, 20
      %v1439 = vpop.permute.xlu0 %1438
      %1440 = vrot.lane.b32.xlu0 %v1331, 20
      %v1441 = vpop.permute.xlu0 %1440
      %1442 = vrot.lane.b32.xlu0 %v1332, 20
      %v1443 = vpop.permute.xlu0 %1442
      %1444 = vrot.lane.b32.xlu0 %v1333, 20
      %v1445 = vpop.permute.xlu0 %1444
      %1446 = vrot.lane.b32.xlu0 %v1334, 20
      %v1447 = vpop.permute.xlu0 %1446
      %1448 = vrot.lane.b32.xlu0 %v1335, 20
      %v1449 = vpop.permute.xlu0 %1448
      %1450 = vrot.lane.b32.xlu0 %v1336, 20
      %v1451 = vpop.permute.xlu0 %1450
      %1452 = vrot.lane.b32.xlu0 %v1337, 20
      %v1453 = vpop.permute.xlu0 %1452
      %1454 = vrot.lane.b32.xlu0 %v1338, 20
      %v1455 = vpop.permute.xlu0 %1454
      %1456 = vrot.lane.b32.xlu0 %v1339, 20
      %v1457 = vpop.permute.xlu0 %1456
      %1458 = vrot.lane.b32.xlu0 %v1340, 20
      %v1459 = vpop.permute.xlu0 %1458
      %1460 = vrot.lane.b32.xlu0 %v1341, 20
      %v1461 = vpop.permute.xlu0 %1460
      %vm1502 = vcmask 195744
      %1503 = vst.msk [vmem:[#allocation2] sm:$0xff] %vm1502, %v1383
      %1504 = vst.msk [vmem:[#allocation2 + $0x8] sm:$0xff] %vm1502, %v1385
      %1505 = vst.msk [vmem:[#allocation2 + $0x10] sm:$0xff] %vm1502, %v1387
      %1506 = vst.msk [vmem:[#allocation2 + $0x18] sm:$0xff] %vm1502, %v1389
      %1507 = vst.msk [vmem:[#allocation2 + $0x20] sm:$0xff] %vm1502, %v1391
      %1508 = vst.msk [vmem:[#allocation2 + $0x28] sm:$0xff] %vm1502, %v1393
      %1509 = vst.msk [vmem:[#allocation2 + $0x30] sm:$0xff] %vm1502, %v1395
      %1510 = vst.msk [vmem:[#allocation2 + $0x38] sm:$0xff] %vm1502, %v1397
      %1511 = vst.msk [vmem:[#allocation2 + $0x40] sm:$0xff] %vm1502, %v1399
      %1512 = vst.msk [vmem:[#allocation2 + $0x48] sm:$0xff] %vm1502, %v1401
      %1513 = vst.msk [vmem:[#allocation2 + $0x50] sm:$0xff] %vm1502, %v1403
      %1514 = vst.msk [vmem:[#allocation2 + $0x58] sm:$0xff] %vm1502, %v1405
      %1515 = vst.msk [vmem:[#allocation2 + $0x60] sm:$0xff] %vm1502, %v1407
      %1516 = vst.msk [vmem:[#allocation2 + $0x68] sm:$0xff] %vm1502, %v1409
      %1517 = vst.msk [vmem:[#allocation2 + $0x70] sm:$0xff] %vm1502, %v1411
      %1518 = vst.msk [vmem:[#allocation2 + $0x78] sm:$0xff] %vm1502, %v1413
      %1519 = vst.msk [vmem:[#allocation2 + $0x80] sm:$0xff] %vm1502, %v1415
      %1520 = vst.msk [vmem:[#allocation2 + $0x88] sm:$0xff] %vm1502, %v1417
      %1521 = vst.msk [vmem:[#allocation2 + $0x90] sm:$0xff] %vm1502, %v1419
      %1522 = vst.msk [vmem:[#allocation2 + $0x98] sm:$0xff] %vm1502, %v1421
      %1523 = vst.msk [vmem:[#allocation2 + $0xa0] sm:$0xff] %vm1502, %v1423
      %1524 = vst.msk [vmem:[#allocation2 + $0xa8] sm:$0xff] %vm1502, %v1425
      %1525 = vst.msk [vmem:[#allocation2 + $0xb0] sm:$0xff] %vm1502, %v1427
      %1526 = vst.msk [vmem:[#allocation2 + $0xb8] sm:$0xff] %vm1502, %v1429
      %1527 = vst.msk [vmem:[#allocation2 + $0xc0] sm:$0xff] %vm1502, %v1431
      %1528 = vst.msk [vmem:[#allocation2 + $0xc8] sm:$0xff] %vm1502, %v1433
      %1529 = vst.msk [vmem:[#allocation2 + $0xd0] sm:$0xff] %vm1502, %v1435
      %1530 = vst.msk [vmem:[#allocation2 + $0xd8] sm:$0xff] %vm1502, %v1437
      %1531 = vst.msk [vmem:[#allocation2 + $0xe0] sm:$0xff] %vm1502, %v1439
      %1532 = vst.msk [vmem:[#allocation2 + $0xe8] sm:$0xff] %vm1502, %v1441
      %1533 = vst.msk [vmem:[#allocation2 + $0xf0] sm:$0xff] %vm1502, %v1443
      %1534 = vst.msk [vmem:[#allocation2 + $0xf8] sm:$0xff] %vm1502, %v1445
      %1535 = vst.msk [vmem:[#allocation2 + $0x100] sm:$0xff] %vm1502, %v1447
      %1536 = vst.msk [vmem:[#allocation2 + $0x108] sm:$0xff] %vm1502, %v1449
      %1537 = vst.msk [vmem:[#allocation2 + $0x110] sm:$0xff] %vm1502, %v1451
      %1538 = vst.msk [vmem:[#allocation2 + $0x118] sm:$0xff] %vm1502, %v1453
      %1539 = vst.msk [vmem:[#allocation2 + $0x120] sm:$0xff] %vm1502, %v1455
      %1540 = vst.msk [vmem:[#allocation2 + $0x128] sm:$0xff] %vm1502, %v1457
      %1541 = vst.msk [vmem:[#allocation2 + $0x130] sm:$0xff] %vm1502, %v1459
      %vm1542 = vcmask 191648
      %1543 = vst.msk [vmem:[#allocation2 + $0x138] sm:$0xf] %vm1542, %v1461
      %v1544 = vld [vmem:[%s246 + $0x50] sm:$0xff]
      %v1545 = vld [vmem:[%s246 + $0x58] sm:$0xff]
      %v1546 = vld [vmem:[%s246 + $0x60] sm:$0xff]
      %v1547 = vld [vmem:[%s246 + $0x68] sm:$0xff]
      %v1548 = vld [vmem:[%s246 + $0x70] sm:$0xff]
      %v1549 = vld [vmem:[%s246 + $0x78] sm:$0xff]
      %v1550 = vld [vmem:[%s246 + $0x80] sm:$0xff]
      %v1551 = vld [vmem:[%s246 + $0x88] sm:$0xff]
      %v1552 = vld [vmem:[%s246 + $0x90] sm:$0xff]
      %v1553 = vld [vmem:[%s246 + $0x98] sm:$0xff]
      %v1554 = vld [vmem:[%s246 + $0xa0] sm:$0xff]
      %v1555 = vld [vmem:[%s246 + $0xa8] sm:$0xff]
      %v1556 = vld [vmem:[%s246 + $0xb0] sm:$0xff]
      %v1557 = vld [vmem:[%s246 + $0xb8] sm:$0xff]
      %v1558 = vld [vmem:[%s246 + $0xc0] sm:$0xff]
      %v1559 = vld [vmem:[%s246 + $0xc8] sm:$0xff]
      %v1560 = vld [vmem:[%s246 + $0xd0] sm:$0xff]
      %v1561 = vld [vmem:[%s246 + $0xd8] sm:$0xff]
      %v1562 = vld [vmem:[%s246 + $0xe0] sm:$0xff]
      %v1563 = vld [vmem:[%s246 + $0xe8] sm:$0xff]
      %v1564 = vld [vmem:[%s246 + $0xf0] sm:$0xff]
      %v1565 = vld [vmem:[%s246 + $0xf8] sm:$0xff]
      %v1566 = vld [vmem:[%s246 + $0x100] sm:$0xff]
      %v1567 = vld [vmem:[%s246 + $0x108] sm:$0xff]
      %v1568 = vld [vmem:[%s246 + $0x110] sm:$0xff]
      %v1569 = vld [vmem:[%s246 + $0x118] sm:$0xff]
      %v1570 = vld [vmem:[%s246 + $0x120] sm:$0xff]
      %v1571 = vld [vmem:[%s246 + $0x128] sm:$0xff]
      %v1572 = vld [vmem:[%s246 + $0x130] sm:$0xff]
      %v1573 = vld [vmem:[%s246 + $0x138] sm:$0xff]
      %v1574 = vld [vmem:[%s246 + $0x140] sm:$0xff]
      %v1575 = vld [vmem:[%s246 + $0x148] sm:$0xff]
      %v1576 = vld [vmem:[%s246 + $0x150] sm:$0xff]
      %v1577 = vld [vmem:[%s246 + $0x158] sm:$0xff]
      %v1578 = vld [vmem:[%s246 + $0x160] sm:$0xff]
      %v1579 = vld [vmem:[%s246 + $0x168] sm:$0xff]
      %v1580 = vld [vmem:[%s246 + $0x170] sm:$0xff]
      %v1581 = vld [vmem:[%s246 + $0x178] sm:$0xff]
      %v1582 = vld [vmem:[%s246 + $0x180] sm:$0xff]
      %v1583 = vld [vmem:[%s246 + $0x188] sm:$0xf]
      %1624 = vrot.lane.b32.xlu0 %v1544, 24
      %v1625 = vpop.permute.xlu0 %1624
      %1626 = vrot.lane.b32.xlu0 %v1545, 24
      %v1627 = vpop.permute.xlu0 %1626
      %1628 = vrot.lane.b32.xlu0 %v1546, 24
      %v1629 = vpop.permute.xlu0 %1628
      %1630 = vrot.lane.b32.xlu0 %v1547, 24
      %v1631 = vpop.permute.xlu0 %1630
      %1632 = vrot.lane.b32.xlu0 %v1548, 24
      %v1633 = vpop.permute.xlu0 %1632
      %1634 = vrot.lane.b32.xlu0 %v1549, 24
      %v1635 = vpop.permute.xlu0 %1634
      %1636 = vrot.lane.b32.xlu0 %v1550, 24
      %v1637 = vpop.permute.xlu0 %1636
      %1638 = vrot.lane.b32.xlu0 %v1551, 24
      %v1639 = vpop.permute.xlu0 %1638
      %1640 = vrot.lane.b32.xlu0 %v1552, 24
      %v1641 = vpop.permute.xlu0 %1640
      %1642 = vrot.lane.b32.xlu0 %v1553, 24
      %v1643 = vpop.permute.xlu0 %1642
      %1644 = vrot.lane.b32.xlu0 %v1554, 24
      %v1645 = vpop.permute.xlu0 %1644
      %1646 = vrot.lane.b32.xlu0 %v1555, 24
      %v1647 = vpop.permute.xlu0 %1646
      %1648 = vrot.lane.b32.xlu0 %v1556, 24
      %v1649 = vpop.permute.xlu0 %1648
      %1650 = vrot.lane.b32.xlu0 %v1557, 24
      %v1651 = vpop.permute.xlu0 %1650
      %1652 = vrot.lane.b32.xlu0 %v1558, 24
      %v1653 = vpop.permute.xlu0 %1652
      %1654 = vrot.lane.b32.xlu0 %v1559, 24
      %v1655 = vpop.permute.xlu0 %1654
      %1656 = vrot.lane.b32.xlu0 %v1560, 24
      %v1657 = vpop.permute.xlu0 %1656
      %1658 = vrot.lane.b32.xlu0 %v1561, 24
      %v1659 = vpop.permute.xlu0 %1658
      %1660 = vrot.lane.b32.xlu0 %v1562, 24
      %v1661 = vpop.permute.xlu0 %1660
      %1662 = vrot.lane.b32.xlu0 %v1563, 24
      %v1663 = vpop.permute.xlu0 %1662
      %1664 = vrot.lane.b32.xlu0 %v1564, 24
      %v1665 = vpop.permute.xlu0 %1664
      %1666 = vrot.lane.b32.xlu0 %v1565, 24
      %v1667 = vpop.permute.xlu0 %1666
      %1668 = vrot.lane.b32.xlu0 %v1566, 24
      %v1669 = vpop.permute.xlu0 %1668
      %1670 = vrot.lane.b32.xlu0 %v1567, 24
      %v1671 = vpop.permute.xlu0 %1670
      %1672 = vrot.lane.b32.xlu0 %v1568, 24
      %v1673 = vpop.permute.xlu0 %1672
      %1674 = vrot.lane.b32.xlu0 %v1569, 24
      %v1675 = vpop.permute.xlu0 %1674
      %1676 = vrot.lane.b32.xlu0 %v1570, 24
      %v1677 = vpop.permute.xlu0 %1676
      %1678 = vrot.lane.b32.xlu0 %v1571, 24
      %v1679 = vpop.permute.xlu0 %1678
      %1680 = vrot.lane.b32.xlu0 %v1572, 24
      %v1681 = vpop.permute.xlu0 %1680
      %1682 = vrot.lane.b32.xlu0 %v1573, 24
      %v1683 = vpop.permute.xlu0 %1682
      %1684 = vrot.lane.b32.xlu0 %v1574, 24
      %v1685 = vpop.permute.xlu0 %1684
      %1686 = vrot.lane.b32.xlu0 %v1575, 24
      %v1687 = vpop.permute.xlu0 %1686
      %1688 = vrot.lane.b32.xlu0 %v1576, 24
      %v1689 = vpop.permute.xlu0 %1688
      %1690 = vrot.lane.b32.xlu0 %v1577, 24
      %v1691 = vpop.permute.xlu0 %1690
      %1692 = vrot.lane.b32.xlu0 %v1578, 24
      %v1693 = vpop.permute.xlu0 %1692
      %1694 = vrot.lane.b32.xlu0 %v1579, 24
      %v1695 = vpop.permute.xlu0 %1694
      %1696 = vrot.lane.b32.xlu0 %v1580, 24
      %v1697 = vpop.permute.xlu0 %1696
      %1698 = vrot.lane.b32.xlu0 %v1581, 24
      %v1699 = vpop.permute.xlu0 %1698
      %1700 = vrot.lane.b32.xlu0 %v1582, 24
      %v1701 = vpop.permute.xlu0 %1700
      %1702 = vrot.lane.b32.xlu0 %v1583, 24
      %v1703 = vpop.permute.xlu0 %1702
      %vm1744 = vcmask 228544
      %1745 = vst.msk [vmem:[#allocation2] sm:$0xff] %vm1744, %v1625
      %1746 = vst.msk [vmem:[#allocation2 + $0x8] sm:$0xff] %vm1744, %v1627
      %1747 = vst.msk [vmem:[#allocation2 + $0x10] sm:$0xff] %vm1744, %v1629
      %1748 = vst.msk [vmem:[#allocation2 + $0x18] sm:$0xff] %vm1744, %v1631
      %1749 = vst.msk [vmem:[#allocation2 + $0x20] sm:$0xff] %vm1744, %v1633
      %1750 = vst.msk [vmem:[#allocation2 + $0x28] sm:$0xff] %vm1744, %v1635
      %1751 = vst.msk [vmem:[#allocation2 + $0x30] sm:$0xff] %vm1744, %v1637
      %1752 = vst.msk [vmem:[#allocation2 + $0x38] sm:$0xff] %vm1744, %v1639
      %1753 = vst.msk [vmem:[#allocation2 + $0x40] sm:$0xff] %vm1744, %v1641
      %1754 = vst.msk [vmem:[#allocation2 + $0x48] sm:$0xff] %vm1744, %v1643
      %1755 = vst.msk [vmem:[#allocation2 + $0x50] sm:$0xff] %vm1744, %v1645
      %1756 = vst.msk [vmem:[#allocation2 + $0x58] sm:$0xff] %vm1744, %v1647
      %1757 = vst.msk [vmem:[#allocation2 + $0x60] sm:$0xff] %vm1744, %v1649
      %1758 = vst.msk [vmem:[#allocation2 + $0x68] sm:$0xff] %vm1744, %v1651
      %1759 = vst.msk [vmem:[#allocation2 + $0x70] sm:$0xff] %vm1744, %v1653
      %1760 = vst.msk [vmem:[#allocation2 + $0x78] sm:$0xff] %vm1744, %v1655
      %1761 = vst.msk [vmem:[#allocation2 + $0x80] sm:$0xff] %vm1744, %v1657
      %1762 = vst.msk [vmem:[#allocation2 + $0x88] sm:$0xff] %vm1744, %v1659
      %1763 = vst.msk [vmem:[#allocation2 + $0x90] sm:$0xff] %vm1744, %v1661
      %1764 = vst.msk [vmem:[#allocation2 + $0x98] sm:$0xff] %vm1744, %v1663
      %1765 = vst.msk [vmem:[#allocation2 + $0xa0] sm:$0xff] %vm1744, %v1665
      %1766 = vst.msk [vmem:[#allocation2 + $0xa8] sm:$0xff] %vm1744, %v1667
      %1767 = vst.msk [vmem:[#allocation2 + $0xb0] sm:$0xff] %vm1744, %v1669
      %1768 = vst.msk [vmem:[#allocation2 + $0xb8] sm:$0xff] %vm1744, %v1671
      %1769 = vst.msk [vmem:[#allocation2 + $0xc0] sm:$0xff] %vm1744, %v1673
      %1770 = vst.msk [vmem:[#allocation2 + $0xc8] sm:$0xff] %vm1744, %v1675
      %1771 = vst.msk [vmem:[#allocation2 + $0xd0] sm:$0xff] %vm1744, %v1677
      %1772 = vst.msk [vmem:[#allocation2 + $0xd8] sm:$0xff] %vm1744, %v1679
      %1773 = vst.msk [vmem:[#allocation2 + $0xe0] sm:$0xff] %vm1744, %v1681
      %1774 = vst.msk [vmem:[#allocation2 + $0xe8] sm:$0xff] %vm1744, %v1683
      %1775 = vst.msk [vmem:[#allocation2 + $0xf0] sm:$0xff] %vm1744, %v1685
      %1776 = vst.msk [vmem:[#allocation2 + $0xf8] sm:$0xff] %vm1744, %v1687
      %1777 = vst.msk [vmem:[#allocation2 + $0x100] sm:$0xff] %vm1744, %v1689
      %1778 = vst.msk [vmem:[#allocation2 + $0x108] sm:$0xff] %vm1744, %v1691
      %1779 = vst.msk [vmem:[#allocation2 + $0x110] sm:$0xff] %vm1744, %v1693
      %1780 = vst.msk [vmem:[#allocation2 + $0x118] sm:$0xff] %vm1744, %v1695
      %1781 = vst.msk [vmem:[#allocation2 + $0x120] sm:$0xff] %vm1744, %v1697
      %1782 = vst.msk [vmem:[#allocation2 + $0x128] sm:$0xff] %vm1744, %v1699
      %1783 = vst.msk [vmem:[#allocation2 + $0x130] sm:$0xff] %vm1744, %v1701
      %vm1784 = vcmask 224448
      %1785 = vst.msk [vmem:[#allocation2 + $0x138] sm:$0xf] %vm1784, %v1703
      %v1786 = vld [vmem:[%s246 + $0x52] sm:$0xff]
      %v1787 = vld [vmem:[%s246 + $0x5a] sm:$0xff]
      %v1788 = vld [vmem:[%s246 + $0x62] sm:$0xff]
      %v1789 = vld [vmem:[%s246 + $0x6a] sm:$0xff]
      %v1790 = vld [vmem:[%s246 + $0x72] sm:$0xff]
      %v1791 = vld [vmem:[%s246 + $0x7a] sm:$0xff]
      %v1792 = vld [vmem:[%s246 + $0x82] sm:$0xff]
      %v1793 = vld [vmem:[%s246 + $0x8a] sm:$0xff]
      %v1794 = vld [vmem:[%s246 + $0x92] sm:$0xff]
      %v1795 = vld [vmem:[%s246 + $0x9a] sm:$0xff]
      %v1796 = vld [vmem:[%s246 + $0xa2] sm:$0xff]
      %v1797 = vld [vmem:[%s246 + $0xaa] sm:$0xff]
      %v1798 = vld [vmem:[%s246 + $0xb2] sm:$0xff]
      %v1799 = vld [vmem:[%s246 + $0xba] sm:$0xff]
      %v1800 = vld [vmem:[%s246 + $0xc2] sm:$0xff]
      %v1801 = vld [vmem:[%s246 + $0xca] sm:$0xff]
      %v1802 = vld [vmem:[%s246 + $0xd2] sm:$0xff]
      %v1803 = vld [vmem:[%s246 + $0xda] sm:$0xff]
      %v1804 = vld [vmem:[%s246 + $0xe2] sm:$0xff]
      %v1805 = vld [vmem:[%s246 + $0xea] sm:$0xff]
      %v1806 = vld [vmem:[%s246 + $0xf2] sm:$0xff]
      %v1807 = vld [vmem:[%s246 + $0xfa] sm:$0xff]
      %v1808 = vld [vmem:[%s246 + $0x102] sm:$0xff]
      %v1809 = vld [vmem:[%s246 + $0x10a] sm:$0xff]
      %v1810 = vld [vmem:[%s246 + $0x112] sm:$0xff]
      %v1811 = vld [vmem:[%s246 + $0x11a] sm:$0xff]
      %v1812 = vld [vmem:[%s246 + $0x122] sm:$0xff]
      %v1813 = vld [vmem:[%s246 + $0x12a] sm:$0xff]
      %v1814 = vld [vmem:[%s246 + $0x132] sm:$0xff]
      %v1815 = vld [vmem:[%s246 + $0x13a] sm:$0xff]
      %v1816 = vld [vmem:[%s246 + $0x142] sm:$0xff]
      %v1817 = vld [vmem:[%s246 + $0x14a] sm:$0xff]
      %v1818 = vld [vmem:[%s246 + $0x152] sm:$0xff]
      %v1819 = vld [vmem:[%s246 + $0x15a] sm:$0xff]
      %v1820 = vld [vmem:[%s246 + $0x162] sm:$0xff]
      %v1821 = vld [vmem:[%s246 + $0x16a] sm:$0xff]
      %v1822 = vld [vmem:[%s246 + $0x172] sm:$0xff]
      %v1823 = vld [vmem:[%s246 + $0x17a] sm:$0xff]
      %v1824 = vld [vmem:[%s246 + $0x182] sm:$0xff]
      %v1825 = vld [vmem:[%s246 + $0x18a] sm:$0xf]
      %1866 = vrot.lane.b32.xlu0 %v1786, 28
      %v1867 = vpop.permute.xlu0 %1866
      %1868 = vrot.lane.b32.xlu0 %v1787, 28
      %v1869 = vpop.permute.xlu0 %1868
      %1870 = vrot.lane.b32.xlu0 %v1788, 28
      %v1871 = vpop.permute.xlu0 %1870
      %1872 = vrot.lane.b32.xlu0 %v1789, 28
      %v1873 = vpop.permute.xlu0 %1872
      %1874 = vrot.lane.b32.xlu0 %v1790, 28
      %v1875 = vpop.permute.xlu0 %1874
      %1876 = vrot.lane.b32.xlu0 %v1791, 28
      %v1877 = vpop.permute.xlu0 %1876
      %1878 = vrot.lane.b32.xlu0 %v1792, 28
      %v1879 = vpop.permute.xlu0 %1878
      %1880 = vrot.lane.b32.xlu0 %v1793, 28
      %v1881 = vpop.permute.xlu0 %1880
      %1882 = vrot.lane.b32.xlu0 %v1794, 28
      %v1883 = vpop.permute.xlu0 %1882
      %1884 = vrot.lane.b32.xlu0 %v1795, 28
      %v1885 = vpop.permute.xlu0 %1884
      %1886 = vrot.lane.b32.xlu0 %v1796, 28
      %v1887 = vpop.permute.xlu0 %1886
      %1888 = vrot.lane.b32.xlu0 %v1797, 28
      %v1889 = vpop.permute.xlu0 %1888
      %1890 = vrot.lane.b32.xlu0 %v1798, 28
      %v1891 = vpop.permute.xlu0 %1890
      %1892 = vrot.lane.b32.xlu0 %v1799, 28
      %v1893 = vpop.permute.xlu0 %1892
      %1894 = vrot.lane.b32.xlu0 %v1800, 28
      %v1895 = vpop.permute.xlu0 %1894
      %1896 = vrot.lane.b32.xlu0 %v1801, 28
      %v1897 = vpop.permute.xlu0 %1896
      %1898 = vrot.lane.b32.xlu0 %v1802, 28
      %v1899 = vpop.permute.xlu0 %1898
      %1900 = vrot.lane.b32.xlu0 %v1803, 28
      %v1901 = vpop.permute.xlu0 %1900
      %1902 = vrot.lane.b32.xlu0 %v1804, 28
      %v1903 = vpop.permute.xlu0 %1902
      %1904 = vrot.lane.b32.xlu0 %v1805, 28
      %v1905 = vpop.permute.xlu0 %1904
      %1906 = vrot.lane.b32.xlu0 %v1806, 28
      %v1907 = vpop.permute.xlu0 %1906
      %1908 = vrot.lane.b32.xlu0 %v1807, 28
      %v1909 = vpop.permute.xlu0 %1908
      %1910 = vrot.lane.b32.xlu0 %v1808, 28
      %v1911 = vpop.permute.xlu0 %1910
      %1912 = vrot.lane.b32.xlu0 %v1809, 28
      %v1913 = vpop.permute.xlu0 %1912
      %1914 = vrot.lane.b32.xlu0 %v1810, 28
      %v1915 = vpop.permute.xlu0 %1914
      %1916 = vrot.lane.b32.xlu0 %v1811, 28
      %v1917 = vpop.permute.xlu0 %1916
      %1918 = vrot.lane.b32.xlu0 %v1812, 28
      %v1919 = vpop.permute.xlu0 %1918
      %1920 = vrot.lane.b32.xlu0 %v1813, 28
      %v1921 = vpop.permute.xlu0 %1920
      %1922 = vrot.lane.b32.xlu0 %v1814, 28
      %v1923 = vpop.permute.xlu0 %1922
      %1924 = vrot.lane.b32.xlu0 %v1815, 28
      %v1925 = vpop.permute.xlu0 %1924
      %1926 = vrot.lane.b32.xlu0 %v1816, 28
      %v1927 = vpop.permute.xlu0 %1926
      %1928 = vrot.lane.b32.xlu0 %v1817, 28
      %v1929 = vpop.permute.xlu0 %1928
      %1930 = vrot.lane.b32.xlu0 %v1818, 28
      %v1931 = vpop.permute.xlu0 %1930
      %1932 = vrot.lane.b32.xlu0 %v1819, 28
      %v1933 = vpop.permute.xlu0 %1932
      %1934 = vrot.lane.b32.xlu0 %v1820, 28
      %v1935 = vpop.permute.xlu0 %1934
      %1936 = vrot.lane.b32.xlu0 %v1821, 28
      %v1937 = vpop.permute.xlu0 %1936
      %1938 = vrot.lane.b32.xlu0 %v1822, 28
      %v1939 = vpop.permute.xlu0 %1938
      %1940 = vrot.lane.b32.xlu0 %v1823, 28
      %v1941 = vpop.permute.xlu0 %1940
      %1942 = vrot.lane.b32.xlu0 %v1824, 28
      %v1943 = vpop.permute.xlu0 %1942
      %1944 = vrot.lane.b32.xlu0 %v1825, 28
      %v1945 = vpop.permute.xlu0 %1944
      %vm1986 = vcmask 261344
      %1987 = vst.msk [vmem:[#allocation2] sm:$0xff] %vm1986, %v1867
      %1988 = vst.msk [vmem:[#allocation2 + $0x8] sm:$0xff] %vm1986, %v1869
      %1989 = vst.msk [vmem:[#allocation2 + $0x10] sm:$0xff] %vm1986, %v1871
      %1990 = vst.msk [vmem:[#allocation2 + $0x18] sm:$0xff] %vm1986, %v1873
      %1991 = vst.msk [vmem:[#allocation2 + $0x20] sm:$0xff] %vm1986, %v1875
      %1992 = vst.msk [vmem:[#allocation2 + $0x28] sm:$0xff] %vm1986, %v1877
      %1993 = vst.msk [vmem:[#allocation2 + $0x30] sm:$0xff] %vm1986, %v1879
      %1994 = vst.msk [vmem:[#allocation2 + $0x38] sm:$0xff] %vm1986, %v1881
      %1995 = vst.msk [vmem:[#allocation2 + $0x40] sm:$0xff] %vm1986, %v1883
      %1996 = vst.msk [vmem:[#allocation2 + $0x48] sm:$0xff] %vm1986, %v1885
      %1997 = vst.msk [vmem:[#allocation2 + $0x50] sm:$0xff] %vm1986, %v1887
      %1998 = vst.msk [vmem:[#allocation2 + $0x58] sm:$0xff] %vm1986, %v1889
      %1999 = vst.msk [vmem:[#allocation2 + $0x60] sm:$0xff] %vm1986, %v1891
      %2000 = vst.msk [vmem:[#allocation2 + $0x68] sm:$0xff] %vm1986, %v1893
      %2001 = vst.msk [vmem:[#allocation2 + $0x70] sm:$0xff] %vm1986, %v1895
      %2002 = vst.msk [vmem:[#allocation2 + $0x78] sm:$0xff] %vm1986, %v1897
      %2003 = vst.msk [vmem:[#allocation2 + $0x80] sm:$0xff] %vm1986, %v1899
      %2004 = vst.msk [vmem:[#allocation2 + $0x88] sm:$0xff] %vm1986, %v1901
      %2005 = vst.msk [vmem:[#allocation2 + $0x90] sm:$0xff] %vm1986, %v1903
      %2006 = vst.msk [vmem:[#allocation2 + $0x98] sm:$0xff] %vm1986, %v1905
      %2007 = vst.msk [vmem:[#allocation2 + $0xa0] sm:$0xff] %vm1986, %v1907
      %2008 = vst.msk [vmem:[#allocation2 + $0xa8] sm:$0xff] %vm1986, %v1909
      %2009 = vst.msk [vmem:[#allocation2 + $0xb0] sm:$0xff] %vm1986, %v1911
      %2010 = vst.msk [vmem:[#allocation2 + $0xb8] sm:$0xff] %vm1986, %v1913
      %2011 = vst.msk [vmem:[#allocation2 + $0xc0] sm:$0xff] %vm1986, %v1915
      %2012 = vst.msk [vmem:[#allocation2 + $0xc8] sm:$0xff] %vm1986, %v1917
      %2013 = vst.msk [vmem:[#allocation2 + $0xd0] sm:$0xff] %vm1986, %v1919
      %2014 = vst.msk [vmem:[#allocation2 + $0xd8] sm:$0xff] %vm1986, %v1921
      %2015 = vst.msk [vmem:[#allocation2 + $0xe0] sm:$0xff] %vm1986, %v1923
      %2016 = vst.msk [vmem:[#allocation2 + $0xe8] sm:$0xff] %vm1986, %v1925
      %2017 = vst.msk [vmem:[#allocation2 + $0xf0] sm:$0xff] %vm1986, %v1927
      %2018 = vst.msk [vmem:[#allocation2 + $0xf8] sm:$0xff] %vm1986, %v1929
      %2019 = vst.msk [vmem:[#allocation2 + $0x100] sm:$0xff] %vm1986, %v1931
      %2020 = vst.msk [vmem:[#allocation2 + $0x108] sm:$0xff] %vm1986, %v1933
      %2021 = vst.msk [vmem:[#allocation2 + $0x110] sm:$0xff] %vm1986, %v1935
      %2022 = vst.msk [vmem:[#allocation2 + $0x118] sm:$0xff] %vm1986, %v1937
      %2023 = vst.msk [vmem:[#allocation2 + $0x120] sm:$0xff] %vm1986, %v1939
      %2024 = vst.msk [vmem:[#allocation2 + $0x128] sm:$0xff] %vm1986, %v1941
      %2025 = vst.msk [vmem:[#allocation2 + $0x130] sm:$0xff] %vm1986, %v1943
      %vm2026 = vcmask 257248
      %2027 = vst.msk [vmem:[#allocation2 + $0x138] sm:$0xf] %vm2026, %v1945
      %v2028 = vld [vmem:[%s246 + $0x54] sm:$0xff]
      %v2029 = vld [vmem:[%s246 + $0x5c] sm:$0xff]
      %v2030 = vld [vmem:[%s246 + $0x64] sm:$0xff]
      %v2031 = vld [vmem:[%s246 + $0x6c] sm:$0xff]
      %v2032 = vld [vmem:[%s246 + $0x74] sm:$0xff]
      %v2033 = vld [vmem:[%s246 + $0x7c] sm:$0xff]
      %v2034 = vld [vmem:[%s246 + $0x84] sm:$0xff]
      %v2035 = vld [vmem:[%s246 + $0x8c] sm:$0xff]
      %v2036 = vld [vmem:[%s246 + $0x94] sm:$0xff]
      %v2037 = vld [vmem:[%s246 + $0x9c] sm:$0xff]
      %v2038 = vld [vmem:[%s246 + $0xa4] sm:$0xff]
      %v2039 = vld [vmem:[%s246 + $0xac] sm:$0xff]
      %v2040 = vld [vmem:[%s246 + $0xb4] sm:$0xff]
      %v2041 = vld [vmem:[%s246 + $0xbc] sm:$0xff]
      %v2042 = vld [vmem:[%s246 + $0xc4] sm:$0xff]
      %v2043 = vld [vmem:[%s246 + $0xcc] sm:$0xff]
      %v2044 = vld [vmem:[%s246 + $0xd4] sm:$0xff]
      %v2045 = vld [vmem:[%s246 + $0xdc] sm:$0xff]
      %v2046 = vld [vmem:[%s246 + $0xe4] sm:$0xff]
      %v2047 = vld [vmem:[%s246 + $0xec] sm:$0xff]
      %v2048 = vld [vmem:[%s246 + $0xf4] sm:$0xff]
      %v2049 = vld [vmem:[%s246 + $0xfc] sm:$0xff]
      %v2050 = vld [vmem:[%s246 + $0x104] sm:$0xff]
      %v2051 = vld [vmem:[%s246 + $0x10c] sm:$0xff]
      %v2052 = vld [vmem:[%s246 + $0x114] sm:$0xff]
      %v2053 = vld [vmem:[%s246 + $0x11c] sm:$0xff]
      %v2054 = vld [vmem:[%s246 + $0x124] sm:$0xff]
      %v2055 = vld [vmem:[%s246 + $0x12c] sm:$0xff]
      %v2056 = vld [vmem:[%s246 + $0x134] sm:$0xff]
      %v2057 = vld [vmem:[%s246 + $0x13c] sm:$0xff]
      %v2058 = vld [vmem:[%s246 + $0x144] sm:$0xff]
      %v2059 = vld [vmem:[%s246 + $0x14c] sm:$0xff]
      %v2060 = vld [vmem:[%s246 + $0x154] sm:$0xff]
      %v2061 = vld [vmem:[%s246 + $0x15c] sm:$0xff]
      %v2062 = vld [vmem:[%s246 + $0x164] sm:$0xff]
      %v2063 = vld [vmem:[%s246 + $0x16c] sm:$0xff]
      %v2064 = vld [vmem:[%s246 + $0x174] sm:$0xff]
      %v2065 = vld [vmem:[%s246 + $0x17c] sm:$0xff]
      %v2066 = vld [vmem:[%s246 + $0x184] sm:$0xff]
      %v2067 = vld [vmem:[%s246 + $0x18c] sm:$0xf]
      %2108 = vrot.lane.b32.xlu0 %v2028, 32
      %v2109 = vpop.permute.xlu0 %2108
      %2110 = vrot.lane.b32.xlu0 %v2029, 32
      %v2111 = vpop.permute.xlu0 %2110
      %2112 = vrot.lane.b32.xlu0 %v2030, 32
      %v2113 = vpop.permute.xlu0 %2112
      %2114 = vrot.lane.b32.xlu0 %v2031, 32
      %v2115 = vpop.permute.xlu0 %2114
      %2116 = vrot.lane.b32.xlu0 %v2032, 32
      %v2117 = vpop.permute.xlu0 %2116
      %2118 = vrot.lane.b32.xlu0 %v2033, 32
      %v2119 = vpop.permute.xlu0 %2118
      %2120 = vrot.lane.b32.xlu0 %v2034, 32
      %v2121 = vpop.permute.xlu0 %2120
      %2122 = vrot.lane.b32.xlu0 %v2035, 32
      %v2123 = vpop.permute.xlu0 %2122
      %2124 = vrot.lane.b32.xlu0 %v2036, 32
      %v2125 = vpop.permute.xlu0 %2124
      %2126 = vrot.lane.b32.xlu0 %v2037, 32
      %v2127 = vpop.permute.xlu0 %2126
      %2128 = vrot.lane.b32.xlu0 %v2038, 32
      %v2129 = vpop.permute.xlu0 %2128
      %2130 = vrot.lane.b32.xlu0 %v2039, 32
      %v2131 = vpop.permute.xlu0 %2130
      %2132 = vrot.lane.b32.xlu0 %v2040, 32
      %v2133 = vpop.permute.xlu0 %2132
      %2134 = vrot.lane.b32.xlu0 %v2041, 32
      %v2135 = vpop.permute.xlu0 %2134
      %2136 = vrot.lane.b32.xlu0 %v2042, 32
      %v2137 = vpop.permute.xlu0 %2136
      %2138 = vrot.lane.b32.xlu0 %v2043, 32
      %v2139 = vpop.permute.xlu0 %2138
      %2140 = vrot.lane.b32.xlu0 %v2044, 32
      %v2141 = vpop.permute.xlu0 %2140
      %2142 = vrot.lane.b32.xlu0 %v2045, 32
      %v2143 = vpop.permute.xlu0 %2142
      %2144 = vrot.lane.b32.xlu0 %v2046, 32
      %v2145 = vpop.permute.xlu0 %2144
      %2146 = vrot.lane.b32.xlu0 %v2047, 32
      %v2147 = vpop.permute.xlu0 %2146
      %2148 = vrot.lane.b32.xlu0 %v2048, 32
      %v2149 = vpop.permute.xlu0 %2148
      %2150 = vrot.lane.b32.xlu0 %v2049, 32
      %v2151 = vpop.permute.xlu0 %2150
      %2152 = vrot.lane.b32.xlu0 %v2050, 32
      %v2153 = vpop.permute.xlu0 %2152
      %2154 = vrot.lane.b32.xlu0 %v2051, 32
      %v2155 = vpop.permute.xlu0 %2154
      %2156 = vrot.lane.b32.xlu0 %v2052, 32
      %v2157 = vpop.permute.xlu0 %2156
      %2158 = vrot.lane.b32.xlu0 %v2053, 32
      %v2159 = vpop.permute.xlu0 %2158
      %2160 = vrot.lane.b32.xlu0 %v2054, 32
      %v2161 = vpop.permute.xlu0 %2160
      %2162 = vrot.lane.b32.xlu0 %v2055, 32
      %v2163 = vpop.permute.xlu0 %2162
      %2164 = vrot.lane.b32.xlu0 %v2056, 32
      %v2165 = vpop.permute.xlu0 %2164
      %2166 = vrot.lane.b32.xlu0 %v2057, 32
      %v2167 = vpop.permute.xlu0 %2166
      %2168 = vrot.lane.b32.xlu0 %v2058, 32
      %v2169 = vpop.permute.xlu0 %2168
      %2170 = vrot.lane.b32.xlu0 %v2059, 32
      %v2171 = vpop.permute.xlu0 %2170
      %2172 = vrot.lane.b32.xlu0 %v2060, 32
      %v2173 = vpop.permute.xlu0 %2172
      %2174 = vrot.lane.b32.xlu0 %v2061, 32
      %v2175 = vpop.permute.xlu0 %2174
      %2176 = vrot.lane.b32.xlu0 %v2062, 32
      %v2177 = vpop.permute.xlu0 %2176
      %2178 = vrot.lane.b32.xlu0 %v2063, 32
      %v2179 = vpop.permute.xlu0 %2178
      %2180 = vrot.lane.b32.xlu0 %v2064, 32
      %v2181 = vpop.permute.xlu0 %2180
      %2182 = vrot.lane.b32.xlu0 %v2065, 32
      %v2183 = vpop.permute.xlu0 %2182
      %2184 = vrot.lane.b32.xlu0 %v2066, 32
      %v2185 = vpop.permute.xlu0 %2184
      %2186 = vrot.lane.b32.xlu0 %v2067, 32
      %v2187 = vpop.permute.xlu0 %2186
      %vm2228 = vcmask 294144
      %2229 = vst.msk [vmem:[#allocation2] sm:$0xff] %vm2228, %v2109
      %2230 = vst.msk [vmem:[#allocation2 + $0x8] sm:$0xff] %vm2228, %v2111
      %2231 = vst.msk [vmem:[#allocation2 + $0x10] sm:$0xff] %vm2228, %v2113
      %2232 = vst.msk [vmem:[#allocation2 + $0x18] sm:$0xff] %vm2228, %v2115
      %2233 = vst.msk [vmem:[#allocation2 + $0x20] sm:$0xff] %vm2228, %v2117
      %2234 = vst.msk [vmem:[#allocation2 + $0x28] sm:$0xff] %vm2228, %v2119
      %2235 = vst.msk [vmem:[#allocation2 + $0x30] sm:$0xff] %vm2228, %v2121
      %2236 = vst.msk [vmem:[#allocation2 + $0x38] sm:$0xff] %vm2228, %v2123
      %2237 = vst.msk [vmem:[#allocation2 + $0x40] sm:$0xff] %vm2228, %v2125
      %2238 = vst.msk [vmem:[#allocation2 + $0x48] sm:$0xff] %vm2228, %v2127
      %2239 = vst.msk [vmem:[#allocation2 + $0x50] sm:$0xff] %vm2228, %v2129
      %2240 = vst.msk [vmem:[#allocation2 + $0x58] sm:$0xff] %vm2228, %v2131
      %2241 = vst.msk [vmem:[#allocation2 + $0x60] sm:$0xff] %vm2228, %v2133
      %2242 = vst.msk [vmem:[#allocation2 + $0x68] sm:$0xff] %vm2228, %v2135
      %2243 = vst.msk [vmem:[#allocation2 + $0x70] sm:$0xff] %vm2228, %v2137
      %2244 = vst.msk [vmem:[#allocation2 + $0x78] sm:$0xff] %vm2228, %v2139
      %2245 = vst.msk [vmem:[#allocation2 + $0x80] sm:$0xff] %vm2228, %v2141
      %2246 = vst.msk [vmem:[#allocation2 + $0x88] sm:$0xff] %vm2228, %v2143
      %2247 = vst.msk [vmem:[#allocation2 + $0x90] sm:$0xff] %vm2228, %v2145
      %2248 = vst.msk [vmem:[#allocation2 + $0x98] sm:$0xff] %vm2228, %v2147
      %2249 = vst.msk [vmem:[#allocation2 + $0xa0] sm:$0xff] %vm2228, %v2149
      %2250 = vst.msk [vmem:[#allocation2 + $0xa8] sm:$0xff] %vm2228, %v2151
      %2251 = vst.msk [vmem:[#allocation2 + $0xb0] sm:$0xff] %vm2228, %v2153
      %2252 = vst.msk [vmem:[#allocation2 + $0xb8] sm:$0xff] %vm2228, %v2155
      %2253 = vst.msk [vmem:[#allocation2 + $0xc0] sm:$0xff] %vm2228, %v2157
      %2254 = vst.msk [vmem:[#allocation2 + $0xc8] sm:$0xff] %vm2228, %v2159
      %2255 = vst.msk [vmem:[#allocation2 + $0xd0] sm:$0xff] %vm2228, %v2161
      %2256 = vst.msk [vmem:[#allocation2 + $0xd8] sm:$0xff] %vm2228, %v2163
      %2257 = vst.msk [vmem:[#allocation2 + $0xe0] sm:$0xff] %vm2228, %v2165
      %2258 = vst.msk [vmem:[#allocation2 + $0xe8] sm:$0xff] %vm2228, %v2167
      %2259 = vst.msk [vmem:[#allocation2 + $0xf0] sm:$0xff] %vm2228, %v2169
      %2260 = vst.msk [vmem:[#allocation2 + $0xf8] sm:$0xff] %vm2228, %v2171
      %2261 = vst.msk [vmem:[#allocation2 + $0x100] sm:$0xff] %vm2228, %v2173
      %2262 = vst.msk [vmem:[#allocation2 + $0x108] sm:$0xff] %vm2228, %v2175
      %2263 = vst.msk [vmem:[#allocation2 + $0x110] sm:$0xff] %vm2228, %v2177
      %2264 = vst.msk [vmem:[#allocation2 + $0x118] sm:$0xff] %vm2228, %v2179
      %2265 = vst.msk [vmem:[#allocation2 + $0x120] sm:$0xff] %vm2228, %v2181
      %2266 = vst.msk [vmem:[#allocation2 + $0x128] sm:$0xff] %vm2228, %v2183
      %2267 = vst.msk [vmem:[#allocation2 + $0x130] sm:$0xff] %vm2228, %v2185
      %vm2268 = vcmask 290048
      %2269 = vst.msk [vmem:[#allocation2 + $0x138] sm:$0xf] %vm2268, %v2187
      %v2270 = vld [vmem:[#allocation2] sm:$0xff]
      %v2271 = vld [vmem:[#allocation2 + $0x8] sm:$0xff]
      %v2272 = vld [vmem:[#allocation2 + $0x10] sm:$0xff]
      %v2273 = vld [vmem:[#allocation2 + $0x18] sm:$0xff]
      %v2274 = vld [vmem:[#allocation2 + $0x20] sm:$0xff]
      %v2275 = vld [vmem:[#allocation2 + $0x28] sm:$0xff]
      %v2276 = vld [vmem:[#allocation2 + $0x30] sm:$0xff]
      %v2277 = vld [vmem:[#allocation2 + $0x38] sm:$0xff]
      %v2278 = vld [vmem:[#allocation2 + $0x40] sm:$0xff]
      %v2279 = vld [vmem:[#allocation2 + $0x48] sm:$0xff]
      %v2280 = vld [vmem:[#allocation2 + $0x50] sm:$0xff]
      %v2281 = vld [vmem:[#allocation2 + $0x58] sm:$0xff]
      %v2282 = vld [vmem:[#allocation2 + $0x60] sm:$0xff]
      %v2283 = vld [vmem:[#allocation2 + $0x68] sm:$0xff]
      %v2284 = vld [vmem:[#allocation2 + $0x70] sm:$0xff]
      %v2285 = vld [vmem:[#allocation2 + $0x78] sm:$0xff]
      %v2286 = vld [vmem:[#allocation2 + $0x80] sm:$0xff]
      %v2287 = vld [vmem:[#allocation2 + $0x88] sm:$0xff]
      %v2288 = vld [vmem:[#allocation2 + $0x90] sm:$0xff]
      %v2289 = vld [vmem:[#allocation2 + $0x98] sm:$0xff]
      %v2290 = vld [vmem:[#allocation2 + $0xa0] sm:$0xff]
      %v2291 = vld [vmem:[#allocation2 + $0xa8] sm:$0xff]
      %v2292 = vld [vmem:[#allocation2 + $0xb0] sm:$0xff]
      %v2293 = vld [vmem:[#allocation2 + $0xb8] sm:$0xff]
      %v2294 = vld [vmem:[#allocation2 + $0xc0] sm:$0xff]
      %v2295 = vld [vmem:[#allocation2 + $0xc8] sm:$0xff]
      %v2296 = vld [vmem:[#allocation2 + $0xd0] sm:$0xff]
      %v2297 = vld [vmem:[#allocation2 + $0xd8] sm:$0xff]
      %v2298 = vld [vmem:[#allocation2 + $0xe0] sm:$0xff]
      %v2299 = vld [vmem:[#allocation2 + $0xe8] sm:$0xff]
      %v2300 = vld [vmem:[#allocation2 + $0xf0] sm:$0xff]
      %v2301 = vld [vmem:[#allocation2 + $0xf8] sm:$0xff]
      %v2302 = vld [vmem:[#allocation2 + $0x100] sm:$0xff]
      %v2303 = vld [vmem:[#allocation2 + $0x108] sm:$0xff]
      %v2304 = vld [vmem:[#allocation2 + $0x110] sm:$0xff]
      %v2305 = vld [vmem:[#allocation2 + $0x118] sm:$0xff]
      %v2306 = vld [vmem:[#allocation2 + $0x120] sm:$0xff]
      %v2307 = vld [vmem:[#allocation2 + $0x128] sm:$0xff]
      %v2308 = vld [vmem:[#allocation2 + $0x130] sm:$0xff]
      %v2309 = vld [vmem:[#allocation2 + $0x138] sm:$0xf]
      %v2310 = vld [vmem:[%s2] sm:$0xff]
      %v2311 = vld [vmem:[%s2 + $0x8] sm:$0xff]
      %v2312 = vld [vmem:[%s2 + $0x10] sm:$0xff]
      %v2313 = vld [vmem:[%s2 + $0x18] sm:$0xff]
      %v2314 = vld [vmem:[%s2 + $0x20] sm:$0xf]
      %v2315 = vld [vmem:[%s3] sm:$0x1]
      %v2317 = vlaneseq
      %v2318 = vshrl.u32 %v2317, 7
      %v2319 = vsub.s32 0, %v2318
      %v2320 = vrot.slane %v2315, %v2319
      %vm2322 = vcmask 293888
      %v2324 = vsel %vm2322, %v2270, 0
      %v2327 = vsel %vm2322, %v2271, 0
      %v2330 = vsel %vm2322, %v2272, 0
      %v2333 = vsel %vm2322, %v2273, 0
      %v2336 = vsel %vm2322, %v2274, 0
      %v2339 = vsel %vm2322, %v2275, 0
      %v2342 = vsel %vm2322, %v2276, 0
      %v2345 = vsel %vm2322, %v2277, 0
      %v2348 = vsel %vm2322, %v2278, 0
      %v2351 = vsel %vm2322, %v2279, 0
      %v2354 = vsel %vm2322, %v2280, 0
      %v2357 = vsel %vm2322, %v2281, 0
      %v2360 = vsel %vm2322, %v2282, 0
      %v2363 = vsel %vm2322, %v2283, 0
      %v2366 = vsel %vm2322, %v2284, 0
      %v2369 = vsel %vm2322, %v2285, 0
      %v2372 = vsel %vm2322, %v2286, 0
      %v2375 = vsel %vm2322, %v2287, 0
      %v2378 = vsel %vm2322, %v2288, 0
      %v2381 = vsel %vm2322, %v2289, 0
      %v2384 = vsel %vm2322, %v2290, 0
      %v2387 = vsel %vm2322, %v2291, 0
      %v2390 = vsel %vm2322, %v2292, 0
      %v2393 = vsel %vm2322, %v2293, 0
      %v2396 = vsel %vm2322, %v2294, 0
      %v2399 = vsel %vm2322, %v2295, 0
      %v2402 = vsel %vm2322, %v2296, 0
      %v2405 = vsel %vm2322, %v2297, 0
      %v2408 = vsel %vm2322, %v2298, 0
      %v2411 = vsel %vm2322, %v2299, 0
      %v2414 = vsel %vm2322, %v2300, 0
      %v2417 = vsel %vm2322, %v2301, 0
      %v2420 = vsel %vm2322, %v2302, 0
      %v2423 = vsel %vm2322, %v2303, 0
      %v2426 = vsel %vm2322, %v2304, 0
      %v2429 = vsel %vm2322, %v2305, 0
      %v2432 = vsel %vm2322, %v2306, 0
      %v2435 = vsel %vm2322, %v2307, 0
      %v2438 = vsel %vm2322, %v2308, 0
      %v2441 = vsel %vm2322, %v2309, 0
      %vm2443 = vcmask 1043456
      %v2445 = vsel %vm2443, %v2314, 0
      %2447 = vmatprep.subr.mxu0 0.0
      %2448 = vmatpush1.msra.mxu0 0.0
      %2449 = vmatprep.subr.mxu0 0.0
      %2450 = vmatpush1.msra.mxu0 0.0
      %2451 = vmatprep.subr.mxu0 0.0
      %2452 = vmatpush1.msra.mxu0 0.0
      %2453 = vmatprep.subr.mxu0 0.0
      %2454 = vmatpush1.msra.mxu0 0.0
      %2455 = vmatprep.subr.mxu0 0.0
      %2456 = vmatpush1.msra.mxu0 0.0
      %2457 = vmatprep.subr.mxu0 0.0
      %2458 = vmatpush1.msra.mxu0 0.0
      %2459 = vmatprep.subr.mxu0 0.0
      %2460 = vmatpush1.msra.mxu0 0.0
      %2461 = vmatprep.subr.mxu0 0.0
      %2462 = vmatpush1.msra.mxu0 0.0
      %2463 = vmatprep.subr.mxu0 0.0
      %2464 = vmatpush1.msra.mxu0 0.0
      %2465 = vmatprep.subr.mxu0 0.0
      %2466 = vmatpush1.msra.mxu0 0.0
      %2467 = vmatprep.subr.mxu0 0.0
      %2468 = vmatpush1.msra.mxu0 0.0
      %2469 = vmatprep.subr.mxu0 0.0
      %2470 = vmatpush1.msra.mxu0 %v2445
      %2471 = vmatprep.subr.mxu0 0.0
      %2472 = vmatpush1.msra.mxu0 %v2313
      %2473 = vmatprep.subr.mxu0 0.0
      %2474 = vmatpush1.msra.mxu0 %v2312
      %2475 = vmatprep.subr.mxu0 0.0
      %2476 = vmatpush1.msra.mxu0 %v2311
      %2477 = vmatprep.subr.mxu0 0.0
      %2478 = vmatpush1.msra.mxu0 %v2310
      %2479 = vmatprep.subr.mxu0 0.0
      %2480 = vmatpush2.msra.mxu0 0.0
      %2481 = vmatprep.subr.mxu0 0.0
      %2482 = vmatpush2.msra.mxu0 0.0
      %2483 = vmatprep.subr.mxu0 0.0
      %2484 = vmatpush2.msra.mxu0 0.0
      %2485 = vmatprep.subr.mxu0 0.0
      %2486 = vmatpush2.msra.mxu0 0.0
      %2487 = vmatprep.subr.mxu0 0.0
      %2488 = vmatpush2.msra.mxu0 0.0
      %2489 = vmatprep.subr.mxu0 0.0
      %2490 = vmatpush2.msra.mxu0 0.0
      %2491 = vmatprep.subr.mxu0 0.0
      %2492 = vmatpush2.msra.mxu0 0.0
      %2493 = vmatprep.subr.mxu0 0.0
      %2494 = vmatpush2.msra.mxu0 0.0
      %2495 = vmatprep.subr.mxu0 0.0
      %2496 = vmatpush2.msra.mxu0 0.0
      %2497 = vmatprep.subr.mxu0 0.0
      %2498 = vmatpush2.msra.mxu0 0.0
      %2499 = vmatprep.subr.mxu0 0.0
      %2500 = vmatpush2.msra.mxu0 0.0
      %2501 = vmatprep.subr.mxu0 0.0
      %2502 = vmatpush2.msra.mxu0 0.0
      %2503 = vmatprep.subr.mxu0 0.0
      %2504 = vmatpush2.msra.mxu0 0.0
      %2505 = vmatprep.subr.mxu0 0.0
      %2506 = vmatpush2.msra.mxu0 0.0
      %2507 = vmatprep.subr.mxu0 0.0
      %2508 = vmatpush2.msra.mxu0 0.0
      %2509 = vmatprep.subr.mxu0 0.0
      %2510 = vmatpush2.msra.mxu0 0.0
      %2511 = vmatprep.mubr.f32.mxu0 0.0
      %2512 = vmatmul.mubr.f32.gmra.mxu0 %v2324
      %v2513 = vpop.f32.mrf.mxu0
      %v2514 = vadd.f32 %v2320, %v2513
      %v2515 = vpop.f32.mrf.mxu0
      %2516 = vmatprep.mubr.f32.mxu0 0.0
      %2517 = vmatmul.mubr.f32.gmra.mxu0 %v2327
      %v2518 = vpop.f32.mrf.mxu0
      %v2519 = vadd.f32 %v2320, %v2518
      %v2520 = vpop.f32.mrf.mxu0
      %2521 = vmatprep.mubr.f32.mxu0 0.0
      %2522 = vmatmul.mubr.f32.gmra.mxu0 %v2330
      %v2523 = vpop.f32.mrf.mxu0
      %v2524 = vadd.f32 %v2320, %v2523
      %v2525 = vpop.f32.mrf.mxu0
      %2526 = vmatprep.mubr.f32.mxu0 0.0
      %2527 = vmatmul.mubr.f32.gmra.mxu0 %v2333
      %v2528 = vpop.f32.mrf.mxu0
      %v2529 = vadd.f32 %v2320, %v2528
      %v2530 = vpop.f32.mrf.mxu0
      %2531 = vmatprep.mubr.f32.mxu0 0.0
      %2532 = vmatmul.mubr.f32.gmra.mxu0 %v2336
      %v2533 = vpop.f32.mrf.mxu0
      %v2534 = vadd.f32 %v2320, %v2533
      %v2535 = vpop.f32.mrf.mxu0
      %2536 = vmatprep.mubr.f32.mxu0 0.0
      %2537 = vmatmul.mubr.f32.gmra.mxu0 %v2339
      %v2538 = vpop.f32.mrf.mxu0
      %v2539 = vadd.f32 %v2320, %v2538
      %v2540 = vpop.f32.mrf.mxu0
      %2541 = vmatprep.mubr.f32.mxu0 0.0
      %2542 = vmatmul.mubr.f32.gmra.mxu0 %v2342
      %v2543 = vpop.f32.mrf.mxu0
      %v2544 = vadd.f32 %v2320, %v2543
      %v2545 = vpop.f32.mrf.mxu0
      %2546 = vmatprep.mubr.f32.mxu0 0.0
      %2547 = vmatmul.mubr.f32.gmra.mxu0 %v2345
      %v2548 = vpop.f32.mrf.mxu0
      %v2549 = vadd.f32 %v2320, %v2548
      %v2550 = vpop.f32.mrf.mxu0
      %2551 = vmatprep.mubr.f32.mxu0 0.0
      %2552 = vmatmul.mubr.f32.gmra.mxu0 %v2348
      %v2553 = vpop.f32.mrf.mxu0
      %v2554 = vadd.f32 %v2320, %v2553
      %v2555 = vpop.f32.mrf.mxu0
      %2556 = vmatprep.mubr.f32.mxu0 0.0
      %2557 = vmatmul.mubr.f32.gmra.mxu0 %v2351
      %v2558 = vpop.f32.mrf.mxu0
      %v2559 = vadd.f32 %v2320, %v2558
      %v2560 = vpop.f32.mrf.mxu0
      %2561 = vmatprep.mubr.f32.mxu0 0.0
      %2562 = vmatmul.mubr.f32.gmra.mxu0 %v2354
      %v2563 = vpop.f32.mrf.mxu0
      %v2564 = vadd.f32 %v2320, %v2563
      %v2565 = vpop.f32.mrf.mxu0
      %2566 = vmatprep.mubr.f32.mxu0 0.0
      %2567 = vmatmul.mubr.f32.gmra.mxu0 %v2357
      %v2568 = vpop.f32.mrf.mxu0
      %v2569 = vadd.f32 %v2320, %v2568
      %v2570 = vpop.f32.mrf.mxu0
      %2571 = vmatprep.mubr.f32.mxu0 0.0
      %2572 = vmatmul.mubr.f32.gmra.mxu0 %v2360
      %v2573 = vpop.f32.mrf.mxu0
      %v2574 = vadd.f32 %v2320, %v2573
      %v2575 = vpop.f32.mrf.mxu0
      %2576 = vmatprep.mubr.f32.mxu0 0.0
      %2577 = vmatmul.mubr.f32.gmra.mxu0 %v2363
      %v2578 = vpop.f32.mrf.mxu0
      %v2579 = vadd.f32 %v2320, %v2578
      %v2580 = vpop.f32.mrf.mxu0
      %2581 = vmatprep.mubr.f32.mxu0 0.0
      %2582 = vmatmul.mubr.f32.gmra.mxu0 %v2366
      %v2583 = vpop.f32.mrf.mxu0
      %v2584 = vadd.f32 %v2320, %v2583
      %v2585 = vpop.f32.mrf.mxu0
      %2586 = vmatprep.mubr.f32.mxu0 0.0
      %2587 = vmatmul.mubr.f32.gmra.mxu0 %v2369
      %v2588 = vpop.f32.mrf.mxu0
      %v2589 = vadd.f32 %v2320, %v2588
      %v2590 = vpop.f32.mrf.mxu0
      %2591 = vmatprep.mubr.f32.mxu0 0.0
      %2592 = vmatmul.mubr.f32.gmra.mxu0 %v2372
      %v2593 = vpop.f32.mrf.mxu0
      %v2594 = vadd.f32 %v2320, %v2593
      %v2595 = vpop.f32.mrf.mxu0
      %2596 = vmatprep.mubr.f32.mxu0 0.0
      %2597 = vmatmul.mubr.f32.gmra.mxu0 %v2375
      %v2598 = vpop.f32.mrf.mxu0
      %v2599 = vadd.f32 %v2320, %v2598
      %v2600 = vpop.f32.mrf.mxu0
      %2601 = vmatprep.mubr.f32.mxu0 0.0
      %2602 = vmatmul.mubr.f32.gmra.mxu0 %v2378
      %v2603 = vpop.f32.mrf.mxu0
      %v2604 = vadd.f32 %v2320, %v2603
      %v2605 = vpop.f32.mrf.mxu0
      %2606 = vmatprep.mubr.f32.mxu0 0.0
      %2607 = vmatmul.mubr.f32.gmra.mxu0 %v2381
      %v2608 = vpop.f32.mrf.mxu0
      %v2609 = vadd.f32 %v2320, %v2608
      %v2610 = vpop.f32.mrf.mxu0
      %2611 = vmatprep.mubr.f32.mxu0 0.0
      %2612 = vmatmul.mubr.f32.gmra.mxu0 %v2384
      %v2613 = vpop.f32.mrf.mxu0
      %v2614 = vadd.f32 %v2320, %v2613
      %v2615 = vpop.f32.mrf.mxu0
      %2616 = vmatprep.mubr.f32.mxu0 0.0
      %2617 = vmatmul.mubr.f32.gmra.mxu0 %v2387
      %v2618 = vpop.f32.mrf.mxu0
      %v2619 = vadd.f32 %v2320, %v2618
      %v2620 = vpop.f32.mrf.mxu0
      %2621 = vmatprep.mubr.f32.mxu0 0.0
      %2622 = vmatmul.mubr.f32.gmra.mxu0 %v2390
      %v2623 = vpop.f32.mrf.mxu0
      %v2624 = vadd.f32 %v2320, %v2623
      %v2625 = vpop.f32.mrf.mxu0
      %2626 = vmatprep.mubr.f32.mxu0 0.0
      %2627 = vmatmul.mubr.f32.gmra.mxu0 %v2393
      %v2628 = vpop.f32.mrf.mxu0
      %v2629 = vadd.f32 %v2320, %v2628
      %v2630 = vpop.f32.mrf.mxu0
      %2631 = vmatprep.mubr.f32.mxu0 0.0
      %2632 = vmatmul.mubr.f32.gmra.mxu0 %v2396
      %v2633 = vpop.f32.mrf.mxu0
      %v2634 = vadd.f32 %v2320, %v2633
      %v2635 = vpop.f32.mrf.mxu0
      %2636 = vmatprep.mubr.f32.mxu0 0.0
      %2637 = vmatmul.mubr.f32.gmra.mxu0 %v2399
      %v2638 = vpop.f32.mrf.mxu0
      %v2639 = vadd.f32 %v2320, %v2638
      %v2640 = vpop.f32.mrf.mxu0
      %2641 = vmatprep.mubr.f32.mxu0 0.0
      %2642 = vmatmul.mubr.f32.gmra.mxu0 %v2402
      %v2643 = vpop.f32.mrf.mxu0
      %v2644 = vadd.f32 %v2320, %v2643
      %v2645 = vpop.f32.mrf.mxu0
      %2646 = vmatprep.mubr.f32.mxu0 0.0
      %2647 = vmatmul.mubr.f32.gmra.mxu0 %v2405
      %v2648 = vpop.f32.mrf.mxu0
      %v2649 = vadd.f32 %v2320, %v2648
      %v2650 = vpop.f32.mrf.mxu0
      %2651 = vmatprep.mubr.f32.mxu0 0.0
      %2652 = vmatmul.mubr.f32.gmra.mxu0 %v2408
      %v2653 = vpop.f32.mrf.mxu0
      %v2654 = vadd.f32 %v2320, %v2653
      %v2655 = vpop.f32.mrf.mxu0
      %2656 = vmatprep.mubr.f32.mxu0 0.0
      %2657 = vmatmul.mubr.f32.gmra.mxu0 %v2411
      %v2658 = vpop.f32.mrf.mxu0
      %v2659 = vadd.f32 %v2320, %v2658
      %v2660 = vpop.f32.mrf.mxu0
      %2661 = vmatprep.mubr.f32.mxu0 0.0
      %2662 = vmatmul.mubr.f32.gmra.mxu0 %v2414
      %v2663 = vpop.f32.mrf.mxu0
      %v2664 = vadd.f32 %v2320, %v2663
      %v2665 = vpop.f32.mrf.mxu0
      %2666 = vmatprep.mubr.f32.mxu0 0.0
      %2667 = vmatmul.mubr.f32.gmra.mxu0 %v2417
      %v2668 = vpop.f32.mrf.mxu0
      %v2669 = vadd.f32 %v2320, %v2668
      %v2670 = vpop.f32.mrf.mxu0
      %2671 = vmatprep.mubr.f32.mxu0 0.0
      %2672 = vmatmul.mubr.f32.gmra.mxu0 %v2420
      %v2673 = vpop.f32.mrf.mxu0
      %v2674 = vadd.f32 %v2320, %v2673
      %v2675 = vpop.f32.mrf.mxu0
      %2676 = vmatprep.mubr.f32.mxu0 0.0
      %2677 = vmatmul.mubr.f32.gmra.mxu0 %v2423
      %v2678 = vpop.f32.mrf.mxu0
      %v2679 = vadd.f32 %v2320, %v2678
      %v2680 = vpop.f32.mrf.mxu0
      %2681 = vmatprep.mubr.f32.mxu0 0.0
      %2682 = vmatmul.mubr.f32.gmra.mxu0 %v2426
      %v2683 = vpop.f32.mrf.mxu0
      %v2684 = vadd.f32 %v2320, %v2683
      %v2685 = vpop.f32.mrf.mxu0
      %2686 = vmatprep.mubr.f32.mxu0 0.0
      %2687 = vmatmul.mubr.f32.gmra.mxu0 %v2429
      %v2688 = vpop.f32.mrf.mxu0
      %v2689 = vadd.f32 %v2320, %v2688
      %v2690 = vpop.f32.mrf.mxu0
      %2691 = vmatprep.mubr.f32.mxu0 0.0
      %2692 = vmatmul.mubr.f32.gmra.mxu0 %v2432
      %v2693 = vpop.f32.mrf.mxu0
      %v2694 = vadd.f32 %v2320, %v2693
      %v2695 = vpop.f32.mrf.mxu0
      %2696 = vmatprep.mubr.f32.mxu0 0.0
      %2697 = vmatmul.mubr.f32.gmra.mxu0 %v2435
      %v2698 = vpop.f32.mrf.mxu0
      %v2699 = vadd.f32 %v2320, %v2698
      %v2700 = vpop.f32.mrf.mxu0
      %2701 = vmatprep.mubr.f32.mxu0 0.0
      %2702 = vmatmul.mubr.f32.gmra.mxu0 %v2438
      %v2703 = vpop.f32.mrf.mxu0
      %v2704 = vadd.f32 %v2320, %v2703
      %v2705 = vpop.f32.mrf.mxu0
      %2706 = vmatprep.mubr.f32.mxu0 0.0
      %2707 = vmatmul.mubr.f32.gmra.mxu0 %v2441
      %v2708 = vpop.f32.mrf.mxu0
      %v2709 = vadd.f32 %v2320, %v2708
      %v2710 = vpop.f32.mrf.mxu0
      %2711 = vdwg.mxu0
      %v2712 = vmax.f32 %v2514, 0.0
      %v2713 = vmax.f32 %v2519, 0.0
      %v2714 = vmax.f32 %v2524, 0.0
      %v2715 = vmax.f32 %v2529, 0.0
      %v2716 = vmax.f32 %v2534, 0.0
      %v2717 = vmax.f32 %v2539, 0.0
      %v2718 = vmax.f32 %v2544, 0.0
      %v2719 = vmax.f32 %v2549, 0.0
      %v2720 = vmax.f32 %v2554, 0.0
      %v2721 = vmax.f32 %v2559, 0.0
      %v2722 = vmax.f32 %v2564, 0.0
      %v2723 = vmax.f32 %v2569, 0.0
      %v2724 = vmax.f32 %v2574, 0.0
      %v2725 = vmax.f32 %v2579, 0.0
      %v2726 = vmax.f32 %v2584, 0.0
      %v2727 = vmax.f32 %v2589, 0.0
      %v2728 = vmax.f32 %v2594, 0.0
      %v2729 = vmax.f32 %v2599, 0.0
      %v2730 = vmax.f32 %v2604, 0.0
      %v2731 = vmax.f32 %v2609, 0.0
      %v2732 = vmax.f32 %v2614, 0.0
      %v2733 = vmax.f32 %v2619, 0.0
      %v2734 = vmax.f32 %v2624, 0.0
      %v2735 = vmax.f32 %v2629, 0.0
      %v2736 = vmax.f32 %v2634, 0.0
      %v2737 = vmax.f32 %v2639, 0.0
      %v2738 = vmax.f32 %v2644, 0.0
      %v2739 = vmax.f32 %v2649, 0.0
      %v2740 = vmax.f32 %v2654, 0.0
      %v2741 = vmax.f32 %v2659, 0.0
      %v2742 = vmax.f32 %v2664, 0.0
      %v2743 = vmax.f32 %v2669, 0.0
      %v2744 = vmax.f32 %v2674, 0.0
      %v2745 = vmax.f32 %v2679, 0.0
      %v2746 = vmax.f32 %v2684, 0.0
      %v2747 = vmax.f32 %v2689, 0.0
      %v2748 = vmax.f32 %v2694, 0.0
      %v2749 = vmax.f32 %v2699, 0.0
      %v2750 = vmax.f32 %v2704, 0.0
      %v2751 = vmax.f32 %v2709, 0.0
      %v2752 = vld [vmem:[%s1] sm:$0xff]
      %v2753 = vld [vmem:[%s1 + $0x8] sm:$0xff]
      %v2754 = vld [vmem:[%s1 + $0x10] sm:$0xff]
      %v2755 = vld [vmem:[%s1 + $0x18] sm:$0xff]
      %v2756 = vld [vmem:[%s1 + $0x20] sm:$0xff]
      %v2757 = vld [vmem:[%s1 + $0x28] sm:$0xff]
      %v2758 = vld [vmem:[%s1 + $0x30] sm:$0xff]
      %v2759 = vld [vmem:[%s1 + $0x38] sm:$0xff]
      %v2760 = vld [vmem:[%s1 + $0x40] sm:$0xff]
      %v2761 = vld [vmem:[%s1 + $0x48] sm:$0xff]
      %v2762 = vld [vmem:[%s1 + $0x50] sm:$0xff]
      %v2763 = vld [vmem:[%s1 + $0x58] sm:$0xff]
      %v2764 = vld [vmem:[%s1 + $0x60] sm:$0xff]
      %v2765 = vld [vmem:[%s1 + $0x68] sm:$0xff]
      %v2766 = vld [vmem:[%s1 + $0x70] sm:$0xff]
      %v2767 = vld [vmem:[%s1 + $0x78] sm:$0xff]
      %v2768 = vld [vmem:[%s1 + $0x80] sm:$0xff]
      %v2769 = vld [vmem:[%s1 + $0x88] sm:$0xff]
      %v2770 = vld [vmem:[%s1 + $0x90] sm:$0xff]
      %v2771 = vld [vmem:[%s1 + $0x98] sm:$0xff]
      %v2772 = vld [vmem:[%s1 + $0xa0] sm:$0xff]
      %v2773 = vld [vmem:[%s1 + $0xa8] sm:$0xff]
      %v2774 = vld [vmem:[%s1 + $0xb0] sm:$0xff]
      %v2775 = vld [vmem:[%s1 + $0xb8] sm:$0xff]
      %v2776 = vld [vmem:[%s1 + $0xc0] sm:$0xff]
      %v2777 = vld [vmem:[%s1 + $0xc8] sm:$0xff]
      %v2778 = vld [vmem:[%s1 + $0xd0] sm:$0xff]
      %v2779 = vld [vmem:[%s1 + $0xd8] sm:$0xff]
      %v2780 = vld [vmem:[%s1 + $0xe0] sm:$0xff]
      %v2781 = vld [vmem:[%s1 + $0xe8] sm:$0xff]
      %v2782 = vld [vmem:[%s1 + $0xf0] sm:$0xff]
      %v2783 = vld [vmem:[%s1 + $0xf8] sm:$0xff]
      %v2784 = vld [vmem:[%s1 + $0x100] sm:$0xff]
      %v2785 = vld [vmem:[%s1 + $0x108] sm:$0xff]
      %v2786 = vld [vmem:[%s1 + $0x110] sm:$0xff]
      %v2787 = vld [vmem:[%s1 + $0x118] sm:$0xff]
      %v2788 = vld [vmem:[%s1 + $0x120] sm:$0xff]
      %v2789 = vld [vmem:[%s1 + $0x128] sm:$0xff]
      %v2790 = vld [vmem:[%s1 + $0x130] sm:$0xff]
      %v2791 = vld [vmem:[%s1 + $0x138] sm:$0xf]
      %2793 = vset.pattern.permute.xlu0 0
      %2794 = vperm.xlu0 %2793, %v2752
      %v2795 = vpop.permute.xlu0 %2794
      %2798 = vset.pattern.permute.xlu0 0
      %2799 = vperm.xlu0 %2798, %v2753
      %v2800 = vpop.permute.xlu0 %2799
      %2803 = vset.pattern.permute.xlu0 0
      %2804 = vperm.xlu0 %2803, %v2754
      %v2805 = vpop.permute.xlu0 %2804
      %2808 = vset.pattern.permute.xlu0 0
      %2809 = vperm.xlu0 %2808, %v2755
      %v2810 = vpop.permute.xlu0 %2809
      %2813 = vset.pattern.permute.xlu0 0
      %2814 = vperm.xlu0 %2813, %v2756
      %v2815 = vpop.permute.xlu0 %2814
      %2818 = vset.pattern.permute.xlu0 0
      %2819 = vperm.xlu0 %2818, %v2757
      %v2820 = vpop.permute.xlu0 %2819
      %2823 = vset.pattern.permute.xlu0 0
      %2824 = vperm.xlu0 %2823, %v2758
      %v2825 = vpop.permute.xlu0 %2824
      %2828 = vset.pattern.permute.xlu0 0
      %2829 = vperm.xlu0 %2828, %v2759
      %v2830 = vpop.permute.xlu0 %2829
      %2833 = vset.pattern.permute.xlu0 0
      %2834 = vperm.xlu0 %2833, %v2760
      %v2835 = vpop.permute.xlu0 %2834
      %2838 = vset.pattern.permute.xlu0 0
      %2839 = vperm.xlu0 %2838, %v2761
      %v2840 = vpop.permute.xlu0 %2839
      %2843 = vset.pattern.permute.xlu0 0
      %2844 = vperm.xlu0 %2843, %v2762
      %v2845 = vpop.permute.xlu0 %2844
      %2848 = vset.pattern.permute.xlu0 0
      %2849 = vperm.xlu0 %2848, %v2763
      %v2850 = vpop.permute.xlu0 %2849
      %2853 = vset.pattern.permute.xlu0 0
      %2854 = vperm.xlu0 %2853, %v2764
      %v2855 = vpop.permute.xlu0 %2854
      %2858 = vset.pattern.permute.xlu0 0
      %2859 = vperm.xlu0 %2858, %v2765
      %v2860 = vpop.permute.xlu0 %2859
      %2863 = vset.pattern.permute.xlu0 0
      %2864 = vperm.xlu0 %2863, %v2766
      %v2865 = vpop.permute.xlu0 %2864
      %2868 = vset.pattern.permute.xlu0 0
      %2869 = vperm.xlu0 %2868, %v2767
      %v2870 = vpop.permute.xlu0 %2869
      %2873 = vset.pattern.permute.xlu0 0
      %2874 = vperm.xlu0 %2873, %v2768
      %v2875 = vpop.permute.xlu0 %2874
      %2878 = vset.pattern.permute.xlu0 0
      %2879 = vperm.xlu0 %2878, %v2769
      %v2880 = vpop.permute.xlu0 %2879
      %2883 = vset.pattern.permute.xlu0 0
      %2884 = vperm.xlu0 %2883, %v2770
      %v2885 = vpop.permute.xlu0 %2884
      %2888 = vset.pattern.permute.xlu0 0
      %2889 = vperm.xlu0 %2888, %v2771
      %v2890 = vpop.permute.xlu0 %2889
      %2893 = vset.pattern.permute.xlu0 0
      %2894 = vperm.xlu0 %2893, %v2772
      %v2895 = vpop.permute.xlu0 %2894
      %2898 = vset.pattern.permute.xlu0 0
      %2899 = vperm.xlu0 %2898, %v2773
      %v2900 = vpop.permute.xlu0 %2899
      %2903 = vset.pattern.permute.xlu0 0
      %2904 = vperm.xlu0 %2903, %v2774
      %v2905 = vpop.permute.xlu0 %2904
      %2908 = vset.pattern.permute.xlu0 0
      %2909 = vperm.xlu0 %2908, %v2775
      %v2910 = vpop.permute.xlu0 %2909
      %2913 = vset.pattern.permute.xlu0 0
      %2914 = vperm.xlu0 %2913, %v2776
      %v2915 = vpop.permute.xlu0 %2914
      %2918 = vset.pattern.permute.xlu0 0
      %2919 = vperm.xlu0 %2918, %v2777
      %v2920 = vpop.permute.xlu0 %2919
      %2923 = vset.pattern.permute.xlu0 0
      %2924 = vperm.xlu0 %2923, %v2778
      %v2925 = vpop.permute.xlu0 %2924
      %2928 = vset.pattern.permute.xlu0 0
      %2929 = vperm.xlu0 %2928, %v2779
      %v2930 = vpop.permute.xlu0 %2929
      %2933 = vset.pattern.permute.xlu0 0
      %2934 = vperm.xlu0 %2933, %v2780
      %v2935 = vpop.permute.xlu0 %2934
      %2938 = vset.pattern.permute.xlu0 0
      %2939 = vperm.xlu0 %2938, %v2781
      %v2940 = vpop.permute.xlu0 %2939
      %2943 = vset.pattern.permute.xlu0 0
      %2944 = vperm.xlu0 %2943, %v2782
      %v2945 = vpop.permute.xlu0 %2944
      %2948 = vset.pattern.permute.xlu0 0
      %2949 = vperm.xlu0 %2948, %v2783
      %v2950 = vpop.permute.xlu0 %2949
      %2953 = vset.pattern.permute.xlu0 0
      %2954 = vperm.xlu0 %2953, %v2784
      %v2955 = vpop.permute.xlu0 %2954
      %2958 = vset.pattern.permute.xlu0 0
      %2959 = vperm.xlu0 %2958, %v2785
      %v2960 = vpop.permute.xlu0 %2959
      %2963 = vset.pattern.permute.xlu0 0
      %2964 = vperm.xlu0 %2963, %v2786
      %v2965 = vpop.permute.xlu0 %2964
      %2968 = vset.pattern.permute.xlu0 0
      %2969 = vperm.xlu0 %2968, %v2787
      %v2970 = vpop.permute.xlu0 %2969
      %2973 = vset.pattern.permute.xlu0 0
      %2974 = vperm.xlu0 %2973, %v2788
      %v2975 = vpop.permute.xlu0 %2974
      %2978 = vset.pattern.permute.xlu0 0
      %2979 = vperm.xlu0 %2978, %v2789
      %v2980 = vpop.permute.xlu0 %2979
      %2983 = vset.pattern.permute.xlu0 0
      %2984 = vperm.xlu0 %2983, %v2790
      %v2985 = vpop.permute.xlu0 %2984
      %2988 = vset.pattern.permute.xlu0 0
      %2989 = vperm.xlu0 %2988, %v2791
      %v2990 = vpop.permute.xlu0 %2989
      %v2992 = vmul.f32 %v2712, %v2795
      %v2993 = vmul.f32 %v2713, %v2800
      %v2994 = vmul.f32 %v2714, %v2805
      %v2995 = vmul.f32 %v2715, %v2810
      %v2996 = vmul.f32 %v2716, %v2815
      %v2997 = vmul.f32 %v2717, %v2820
      %v2998 = vmul.f32 %v2718, %v2825
      %v2999 = vmul.f32 %v2719, %v2830
      %v3000 = vmul.f32 %v2720, %v2835
      %v3001 = vmul.f32 %v2721, %v2840
      %v3002 = vmul.f32 %v2722, %v2845
      %v3003 = vmul.f32 %v2723, %v2850
      %v3004 = vmul.f32 %v2724, %v2855
      %v3005 = vmul.f32 %v2725, %v2860
      %v3006 = vmul.f32 %v2726, %v2865
      %v3007 = vmul.f32 %v2727, %v2870
      %v3008 = vmul.f32 %v2728, %v2875
      %v3009 = vmul.f32 %v2729, %v2880
      %v3010 = vmul.f32 %v2730, %v2885
      %v3011 = vmul.f32 %v2731, %v2890
      %v3012 = vmul.f32 %v2732, %v2895
      %v3013 = vmul.f32 %v2733, %v2900
      %v3014 = vmul.f32 %v2734, %v2905
      %v3015 = vmul.f32 %v2735, %v2910
      %v3016 = vmul.f32 %v2736, %v2915
      %v3017 = vmul.f32 %v2737, %v2920
      %v3018 = vmul.f32 %v2738, %v2925
      %v3019 = vmul.f32 %v2739, %v2930
      %v3020 = vmul.f32 %v2740, %v2935
      %v3021 = vmul.f32 %v2741, %v2940
      %v3022 = vmul.f32 %v2742, %v2945
      %v3023 = vmul.f32 %v2743, %v2950
      %v3024 = vmul.f32 %v2744, %v2955
      %v3025 = vmul.f32 %v2745, %v2960
      %v3026 = vmul.f32 %v2746, %v2965
      %v3027 = vmul.f32 %v2747, %v2970
      %v3028 = vmul.f32 %v2748, %v2975
      %v3029 = vmul.f32 %v2749, %v2980
      %v3030 = vmul.f32 %v2750, %v2985
      %v3031 = vmul.f32 %v2751, %v2990
      %vm3032 = vcmask 64512
      %3033 = vst.msk [vmem:[#allocation3] sm:$0xff] %vm3032, 0.0
      %3034 = vst.msk [vmem:[#allocation3 + $0x8] sm:$0xff] %vm3032, 0.0
      %3035 = vst.msk [vmem:[#allocation3 + $0x10] sm:$0xff] %vm3032, 0.0
      %3036 = vst.msk [vmem:[#allocation3 + $0x18] sm:$0xff] %vm3032, 0.0
      %3037 = vst.msk [vmem:[#allocation3 + $0x20] sm:$0xff] %vm3032, 0.0
      %3038 = vst.msk [vmem:[#allocation3 + $0x28] sm:$0xff] %vm3032, 0.0
      %3039 = vst.msk [vmem:[#allocation3 + $0x30] sm:$0xff] %vm3032, 0.0
      %3040 = vst.msk [vmem:[#allocation3 + $0x38] sm:$0xff] %vm3032, 0.0
      %3041 = vst.msk [vmem:[#allocation3 + $0x40] sm:$0xff] %vm3032, 0.0
      %3042 = vst.msk [vmem:[#allocation3 + $0x48] sm:$0xff] %vm3032, 0.0
      %3043 = vst.msk [vmem:[#allocation3 + $0x50] sm:$0xff] %vm3032, 0.0
      %3044 = vst.msk [vmem:[#allocation3 + $0x58] sm:$0xff] %vm3032, 0.0
      %3045 = vst.msk [vmem:[#allocation3 + $0x60] sm:$0xff] %vm3032, 0.0
      %3046 = vst.msk [vmem:[#allocation3 + $0x68] sm:$0xff] %vm3032, 0.0
      %3047 = vst.msk [vmem:[#allocation3 + $0x70] sm:$0xff] %vm3032, 0.0
      %3048 = vst.msk [vmem:[#allocation3 + $0x78] sm:$0xff] %vm3032, 0.0
      %3049 = vst.msk [vmem:[#allocation3 + $0x80] sm:$0xff] %vm3032, 0.0
      %3050 = vst.msk [vmem:[#allocation3 + $0x88] sm:$0xff] %vm3032, 0.0
      %3051 = vst.msk [vmem:[#allocation3 + $0x90] sm:$0xff] %vm3032, 0.0
      %3052 = vst.msk [vmem:[#allocation3 + $0x98] sm:$0xff] %vm3032, 0.0
      %3053 = vst.msk [vmem:[#allocation3 + $0xa0] sm:$0xff] %vm3032, 0.0
      %3054 = vst.msk [vmem:[#allocation3 + $0xa8] sm:$0xff] %vm3032, 0.0
      %3055 = vst.msk [vmem:[#allocation3 + $0xb0] sm:$0xff] %vm3032, 0.0
      %3056 = vst.msk [vmem:[#allocation3 + $0xb8] sm:$0xff] %vm3032, 0.0
      %3057 = vst.msk [vmem:[#allocation3 + $0xc0] sm:$0xff] %vm3032, 0.0
      %3058 = vst.msk [vmem:[#allocation3 + $0xc8] sm:$0xff] %vm3032, 0.0
      %3059 = vst.msk [vmem:[#allocation3 + $0xd0] sm:$0xff] %vm3032, 0.0
      %3060 = vst.msk [vmem:[#allocation3 + $0xd8] sm:$0xff] %vm3032, 0.0
      %3061 = vst.msk [vmem:[#allocation3 + $0xe0] sm:$0xff] %vm3032, 0.0
      %3062 = vst.msk [vmem:[#allocation3 + $0xe8] sm:$0xff] %vm3032, 0.0
      %3063 = vst.msk [vmem:[#allocation3 + $0xf0] sm:$0xff] %vm3032, 0.0
      %3064 = vst.msk [vmem:[#allocation3 + $0xf8] sm:$0xff] %vm3032, 0.0
      %3065 = vst.msk [vmem:[#allocation3 + $0x100] sm:$0xff] %vm3032, 0.0
      %3066 = vst.msk [vmem:[#allocation3 + $0x108] sm:$0xff] %vm3032, 0.0
      %3067 = vst.msk [vmem:[#allocation3 + $0x110] sm:$0xff] %vm3032, 0.0
      %3068 = vst.msk [vmem:[#allocation3 + $0x118] sm:$0xff] %vm3032, 0.0
      %3069 = vst.msk [vmem:[#allocation3 + $0x120] sm:$0xff] %vm3032, 0.0
      %3070 = vst.msk [vmem:[#allocation3 + $0x128] sm:$0xff] %vm3032, 0.0
      %3071 = vst.msk [vmem:[#allocation3 + $0x130] sm:$0xff] %vm3032, 0.0
      %3072 = vst.msk [vmem:[#allocation3 + $0x138] sm:$0xff] %vm3032, 0.0
      %3073 = vst.msk [vmem:[#allocation3 + $0x140] sm:$0xff] %vm3032, 0.0
      %3074 = vst.msk [vmem:[#allocation3 + $0x148] sm:$0xff] %vm3032, 0.0
      %3075 = vst.msk [vmem:[#allocation3 + $0x150] sm:$0xff] %vm3032, 0.0
      %3076 = vst.msk [vmem:[#allocation3 + $0x158] sm:$0xff] %vm3032, 0.0
      %3077 = vst.msk [vmem:[#allocation3 + $0x160] sm:$0xff] %vm3032, 0.0
      %3078 = vst.msk [vmem:[#allocation3 + $0x168] sm:$0xff] %vm3032, 0.0
      %3079 = vst.msk [vmem:[#allocation3 + $0x170] sm:$0xff] %vm3032, 0.0
      %3080 = vst.msk [vmem:[#allocation3 + $0x178] sm:$0xff] %vm3032, 0.0
      %3081 = vst.msk [vmem:[#allocation3 + $0x180] sm:$0xff] %vm3032, 0.0
      %3082 = vst.msk [vmem:[#allocation3 + $0x188] sm:$0xff] %vm3032, 0.0
      %3083 = vst.msk [vmem:[#allocation3 + $0x190] sm:$0xff] %vm3032, 0.0
      %3084 = vst.msk [vmem:[#allocation3 + $0x198] sm:$0xff] %vm3032, 0.0
      %3085 = vst.msk [vmem:[#allocation3 + $0x1a0] sm:$0xff] %vm3032, 0.0
      %3086 = vst.msk [vmem:[#allocation3 + $0x1a8] sm:$0xff] %vm3032, 0.0
      %3087 = vst.msk [vmem:[#allocation3 + $0x1b0] sm:$0xff] %vm3032, 0.0
      %vm3088 = vcmask 58368
      %3089 = vst.msk [vmem:[#allocation3 + $0x1b8] sm:$0x3] %vm3088, 0.0
      %3090 = vst.msk [vmem:[#allocation3 + $0x3f] sm:$0xff] %vm3032, %v2992
      %3091 = vst.msk [vmem:[#allocation3 + $0x47] sm:$0xff] %vm3032, %v2993
      %3092 = vst.msk [vmem:[#allocation3 + $0x4f] sm:$0xff] %vm3032, %v2994
      %3093 = vst.msk [vmem:[#allocation3 + $0x57] sm:$0xff] %vm3032, %v2995
      %3094 = vst.msk [vmem:[#allocation3 + $0x5f] sm:$0xff] %vm3032, %v2996
      %3095 = vst.msk [vmem:[#allocation3 + $0x67] sm:$0xff] %vm3032, %v2997
      %3096 = vst.msk [vmem:[#allocation3 + $0x6f] sm:$0xff] %vm3032, %v2998
      %3097 = vst.msk [vmem:[#allocation3 + $0x77] sm:$0xff] %vm3032, %v2999
      %3098 = vst.msk [vmem:[#allocation3 + $0x7f] sm:$0xff] %vm3032, %v3000
      %3099 = vst.msk [vmem:[#allocation3 + $0x87] sm:$0xff] %vm3032, %v3001
      %3100 = vst.msk [vmem:[#allocation3 + $0x8f] sm:$0xff] %vm3032, %v3002
      %3101 = vst.msk [vmem:[#allocation3 + $0x97] sm:$0xff] %vm3032, %v3003
      %3102 = vst.msk [vmem:[#allocation3 + $0x9f] sm:$0xff] %vm3032, %v3004
      %3103 = vst.msk [vmem:[#allocation3 + $0xa7] sm:$0xff] %vm3032, %v3005
      %3104 = vst.msk [vmem:[#allocation3 + $0xaf] sm:$0xff] %vm3032, %v3006
      %3105 = vst.msk [vmem:[#allocation3 + $0xb7] sm:$0xff] %vm3032, %v3007
      %3106 = vst.msk [vmem:[#allocation3 + $0xbf] sm:$0xff] %vm3032, %v3008
      %3107 = vst.msk [vmem:[#allocation3 + $0xc7] sm:$0xff] %vm3032, %v3009
      %3108 = vst.msk [vmem:[#allocation3 + $0xcf] sm:$0xff] %vm3032, %v3010
      %3109 = vst.msk [vmem:[#allocation3 + $0xd7] sm:$0xff] %vm3032, %v3011
      %3110 = vst.msk [vmem:[#allocation3 + $0xdf] sm:$0xff] %vm3032, %v3012
      %3111 = vst.msk [vmem:[#allocation3 + $0xe7] sm:$0xff] %vm3032, %v3013
      %3112 = vst.msk [vmem:[#allocation3 + $0xef] sm:$0xff] %vm3032, %v3014
      %3113 = vst.msk [vmem:[#allocation3 + $0xf7] sm:$0xff] %vm3032, %v3015
      %3114 = vst.msk [vmem:[#allocation3 + $0xff] sm:$0xff] %vm3032, %v3016
      %3115 = vst.msk [vmem:[#allocation3 + $0x107] sm:$0xff] %vm3032, %v3017
      %3116 = vst.msk [vmem:[#allocation3 + $0x10f] sm:$0xff] %vm3032, %v3018
      %3117 = vst.msk [vmem:[#allocation3 + $0x117] sm:$0xff] %vm3032, %v3019
      %3118 = vst.msk [vmem:[#allocation3 + $0x11f] sm:$0xff] %vm3032, %v3020
      %3119 = vst.msk [vmem:[#allocation3 + $0x127] sm:$0xff] %vm3032, %v3021
      %3120 = vst.msk [vmem:[#allocation3 + $0x12f] sm:$0xff] %vm3032, %v3022
      %3121 = vst.msk [vmem:[#allocation3 + $0x137] sm:$0xff] %vm3032, %v3023
      %3122 = vst.msk [vmem:[#allocation3 + $0x13f] sm:$0xff] %vm3032, %v3024
      %3123 = vst.msk [vmem:[#allocation3 + $0x147] sm:$0xff] %vm3032, %v3025
      %3124 = vst.msk [vmem:[#allocation3 + $0x14f] sm:$0xff] %vm3032, %v3026
      %3125 = vst.msk [vmem:[#allocation3 + $0x157] sm:$0xff] %vm3032, %v3027
      %3126 = vst.msk [vmem:[#allocation3 + $0x15f] sm:$0xff] %vm3032, %v3028
      %3127 = vst.msk [vmem:[#allocation3 + $0x167] sm:$0xff] %vm3032, %v3029
      %3128 = vst.msk [vmem:[#allocation3 + $0x16f] sm:$0xff] %vm3032, %v3030
      %vm3129 = vcmask 60416
      %3130 = vst.msk [vmem:[#allocation3 + $0x177] sm:$0xf] %vm3129, %v3031
      %v3131 = vld [vmem:[#allocation3] sm:$0xff]
      %v3132 = vld [vmem:[#allocation3 + $0x8] sm:$0xff]
      %v3133 = vld [vmem:[#allocation3 + $0x10] sm:$0xff]
      %v3134 = vld [vmem:[#allocation3 + $0x18] sm:$0xff]
      %v3135 = vld [vmem:[#allocation3 + $0x20] sm:$0xff]
      %v3136 = vld [vmem:[#allocation3 + $0x28] sm:$0xff]
      %v3137 = vld [vmem:[#allocation3 + $0x30] sm:$0xff]
      %v3138 = vld [vmem:[#allocation3 + $0x38] sm:$0xff]
      %v3139 = vld [vmem:[#allocation3 + $0x40] sm:$0xff]
      %v3140 = vld [vmem:[#allocation3 + $0x48] sm:$0xff]
      %v3141 = vld [vmem:[#allocation3 + $0x50] sm:$0xff]
      %v3142 = vld [vmem:[#allocation3 + $0x58] sm:$0xff]
      %v3143 = vld [vmem:[#allocation3 + $0x60] sm:$0xff]
      %v3144 = vld [vmem:[#allocation3 + $0x68] sm:$0xff]
      %v3145 = vld [vmem:[#allocation3 + $0x70] sm:$0xff]
      %v3146 = vld [vmem:[#allocation3 + $0x78] sm:$0xff]
      %v3147 = vld [vmem:[#allocation3 + $0x80] sm:$0xff]
      %v3148 = vld [vmem:[#allocation3 + $0x88] sm:$0xff]
      %v3149 = vld [vmem:[#allocation3 + $0x90] sm:$0xff]
      %v3150 = vld [vmem:[#allocation3 + $0x98] sm:$0xff]
      %v3151 = vld [vmem:[#allocation3 + $0xa0] sm:$0xff]
      %v3152 = vld [vmem:[#allocation3 + $0xa8] sm:$0xff]
      %v3153 = vld [vmem:[#allocation3 + $0xb0] sm:$0xff]
      %v3154 = vld [vmem:[#allocation3 + $0xb8] sm:$0xff]
      %v3155 = vld [vmem:[#allocation3 + $0xc0] sm:$0xff]
      %v3156 = vld [vmem:[#allocation3 + $0xc8] sm:$0xff]
      %v3157 = vld [vmem:[#allocation3 + $0xd0] sm:$0xff]
      %v3158 = vld [vmem:[#allocation3 + $0xd8] sm:$0xff]
      %v3159 = vld [vmem:[#allocation3 + $0xe0] sm:$0xff]
      %v3160 = vld [vmem:[#allocation3 + $0xe8] sm:$0xff]
      %v3161 = vld [vmem:[#allocation3 + $0xf0] sm:$0xff]
      %v3162 = vld [vmem:[#allocation3 + $0xf8] sm:$0xff]
      %v3163 = vld [vmem:[#allocation3 + $0x100] sm:$0xff]
      %v3164 = vld [vmem:[#allocation3 + $0x108] sm:$0xff]
      %v3165 = vld [vmem:[#allocation3 + $0x110] sm:$0xff]
      %v3166 = vld [vmem:[#allocation3 + $0x118] sm:$0xff]
      %v3167 = vld [vmem:[#allocation3 + $0x120] sm:$0xff]
      %v3168 = vld [vmem:[#allocation3 + $0x128] sm:$0xff]
      %v3169 = vld [vmem:[#allocation3 + $0x130] sm:$0xff]
      %v3170 = vld [vmem:[#allocation3 + $0x138] sm:$0xff]
      %v3171 = vld [vmem:[#allocation3 + $0x140] sm:$0xff]
      %v3172 = vld [vmem:[#allocation3 + $0x148] sm:$0xff]
      %v3173 = vld [vmem:[#allocation3 + $0x150] sm:$0xff]
      %v3174 = vld [vmem:[#allocation3 + $0x158] sm:$0xff]
      %v3175 = vld [vmem:[#allocation3 + $0x160] sm:$0xff]
      %v3176 = vld [vmem:[#allocation3 + $0x168] sm:$0xff]
      %v3177 = vld [vmem:[#allocation3 + $0x170] sm:$0xff]
      %v3178 = vld [vmem:[#allocation3 + $0x178] sm:$0xff]
      %v3179 = vld [vmem:[#allocation3 + $0x180] sm:$0xff]
      %v3180 = vld [vmem:[#allocation3 + $0x188] sm:$0xff]
      %3181 = vst.msk [vmem:[#allocation4] sm:$0xff] %vm3032, %v3131
      %3182 = vst.msk [vmem:[#allocation4 + $0x8] sm:$0xff] %vm3032, %v3132
      %3183 = vst.msk [vmem:[#allocation4 + $0x10] sm:$0xff] %vm3032, %v3133
      %3184 = vst.msk [vmem:[#allocation4 + $0x18] sm:$0xff] %vm3032, %v3134
      %3185 = vst.msk [vmem:[#allocation4 + $0x20] sm:$0xff] %vm3032, %v3135
      %3186 = vst.msk [vmem:[#allocation4 + $0x28] sm:$0xff] %vm3032, %v3136
      %3187 = vst.msk [vmem:[#allocation4 + $0x30] sm:$0xff] %vm3032, %v3137
      %3188 = vst.msk [vmem:[#allocation4 + $0x38] sm:$0xff] %vm3032, %v3138
      %3189 = vst.msk [vmem:[#allocation4 + $0x40] sm:$0xff] %vm3032, %v3139
      %3190 = vst.msk [vmem:[#allocation4 + $0x48] sm:$0xff] %vm3032, %v3140
      %3191 = vst.msk [vmem:[#allocation4 + $0x50] sm:$0xff] %vm3032, %v3141
      %3192 = vst.msk [vmem:[#allocation4 + $0x58] sm:$0xff] %vm3032, %v3142
      %3193 = vst.msk [vmem:[#allocation4 + $0x60] sm:$0xff] %vm3032, %v3143
      %3194 = vst.msk [vmem:[#allocation4 + $0x68] sm:$0xff] %vm3032, %v3144
      %3195 = vst.msk [vmem:[#allocation4 + $0x70] sm:$0xff] %vm3032, %v3145
      %3196 = vst.msk [vmem:[#allocation4 + $0x78] sm:$0xff] %vm3032, %v3146
      %3197 = vst.msk [vmem:[#allocation4 + $0x80] sm:$0xff] %vm3032, %v3147
      %3198 = vst.msk [vmem:[#allocation4 + $0x88] sm:$0xff] %vm3032, %v3148
      %3199 = vst.msk [vmem:[#allocation4 + $0x90] sm:$0xff] %vm3032, %v3149
      %3200 = vst.msk [vmem:[#allocation4 + $0x98] sm:$0xff] %vm3032, %v3150
      %3201 = vst.msk [vmem:[#allocation4 + $0xa0] sm:$0xff] %vm3032, %v3151
      %3202 = vst.msk [vmem:[#allocation4 + $0xa8] sm:$0xff] %vm3032, %v3152
      %3203 = vst.msk [vmem:[#allocation4 + $0xb0] sm:$0xff] %vm3032, %v3153
      %3204 = vst.msk [vmem:[#allocation4 + $0xb8] sm:$0xff] %vm3032, %v3154
      %3205 = vst.msk [vmem:[#allocation4 + $0xc0] sm:$0xff] %vm3032, %v3155
      %3206 = vst.msk [vmem:[#allocation4 + $0xc8] sm:$0xff] %vm3032, %v3156
      %3207 = vst.msk [vmem:[#allocation4 + $0xd0] sm:$0xff] %vm3032, %v3157
      %3208 = vst.msk [vmem:[#allocation4 + $0xd8] sm:$0xff] %vm3032, %v3158
      %3209 = vst.msk [vmem:[#allocation4 + $0xe0] sm:$0xff] %vm3032, %v3159
      %3210 = vst.msk [vmem:[#allocation4 + $0xe8] sm:$0xff] %vm3032, %v3160
      %3211 = vst.msk [vmem:[#allocation4 + $0xf0] sm:$0xff] %vm3032, %v3161
      %3212 = vst.msk [vmem:[#allocation4 + $0xf8] sm:$0xff] %vm3032, %v3162
      %3213 = vst.msk [vmem:[#allocation4 + $0x100] sm:$0xff] %vm3032, %v3163
      %3214 = vst.msk [vmem:[#allocation4 + $0x108] sm:$0xff] %vm3032, %v3164
      %3215 = vst.msk [vmem:[#allocation4 + $0x110] sm:$0xff] %vm3032, %v3165
      %3216 = vst.msk [vmem:[#allocation4 + $0x118] sm:$0xff] %vm3032, %v3166
      %3217 = vst.msk [vmem:[#allocation4 + $0x120] sm:$0xff] %vm3032, %v3167
      %3218 = vst.msk [vmem:[#allocation4 + $0x128] sm:$0xff] %vm3032, %v3168
      %3219 = vst.msk [vmem:[#allocation4 + $0x130] sm:$0xff] %vm3032, %v3169
      %3220 = vst.msk [vmem:[#allocation4 + $0x138] sm:$0xff] %vm3032, %v3170
      %3221 = vst.msk [vmem:[#allocation4 + $0x140] sm:$0xff] %vm3032, %v3171
      %3222 = vst.msk [vmem:[#allocation4 + $0x148] sm:$0xff] %vm3032, %v3172
      %3223 = vst.msk [vmem:[#allocation4 + $0x150] sm:$0xff] %vm3032, %v3173
      %3224 = vst.msk [vmem:[#allocation4 + $0x158] sm:$0xff] %vm3032, %v3174
      %3225 = vst.msk [vmem:[#allocation4 + $0x160] sm:$0xff] %vm3032, %v3175
      %3226 = vst.msk [vmem:[#allocation4 + $0x168] sm:$0xff] %vm3032, %v3176
      %3227 = vst.msk [vmem:[#allocation4 + $0x170] sm:$0xff] %vm3032, %v3177
      %3228 = vst.msk [vmem:[#allocation4 + $0x178] sm:$0xff] %vm3032, %v3178
      %3229 = vst.msk [vmem:[#allocation4 + $0x180] sm:$0xff] %vm3032, %v3179
      %3230 = vst.msk [vmem:[#allocation4 + $0x188] sm:$0xff] %vm3032, %v3180
      %v3231 = vld [vmem:[#allocation3 + $0x1] sm:$0xff]
      %v3232 = vld [vmem:[#allocation3 + $0x9] sm:$0xff]
      %v3233 = vld [vmem:[#allocation3 + $0x11] sm:$0xff]
      %v3234 = vld [vmem:[#allocation3 + $0x19] sm:$0xff]
      %v3235 = vld [vmem:[#allocation3 + $0x21] sm:$0xff]
      %v3236 = vld [vmem:[#allocation3 + $0x29] sm:$0xff]
      %v3237 = vld [vmem:[#allocation3 + $0x31] sm:$0xff]
      %v3238 = vld [vmem:[#allocation3 + $0x39] sm:$0xff]
      %v3239 = vld [vmem:[#allocation3 + $0x41] sm:$0xff]
      %v3240 = vld [vmem:[#allocation3 + $0x49] sm:$0xff]
      %v3241 = vld [vmem:[#allocation3 + $0x51] sm:$0xff]
      %v3242 = vld [vmem:[#allocation3 + $0x59] sm:$0xff]
      %v3243 = vld [vmem:[#allocation3 + $0x61] sm:$0xff]
      %v3244 = vld [vmem:[#allocation3 + $0x69] sm:$0xff]
      %v3245 = vld [vmem:[#allocation3 + $0x71] sm:$0xff]
      %v3246 = vld [vmem:[#allocation3 + $0x79] sm:$0xff]
      %v3247 = vld [vmem:[#allocation3 + $0x81] sm:$0xff]
      %v3248 = vld [vmem:[#allocation3 + $0x89] sm:$0xff]
      %v3249 = vld [vmem:[#allocation3 + $0x91] sm:$0xff]
      %v3250 = vld [vmem:[#allocation3 + $0x99] sm:$0xff]
      %v3251 = vld [vmem:[#allocation3 + $0xa1] sm:$0xff]
      %v3252 = vld [vmem:[#allocation3 + $0xa9] sm:$0xff]
      %v3253 = vld [vmem:[#allocation3 + $0xb1] sm:$0xff]
      %v3254 = vld [vmem:[#allocation3 + $0xb9] sm:$0xff]
      %v3255 = vld [vmem:[#allocation3 + $0xc1] sm:$0xff]
      %v3256 = vld [vmem:[#allocation3 + $0xc9] sm:$0xff]
      %v3257 = vld [vmem:[#allocation3 + $0xd1] sm:$0xff]
      %v3258 = vld [vmem:[#allocation3 + $0xd9] sm:$0xff]
      %v3259 = vld [vmem:[#allocation3 + $0xe1] sm:$0xff]
      %v3260 = vld [vmem:[#allocation3 + $0xe9] sm:$0xff]
      %v3261 = vld [vmem:[#allocation3 + $0xf1] sm:$0xff]
      %v3262 = vld [vmem:[#allocation3 + $0xf9] sm:$0xff]
      %v3263 = vld [vmem:[#allocation3 + $0x101] sm:$0xff]
      %v3264 = vld [vmem:[#allocation3 + $0x109] sm:$0xff]
      %v3265 = vld [vmem:[#allocation3 + $0x111] sm:$0xff]
      %v3266 = vld [vmem:[#allocation3 + $0x119] sm:$0xff]
      %v3267 = vld [vmem:[#allocation3 + $0x121] sm:$0xff]
      %v3268 = vld [vmem:[#allocation3 + $0x129] sm:$0xff]
      %v3269 = vld [vmem:[#allocation3 + $0x131] sm:$0xff]
      %v3270 = vld [vmem:[#allocation3 + $0x139] sm:$0xff]
      %v3271 = vld [vmem:[#allocation3 + $0x141] sm:$0xff]
      %v3272 = vld [vmem:[#allocation3 + $0x149] sm:$0xff]
      %v3273 = vld [vmem:[#allocation3 + $0x151] sm:$0xff]
      %v3274 = vld [vmem:[#allocation3 + $0x159] sm:$0xff]
      %v3275 = vld [vmem:[#allocation3 + $0x161] sm:$0xff]
      %v3276 = vld [vmem:[#allocation3 + $0x169] sm:$0xff]
      %v3277 = vld [vmem:[#allocation3 + $0x171] sm:$0xff]
      %v3278 = vld [vmem:[#allocation3 + $0x179] sm:$0xff]
      %v3279 = vld [vmem:[#allocation3 + $0x181] sm:$0xff]
      %v3280 = vld [vmem:[#allocation3 + $0x189] sm:$0xff]
      %3331 = vrot.lane.b32.xlu0 %v3231, 8
      %v3332 = vpop.permute.xlu0 %3331
      %3333 = vrot.lane.b32.xlu0 %v3232, 8
      %v3334 = vpop.permute.xlu0 %3333
      %3335 = vrot.lane.b32.xlu0 %v3233, 8
      %v3336 = vpop.permute.xlu0 %3335
      %3337 = vrot.lane.b32.xlu0 %v3234, 8
      %v3338 = vpop.permute.xlu0 %3337
      %3339 = vrot.lane.b32.xlu0 %v3235, 8
      %v3340 = vpop.permute.xlu0 %3339
      %3341 = vrot.lane.b32.xlu0 %v3236, 8
      %v3342 = vpop.permute.xlu0 %3341
      %3343 = vrot.lane.b32.xlu0 %v3237, 8
      %v3344 = vpop.permute.xlu0 %3343
      %3345 = vrot.lane.b32.xlu0 %v3238, 8
      %v3346 = vpop.permute.xlu0 %3345
      %3347 = vrot.lane.b32.xlu0 %v3239, 8
      %v3348 = vpop.permute.xlu0 %3347
      %3349 = vrot.lane.b32.xlu0 %v3240, 8
      %v3350 = vpop.permute.xlu0 %3349
      %3351 = vrot.lane.b32.xlu0 %v3241, 8
      %v3352 = vpop.permute.xlu0 %3351
      %3353 = vrot.lane.b32.xlu0 %v3242, 8
      %v3354 = vpop.permute.xlu0 %3353
      %3355 = vrot.lane.b32.xlu0 %v3243, 8
      %v3356 = vpop.permute.xlu0 %3355
      %3357 = vrot.lane.b32.xlu0 %v3244, 8
      %v3358 = vpop.permute.xlu0 %3357
      %3359 = vrot.lane.b32.xlu0 %v3245, 8
      %v3360 = vpop.permute.xlu0 %3359
      %3361 = vrot.lane.b32.xlu0 %v3246, 8
      %v3362 = vpop.permute.xlu0 %3361
      %3363 = vrot.lane.b32.xlu0 %v3247, 8
      %v3364 = vpop.permute.xlu0 %3363
      %3365 = vrot.lane.b32.xlu0 %v3248, 8
      %v3366 = vpop.permute.xlu0 %3365
      %3367 = vrot.lane.b32.xlu0 %v3249, 8
      %v3368 = vpop.permute.xlu0 %3367
      %3369 = vrot.lane.b32.xlu0 %v3250, 8
      %v3370 = vpop.permute.xlu0 %3369
      %3371 = vrot.lane.b32.xlu0 %v3251, 8
      %v3372 = vpop.permute.xlu0 %3371
      %3373 = vrot.lane.b32.xlu0 %v3252, 8
      %v3374 = vpop.permute.xlu0 %3373
      %3375 = vrot.lane.b32.xlu0 %v3253, 8
      %v3376 = vpop.permute.xlu0 %3375
      %3377 = vrot.lane.b32.xlu0 %v3254, 8
      %v3378 = vpop.permute.xlu0 %3377
      %3379 = vrot.lane.b32.xlu0 %v3255, 8
      %v3380 = vpop.permute.xlu0 %3379
      %3381 = vrot.lane.b32.xlu0 %v3256, 8
      %v3382 = vpop.permute.xlu0 %3381
      %3383 = vrot.lane.b32.xlu0 %v3257, 8
      %v3384 = vpop.permute.xlu0 %3383
      %3385 = vrot.lane.b32.xlu0 %v3258, 8
      %v3386 = vpop.permute.xlu0 %3385
      %3387 = vrot.lane.b32.xlu0 %v3259, 8
      %v3388 = vpop.permute.xlu0 %3387
      %3389 = vrot.lane.b32.xlu0 %v3260, 8
      %v3390 = vpop.permute.xlu0 %3389
      %3391 = vrot.lane.b32.xlu0 %v3261, 8
      %v3392 = vpop.permute.xlu0 %3391
      %3393 = vrot.lane.b32.xlu0 %v3262, 8
      %v3394 = vpop.permute.xlu0 %3393
      %3395 = vrot.lane.b32.xlu0 %v3263, 8
      %v3396 = vpop.permute.xlu0 %3395
      %3397 = vrot.lane.b32.xlu0 %v3264, 8
      %v3398 = vpop.permute.xlu0 %3397
      %3399 = vrot.lane.b32.xlu0 %v3265, 8
      %v3400 = vpop.permute.xlu0 %3399
      %3401 = vrot.lane.b32.xlu0 %v3266, 8
      %v3402 = vpop.permute.xlu0 %3401
      %3403 = vrot.lane.b32.xlu0 %v3267, 8
      %v3404 = vpop.permute.xlu0 %3403
      %3405 = vrot.lane.b32.xlu0 %v3268, 8
      %v3406 = vpop.permute.xlu0 %3405
      %3407 = vrot.lane.b32.xlu0 %v3269, 8
      %v3408 = vpop.permute.xlu0 %3407
      %3409 = vrot.lane.b32.xlu0 %v3270, 8
      %v3410 = vpop.permute.xlu0 %3409
      %3411 = vrot.lane.b32.xlu0 %v3271, 8
      %v3412 = vpop.permute.xlu0 %3411
      %3413 = vrot.lane.b32.xlu0 %v3272, 8
      %v3414 = vpop.permute.xlu0 %3413
      %3415 = vrot.lane.b32.xlu0 %v3273, 8
      %v3416 = vpop.permute.xlu0 %3415
      %3417 = vrot.lane.b32.xlu0 %v3274, 8
      %v3418 = vpop.permute.xlu0 %3417
      %3419 = vrot.lane.b32.xlu0 %v3275, 8
      %v3420 = vpop.permute.xlu0 %3419
      %3421 = vrot.lane.b32.xlu0 %v3276, 8
      %v3422 = vpop.permute.xlu0 %3421
      %3423 = vrot.lane.b32.xlu0 %v3277, 8
      %v3424 = vpop.permute.xlu0 %3423
      %3425 = vrot.lane.b32.xlu0 %v3278, 8
      %v3426 = vpop.permute.xlu0 %3425
      %3427 = vrot.lane.b32.xlu0 %v3279, 8
      %v3428 = vpop.permute.xlu0 %3427
      %3429 = vrot.lane.b32.xlu0 %v3280, 8
      %v3430 = vpop.permute.xlu0 %3429
      %vm3481 = vcmask 130112
      %3482 = vst.msk [vmem:[#allocation4] sm:$0xff] %vm3481, %v3332
      %3483 = vst.msk [vmem:[#allocation4 + $0x8] sm:$0xff] %vm3481, %v3334
      %3484 = vst.msk [vmem:[#allocation4 + $0x10] sm:$0xff] %vm3481, %v3336
      %3485 = vst.msk [vmem:[#allocation4 + $0x18] sm:$0xff] %vm3481, %v3338
      %3486 = vst.msk [vmem:[#allocation4 + $0x20] sm:$0xff] %vm3481, %v3340
      %3487 = vst.msk [vmem:[#allocation4 + $0x28] sm:$0xff] %vm3481, %v3342
      %3488 = vst.msk [vmem:[#allocation4 + $0x30] sm:$0xff] %vm3481, %v3344
      %3489 = vst.msk [vmem:[#allocation4 + $0x38] sm:$0xff] %vm3481, %v3346
      %3490 = vst.msk [vmem:[#allocation4 + $0x40] sm:$0xff] %vm3481, %v3348
      %3491 = vst.msk [vmem:[#allocation4 + $0x48] sm:$0xff] %vm3481, %v3350
      %3492 = vst.msk [vmem:[#allocation4 + $0x50] sm:$0xff] %vm3481, %v3352
      %3493 = vst.msk [vmem:[#allocation4 + $0x58] sm:$0xff] %vm3481, %v3354
      %3494 = vst.msk [vmem:[#allocation4 + $0x60] sm:$0xff] %vm3481, %v3356
      %3495 = vst.msk [vmem:[#allocation4 + $0x68] sm:$0xff] %vm3481, %v3358
      %3496 = vst.msk [vmem:[#allocation4 + $0x70] sm:$0xff] %vm3481, %v3360
      %3497 = vst.msk [vmem:[#allocation4 + $0x78] sm:$0xff] %vm3481, %v3362
      %3498 = vst.msk [vmem:[#allocation4 + $0x80] sm:$0xff] %vm3481, %v3364
      %3499 = vst.msk [vmem:[#allocation4 + $0x88] sm:$0xff] %vm3481, %v3366
      %3500 = vst.msk [vmem:[#allocation4 + $0x90] sm:$0xff] %vm3481, %v3368
      %3501 = vst.msk [vmem:[#allocation4 + $0x98] sm:$0xff] %vm3481, %v3370
      %3502 = vst.msk [vmem:[#allocation4 + $0xa0] sm:$0xff] %vm3481, %v3372
      %3503 = vst.msk [vmem:[#allocation4 + $0xa8] sm:$0xff] %vm3481, %v3374
      %3504 = vst.msk [vmem:[#allocation4 + $0xb0] sm:$0xff] %vm3481, %v3376
      %3505 = vst.msk [vmem:[#allocation4 + $0xb8] sm:$0xff] %vm3481, %v3378
      %3506 = vst.msk [vmem:[#allocation4 + $0xc0] sm:$0xff] %vm3481, %v3380
      %3507 = vst.msk [vmem:[#allocation4 + $0xc8] sm:$0xff] %vm3481, %v3382
      %3508 = vst.msk [vmem:[#allocation4 + $0xd0] sm:$0xff] %vm3481, %v3384
      %3509 = vst.msk [vmem:[#allocation4 + $0xd8] sm:$0xff] %vm3481, %v3386
      %3510 = vst.msk [vmem:[#allocation4 + $0xe0] sm:$0xff] %vm3481, %v3388
      %3511 = vst.msk [vmem:[#allocation4 + $0xe8] sm:$0xff] %vm3481, %v3390
      %3512 = vst.msk [vmem:[#allocation4 + $0xf0] sm:$0xff] %vm3481, %v3392
      %3513 = vst.msk [vmem:[#allocation4 + $0xf8] sm:$0xff] %vm3481, %v3394
      %3514 = vst.msk [vmem:[#allocation4 + $0x100] sm:$0xff] %vm3481, %v3396
      %3515 = vst.msk [vmem:[#allocation4 + $0x108] sm:$0xff] %vm3481, %v3398
      %3516 = vst.msk [vmem:[#allocation4 + $0x110] sm:$0xff] %vm3481, %v3400
      %3517 = vst.msk [vmem:[#allocation4 + $0x118] sm:$0xff] %vm3481, %v3402
      %3518 = vst.msk [vmem:[#allocation4 + $0x120] sm:$0xff] %vm3481, %v3404
      %3519 = vst.msk [vmem:[#allocation4 + $0x128] sm:$0xff] %vm3481, %v3406
      %3520 = vst.msk [vmem:[#allocation4 + $0x130] sm:$0xff] %vm3481, %v3408
      %3521 = vst.msk [vmem:[#allocation4 + $0x138] sm:$0xff] %vm3481, %v3410
      %3522 = vst.msk [vmem:[#allocation4 + $0x140] sm:$0xff] %vm3481, %v3412
      %3523 = vst.msk [vmem:[#allocation4 + $0x148] sm:$0xff] %vm3481, %v3414
      %3524 = vst.msk [vmem:[#allocation4 + $0x150] sm:$0xff] %vm3481, %v3416
      %3525 = vst.msk [vmem:[#allocation4 + $0x158] sm:$0xff] %vm3481, %v3418
      %3526 = vst.msk [vmem:[#allocation4 + $0x160] sm:$0xff] %vm3481, %v3420
      %3527 = vst.msk [vmem:[#allocation4 + $0x168] sm:$0xff] %vm3481, %v3422
      %3528 = vst.msk [vmem:[#allocation4 + $0x170] sm:$0xff] %vm3481, %v3424
      %3529 = vst.msk [vmem:[#allocation4 + $0x178] sm:$0xff] %vm3481, %v3426
      %3530 = vst.msk [vmem:[#allocation4 + $0x180] sm:$0xff] %vm3481, %v3428
      %3531 = vst.msk [vmem:[#allocation4 + $0x188] sm:$0xff] %vm3481, %v3430
      %v3532 = vld [vmem:[#allocation3 + $0x2] sm:$0xff]
      %v3533 = vld [vmem:[#allocation3 + $0xa] sm:$0xff]
      %v3534 = vld [vmem:[#allocation3 + $0x12] sm:$0xff]
      %v3535 = vld [vmem:[#allocation3 + $0x1a] sm:$0xff]
      %v3536 = vld [vmem:[#allocation3 + $0x22] sm:$0xff]
      %v3537 = vld [vmem:[#allocation3 + $0x2a] sm:$0xff]
      %v3538 = vld [vmem:[#allocation3 + $0x32] sm:$0xff]
      %v3539 = vld [vmem:[#allocation3 + $0x3a] sm:$0xff]
      %v3540 = vld [vmem:[#allocation3 + $0x42] sm:$0xff]
      %v3541 = vld [vmem:[#allocation3 + $0x4a] sm:$0xff]
      %v3542 = vld [vmem:[#allocation3 + $0x52] sm:$0xff]
      %v3543 = vld [vmem:[#allocation3 + $0x5a] sm:$0xff]
      %v3544 = vld [vmem:[#allocation3 + $0x62] sm:$0xff]
      %v3545 = vld [vmem:[#allocation3 + $0x6a] sm:$0xff]
      %v3546 = vld [vmem:[#allocation3 + $0x72] sm:$0xff]
      %v3547 = vld [vmem:[#allocation3 + $0x7a] sm:$0xff]
      %v3548 = vld [vmem:[#allocation3 + $0x82] sm:$0xff]
      %v3549 = vld [vmem:[#allocation3 + $0x8a] sm:$0xff]
      %v3550 = vld [vmem:[#allocation3 + $0x92] sm:$0xff]
      %v3551 = vld [vmem:[#allocation3 + $0x9a] sm:$0xff]
      %v3552 = vld [vmem:[#allocation3 + $0xa2] sm:$0xff]
      %v3553 = vld [vmem:[#allocation3 + $0xaa] sm:$0xff]
      %v3554 = vld [vmem:[#allocation3 + $0xb2] sm:$0xff]
      %v3555 = vld [vmem:[#allocation3 + $0xba] sm:$0xff]
      %v3556 = vld [vmem:[#allocation3 + $0xc2] sm:$0xff]
      %v3557 = vld [vmem:[#allocation3 + $0xca] sm:$0xff]
      %v3558 = vld [vmem:[#allocation3 + $0xd2] sm:$0xff]
      %v3559 = vld [vmem:[#allocation3 + $0xda] sm:$0xff]
      %v3560 = vld [vmem:[#allocation3 + $0xe2] sm:$0xff]
      %v3561 = vld [vmem:[#allocation3 + $0xea] sm:$0xff]
      %v3562 = vld [vmem:[#allocation3 + $0xf2] sm:$0xff]
      %v3563 = vld [vmem:[#allocation3 + $0xfa] sm:$0xff]
      %v3564 = vld [vmem:[#allocation3 + $0x102] sm:$0xff]
      %v3565 = vld [vmem:[#allocation3 + $0x10a] sm:$0xff]
      %v3566 = vld [vmem:[#allocation3 + $0x112] sm:$0xff]
      %v3567 = vld [vmem:[#allocation3 + $0x11a] sm:$0xff]
      %v3568 = vld [vmem:[#allocation3 + $0x122] sm:$0xff]
      %v3569 = vld [vmem:[#allocation3 + $0x12a] sm:$0xff]
      %v3570 = vld [vmem:[#allocation3 + $0x132] sm:$0xff]
      %v3571 = vld [vmem:[#allocation3 + $0x13a] sm:$0xff]
      %v3572 = vld [vmem:[#allocation3 + $0x142] sm:$0xff]
      %v3573 = vld [vmem:[#allocation3 + $0x14a] sm:$0xff]
      %v3574 = vld [vmem:[#allocation3 + $0x152] sm:$0xff]
      %v3575 = vld [vmem:[#allocation3 + $0x15a] sm:$0xff]
      %v3576 = vld [vmem:[#allocation3 + $0x162] sm:$0xff]
      %v3577 = vld [vmem:[#allocation3 + $0x16a] sm:$0xff]
      %v3578 = vld [vmem:[#allocation3 + $0x172] sm:$0xff]
      %v3579 = vld [vmem:[#allocation3 + $0x17a] sm:$0xff]
      %v3580 = vld [vmem:[#allocation3 + $0x182] sm:$0xff]
      %v3581 = vld [vmem:[#allocation3 + $0x18a] sm:$0xff]
      %3632 = vrot.lane.b32.xlu0 %v3532, 16
      %v3633 = vpop.permute.xlu0 %3632
      %3634 = vrot.lane.b32.xlu0 %v3533, 16
      %v3635 = vpop.permute.xlu0 %3634
      %3636 = vrot.lane.b32.xlu0 %v3534, 16
      %v3637 = vpop.permute.xlu0 %3636
      %3638 = vrot.lane.b32.xlu0 %v3535, 16
      %v3639 = vpop.permute.xlu0 %3638
      %3640 = vrot.lane.b32.xlu0 %v3536, 16
      %v3641 = vpop.permute.xlu0 %3640
      %3642 = vrot.lane.b32.xlu0 %v3537, 16
      %v3643 = vpop.permute.xlu0 %3642
      %3644 = vrot.lane.b32.xlu0 %v3538, 16
      %v3645 = vpop.permute.xlu0 %3644
      %3646 = vrot.lane.b32.xlu0 %v3539, 16
      %v3647 = vpop.permute.xlu0 %3646
      %3648 = vrot.lane.b32.xlu0 %v3540, 16
      %v3649 = vpop.permute.xlu0 %3648
      %3650 = vrot.lane.b32.xlu0 %v3541, 16
      %v3651 = vpop.permute.xlu0 %3650
      %3652 = vrot.lane.b32.xlu0 %v3542, 16
      %v3653 = vpop.permute.xlu0 %3652
      %3654 = vrot.lane.b32.xlu0 %v3543, 16
      %v3655 = vpop.permute.xlu0 %3654
      %3656 = vrot.lane.b32.xlu0 %v3544, 16
      %v3657 = vpop.permute.xlu0 %3656
      %3658 = vrot.lane.b32.xlu0 %v3545, 16
      %v3659 = vpop.permute.xlu0 %3658
      %3660 = vrot.lane.b32.xlu0 %v3546, 16
      %v3661 = vpop.permute.xlu0 %3660
      %3662 = vrot.lane.b32.xlu0 %v3547, 16
      %v3663 = vpop.permute.xlu0 %3662
      %3664 = vrot.lane.b32.xlu0 %v3548, 16
      %v3665 = vpop.permute.xlu0 %3664
      %3666 = vrot.lane.b32.xlu0 %v3549, 16
      %v3667 = vpop.permute.xlu0 %3666
      %3668 = vrot.lane.b32.xlu0 %v3550, 16
      %v3669 = vpop.permute.xlu0 %3668
      %3670 = vrot.lane.b32.xlu0 %v3551, 16
      %v3671 = vpop.permute.xlu0 %3670
      %3672 = vrot.lane.b32.xlu0 %v3552, 16
      %v3673 = vpop.permute.xlu0 %3672
      %3674 = vrot.lane.b32.xlu0 %v3553, 16
      %v3675 = vpop.permute.xlu0 %3674
      %3676 = vrot.lane.b32.xlu0 %v3554, 16
      %v3677 = vpop.permute.xlu0 %3676
      %3678 = vrot.lane.b32.xlu0 %v3555, 16
      %v3679 = vpop.permute.xlu0 %3678
      %3680 = vrot.lane.b32.xlu0 %v3556, 16
      %v3681 = vpop.permute.xlu0 %3680
      %3682 = vrot.lane.b32.xlu0 %v3557, 16
      %v3683 = vpop.permute.xlu0 %3682
      %3684 = vrot.lane.b32.xlu0 %v3558, 16
      %v3685 = vpop.permute.xlu0 %3684
      %3686 = vrot.lane.b32.xlu0 %v3559, 16
      %v3687 = vpop.permute.xlu0 %3686
      %3688 = vrot.lane.b32.xlu0 %v3560, 16
      %v3689 = vpop.permute.xlu0 %3688
      %3690 = vrot.lane.b32.xlu0 %v3561, 16
      %v3691 = vpop.permute.xlu0 %3690
      %3692 = vrot.lane.b32.xlu0 %v3562, 16
      %v3693 = vpop.permute.xlu0 %3692
      %3694 = vrot.lane.b32.xlu0 %v3563, 16
      %v3695 = vpop.permute.xlu0 %3694
      %3696 = vrot.lane.b32.xlu0 %v3564, 16
      %v3697 = vpop.permute.xlu0 %3696
      %3698 = vrot.lane.b32.xlu0 %v3565, 16
      %v3699 = vpop.permute.xlu0 %3698
      %3700 = vrot.lane.b32.xlu0 %v3566, 16
      %v3701 = vpop.permute.xlu0 %3700
      %3702 = vrot.lane.b32.xlu0 %v3567, 16
      %v3703 = vpop.permute.xlu0 %3702
      %3704 = vrot.lane.b32.xlu0 %v3568, 16
      %v3705 = vpop.permute.xlu0 %3704
      %3706 = vrot.lane.b32.xlu0 %v3569, 16
      %v3707 = vpop.permute.xlu0 %3706
      %3708 = vrot.lane.b32.xlu0 %v3570, 16
      %v3709 = vpop.permute.xlu0 %3708
      %3710 = vrot.lane.b32.xlu0 %v3571, 16
      %v3711 = vpop.permute.xlu0 %3710
      %3712 = vrot.lane.b32.xlu0 %v3572, 16
      %v3713 = vpop.permute.xlu0 %3712
      %3714 = vrot.lane.b32.xlu0 %v3573, 16
      %v3715 = vpop.permute.xlu0 %3714
      %3716 = vrot.lane.b32.xlu0 %v3574, 16
      %v3717 = vpop.permute.xlu0 %3716
      %3718 = vrot.lane.b32.xlu0 %v3575, 16
      %v3719 = vpop.permute.xlu0 %3718
      %3720 = vrot.lane.b32.xlu0 %v3576, 16
      %v3721 = vpop.permute.xlu0 %3720
      %3722 = vrot.lane.b32.xlu0 %v3577, 16
      %v3723 = vpop.permute.xlu0 %3722
      %3724 = vrot.lane.b32.xlu0 %v3578, 16
      %v3725 = vpop.permute.xlu0 %3724
      %3726 = vrot.lane.b32.xlu0 %v3579, 16
      %v3727 = vpop.permute.xlu0 %3726
      %3728 = vrot.lane.b32.xlu0 %v3580, 16
      %v3729 = vpop.permute.xlu0 %3728
      %3730 = vrot.lane.b32.xlu0 %v3581, 16
      %v3731 = vpop.permute.xlu0 %3730
      %vm3782 = vcmask 195712
      %3783 = vst.msk [vmem:[#allocation4] sm:$0xff] %vm3782, %v3633
      %3784 = vst.msk [vmem:[#allocation4 + $0x8] sm:$0xff] %vm3782, %v3635
      %3785 = vst.msk [vmem:[#allocation4 + $0x10] sm:$0xff] %vm3782, %v3637
      %3786 = vst.msk [vmem:[#allocation4 + $0x18] sm:$0xff] %vm3782, %v3639
      %3787 = vst.msk [vmem:[#allocation4 + $0x20] sm:$0xff] %vm3782, %v3641
      %3788 = vst.msk [vmem:[#allocation4 + $0x28] sm:$0xff] %vm3782, %v3643
      %3789 = vst.msk [vmem:[#allocation4 + $0x30] sm:$0xff] %vm3782, %v3645
      %3790 = vst.msk [vmem:[#allocation4 + $0x38] sm:$0xff] %vm3782, %v3647
      %3791 = vst.msk [vmem:[#allocation4 + $0x40] sm:$0xff] %vm3782, %v3649
      %3792 = vst.msk [vmem:[#allocation4 + $0x48] sm:$0xff] %vm3782, %v3651
      %3793 = vst.msk [vmem:[#allocation4 + $0x50] sm:$0xff] %vm3782, %v3653
      %3794 = vst.msk [vmem:[#allocation4 + $0x58] sm:$0xff] %vm3782, %v3655
      %3795 = vst.msk [vmem:[#allocation4 + $0x60] sm:$0xff] %vm3782, %v3657
      %3796 = vst.msk [vmem:[#allocation4 + $0x68] sm:$0xff] %vm3782, %v3659
      %3797 = vst.msk [vmem:[#allocation4 + $0x70] sm:$0xff] %vm3782, %v3661
      %3798 = vst.msk [vmem:[#allocation4 + $0x78] sm:$0xff] %vm3782, %v3663
      %3799 = vst.msk [vmem:[#allocation4 + $0x80] sm:$0xff] %vm3782, %v3665
      %3800 = vst.msk [vmem:[#allocation4 + $0x88] sm:$0xff] %vm3782, %v3667
      %3801 = vst.msk [vmem:[#allocation4 + $0x90] sm:$0xff] %vm3782, %v3669
      %3802 = vst.msk [vmem:[#allocation4 + $0x98] sm:$0xff] %vm3782, %v3671
      %3803 = vst.msk [vmem:[#allocation4 + $0xa0] sm:$0xff] %vm3782, %v3673
      %3804 = vst.msk [vmem:[#allocation4 + $0xa8] sm:$0xff] %vm3782, %v3675
      %3805 = vst.msk [vmem:[#allocation4 + $0xb0] sm:$0xff] %vm3782, %v3677
      %3806 = vst.msk [vmem:[#allocation4 + $0xb8] sm:$0xff] %vm3782, %v3679
      %3807 = vst.msk [vmem:[#allocation4 + $0xc0] sm:$0xff] %vm3782, %v3681
      %3808 = vst.msk [vmem:[#allocation4 + $0xc8] sm:$0xff] %vm3782, %v3683
      %3809 = vst.msk [vmem:[#allocation4 + $0xd0] sm:$0xff] %vm3782, %v3685
      %3810 = vst.msk [vmem:[#allocation4 + $0xd8] sm:$0xff] %vm3782, %v3687
      %3811 = vst.msk [vmem:[#allocation4 + $0xe0] sm:$0xff] %vm3782, %v3689
      %3812 = vst.msk [vmem:[#allocation4 + $0xe8] sm:$0xff] %vm3782, %v3691
      %3813 = vst.msk [vmem:[#allocation4 + $0xf0] sm:$0xff] %vm3782, %v3693
      %3814 = vst.msk [vmem:[#allocation4 + $0xf8] sm:$0xff] %vm3782, %v3695
      %3815 = vst.msk [vmem:[#allocation4 + $0x100] sm:$0xff] %vm3782, %v3697
      %3816 = vst.msk [vmem:[#allocation4 + $0x108] sm:$0xff] %vm3782, %v3699
      %3817 = vst.msk [vmem:[#allocation4 + $0x110] sm:$0xff] %vm3782, %v3701
      %3818 = vst.msk [vmem:[#allocation4 + $0x118] sm:$0xff] %vm3782, %v3703
      %3819 = vst.msk [vmem:[#allocation4 + $0x120] sm:$0xff] %vm3782, %v3705
      %3820 = vst.msk [vmem:[#allocation4 + $0x128] sm:$0xff] %vm3782, %v3707
      %3821 = vst.msk [vmem:[#allocation4 + $0x130] sm:$0xff] %vm3782, %v3709
      %3822 = vst.msk [vmem:[#allocation4 + $0x138] sm:$0xff] %vm3782, %v3711
      %3823 = vst.msk [vmem:[#allocation4 + $0x140] sm:$0xff] %vm3782, %v3713
      %3824 = vst.msk [vmem:[#allocation4 + $0x148] sm:$0xff] %vm3782, %v3715
      %3825 = vst.msk [vmem:[#allocation4 + $0x150] sm:$0xff] %vm3782, %v3717
      %3826 = vst.msk [vmem:[#allocation4 + $0x158] sm:$0xff] %vm3782, %v3719
      %3827 = vst.msk [vmem:[#allocation4 + $0x160] sm:$0xff] %vm3782, %v3721
      %3828 = vst.msk [vmem:[#allocation4 + $0x168] sm:$0xff] %vm3782, %v3723
      %3829 = vst.msk [vmem:[#allocation4 + $0x170] sm:$0xff] %vm3782, %v3725
      %3830 = vst.msk [vmem:[#allocation4 + $0x178] sm:$0xff] %vm3782, %v3727
      %3831 = vst.msk [vmem:[#allocation4 + $0x180] sm:$0xff] %vm3782, %v3729
      %3832 = vst.msk [vmem:[#allocation4 + $0x188] sm:$0xff] %vm3782, %v3731
      %v3833 = vld [vmem:[#allocation3 + $0x14] sm:$0xff]
      %v3834 = vld [vmem:[#allocation3 + $0x1c] sm:$0xff]
      %v3835 = vld [vmem:[#allocation3 + $0x24] sm:$0xff]
      %v3836 = vld [vmem:[#allocation3 + $0x2c] sm:$0xff]
      %v3837 = vld [vmem:[#allocation3 + $0x34] sm:$0xff]
      %v3838 = vld [vmem:[#allocation3 + $0x3c] sm:$0xff]
      %v3839 = vld [vmem:[#allocation3 + $0x44] sm:$0xff]
      %v3840 = vld [vmem:[#allocation3 + $0x4c] sm:$0xff]
      %v3841 = vld [vmem:[#allocation3 + $0x54] sm:$0xff]
      %v3842 = vld [vmem:[#allocation3 + $0x5c] sm:$0xff]
      %v3843 = vld [vmem:[#allocation3 + $0x64] sm:$0xff]
      %v3844 = vld [vmem:[#allocation3 + $0x6c] sm:$0xff]
      %v3845 = vld [vmem:[#allocation3 + $0x74] sm:$0xff]
      %v3846 = vld [vmem:[#allocation3 + $0x7c] sm:$0xff]
      %v3847 = vld [vmem:[#allocation3 + $0x84] sm:$0xff]
      %v3848 = vld [vmem:[#allocation3 + $0x8c] sm:$0xff]
      %v3849 = vld [vmem:[#allocation3 + $0x94] sm:$0xff]
      %v3850 = vld [vmem:[#allocation3 + $0x9c] sm:$0xff]
      %v3851 = vld [vmem:[#allocation3 + $0xa4] sm:$0xff]
      %v3852 = vld [vmem:[#allocation3 + $0xac] sm:$0xff]
      %v3853 = vld [vmem:[#allocation3 + $0xb4] sm:$0xff]
      %v3854 = vld [vmem:[#allocation3 + $0xbc] sm:$0xff]
      %v3855 = vld [vmem:[#allocation3 + $0xc4] sm:$0xff]
      %v3856 = vld [vmem:[#allocation3 + $0xcc] sm:$0xff]
      %v3857 = vld [vmem:[#allocation3 + $0xd4] sm:$0xff]
      %v3858 = vld [vmem:[#allocation3 + $0xdc] sm:$0xff]
      %v3859 = vld [vmem:[#allocation3 + $0xe4] sm:$0xff]
      %v3860 = vld [vmem:[#allocation3 + $0xec] sm:$0xff]
      %v3861 = vld [vmem:[#allocation3 + $0xf4] sm:$0xff]
      %v3862 = vld [vmem:[#allocation3 + $0xfc] sm:$0xff]
      %v3863 = vld [vmem:[#allocation3 + $0x104] sm:$0xff]
      %v3864 = vld [vmem:[#allocation3 + $0x10c] sm:$0xff]
      %v3865 = vld [vmem:[#allocation3 + $0x114] sm:$0xff]
      %v3866 = vld [vmem:[#allocation3 + $0x11c] sm:$0xff]
      %v3867 = vld [vmem:[#allocation3 + $0x124] sm:$0xff]
      %v3868 = vld [vmem:[#allocation3 + $0x12c] sm:$0xff]
      %v3869 = vld [vmem:[#allocation3 + $0x134] sm:$0xff]
      %v3870 = vld [vmem:[#allocation3 + $0x13c] sm:$0xff]
      %v3871 = vld [vmem:[#allocation3 + $0x144] sm:$0xff]
      %v3872 = vld [vmem:[#allocation3 + $0x14c] sm:$0xff]
      %v3873 = vld [vmem:[#allocation3 + $0x154] sm:$0xff]
      %v3874 = vld [vmem:[#allocation3 + $0x15c] sm:$0xff]
      %v3875 = vld [vmem:[#allocation3 + $0x164] sm:$0xff]
      %v3876 = vld [vmem:[#allocation3 + $0x16c] sm:$0xff]
      %v3877 = vld [vmem:[#allocation3 + $0x174] sm:$0xff]
      %v3878 = vld [vmem:[#allocation3 + $0x17c] sm:$0xff]
      %v3879 = vld [vmem:[#allocation3 + $0x184] sm:$0xff]
      %v3880 = vld [vmem:[#allocation3 + $0x18c] sm:$0xff]
      %v3881 = vld [vmem:[#allocation3 + $0x194] sm:$0xff]
      %v3882 = vld [vmem:[#allocation3 + $0x19c] sm:$0xff]
      %3933 = vrot.lane.b32.xlu0 %v3833, 24
      %v3934 = vpop.permute.xlu0 %3933
      %3935 = vrot.lane.b32.xlu0 %v3834, 24
      %v3936 = vpop.permute.xlu0 %3935
      %3937 = vrot.lane.b32.xlu0 %v3835, 24
      %v3938 = vpop.permute.xlu0 %3937
      %3939 = vrot.lane.b32.xlu0 %v3836, 24
      %v3940 = vpop.permute.xlu0 %3939
      %3941 = vrot.lane.b32.xlu0 %v3837, 24
      %v3942 = vpop.permute.xlu0 %3941
      %3943 = vrot.lane.b32.xlu0 %v3838, 24
      %v3944 = vpop.permute.xlu0 %3943
      %3945 = vrot.lane.b32.xlu0 %v3839, 24
      %v3946 = vpop.permute.xlu0 %3945
      %3947 = vrot.lane.b32.xlu0 %v3840, 24
      %v3948 = vpop.permute.xlu0 %3947
      %3949 = vrot.lane.b32.xlu0 %v3841, 24
      %v3950 = vpop.permute.xlu0 %3949
      %3951 = vrot.lane.b32.xlu0 %v3842, 24
      %v3952 = vpop.permute.xlu0 %3951
      %3953 = vrot.lane.b32.xlu0 %v3843, 24
      %v3954 = vpop.permute.xlu0 %3953
      %3955 = vrot.lane.b32.xlu0 %v3844, 24
      %v3956 = vpop.permute.xlu0 %3955
      %3957 = vrot.lane.b32.xlu0 %v3845, 24
      %v3958 = vpop.permute.xlu0 %3957
      %3959 = vrot.lane.b32.xlu0 %v3846, 24
      %v3960 = vpop.permute.xlu0 %3959
      %3961 = vrot.lane.b32.xlu0 %v3847, 24
      %v3962 = vpop.permute.xlu0 %3961
      %3963 = vrot.lane.b32.xlu0 %v3848, 24
      %v3964 = vpop.permute.xlu0 %3963
      %3965 = vrot.lane.b32.xlu0 %v3849, 24
      %v3966 = vpop.permute.xlu0 %3965
      %3967 = vrot.lane.b32.xlu0 %v3850, 24
      %v3968 = vpop.permute.xlu0 %3967
      %3969 = vrot.lane.b32.xlu0 %v3851, 24
      %v3970 = vpop.permute.xlu0 %3969
      %3971 = vrot.lane.b32.xlu0 %v3852, 24
      %v3972 = vpop.permute.xlu0 %3971
      %3973 = vrot.lane.b32.xlu0 %v3853, 24
      %v3974 = vpop.permute.xlu0 %3973
      %3975 = vrot.lane.b32.xlu0 %v3854, 24
      %v3976 = vpop.permute.xlu0 %3975
      %3977 = vrot.lane.b32.xlu0 %v3855, 24
      %v3978 = vpop.permute.xlu0 %3977
      %3979 = vrot.lane.b32.xlu0 %v3856, 24
      %v3980 = vpop.permute.xlu0 %3979
      %3981 = vrot.lane.b32.xlu0 %v3857, 24
      %v3982 = vpop.permute.xlu0 %3981
      %3983 = vrot.lane.b32.xlu0 %v3858, 24
      %v3984 = vpop.permute.xlu0 %3983
      %3985 = vrot.lane.b32.xlu0 %v3859, 24
      %v3986 = vpop.permute.xlu0 %3985
      %3987 = vrot.lane.b32.xlu0 %v3860, 24
      %v3988 = vpop.permute.xlu0 %3987
      %3989 = vrot.lane.b32.xlu0 %v3861, 24
      %v3990 = vpop.permute.xlu0 %3989
      %3991 = vrot.lane.b32.xlu0 %v3862, 24
      %v3992 = vpop.permute.xlu0 %3991
      %3993 = vrot.lane.b32.xlu0 %v3863, 24
      %v3994 = vpop.permute.xlu0 %3993
      %3995 = vrot.lane.b32.xlu0 %v3864, 24
      %v3996 = vpop.permute.xlu0 %3995
      %3997 = vrot.lane.b32.xlu0 %v3865, 24
      %v3998 = vpop.permute.xlu0 %3997
      %3999 = vrot.lane.b32.xlu0 %v3866, 24
      %v4000 = vpop.permute.xlu0 %3999
      %4001 = vrot.lane.b32.xlu0 %v3867, 24
      %v4002 = vpop.permute.xlu0 %4001
      %4003 = vrot.lane.b32.xlu0 %v3868, 24
      %v4004 = vpop.permute.xlu0 %4003
      %4005 = vrot.lane.b32.xlu0 %v3869, 24
      %v4006 = vpop.permute.xlu0 %4005
      %4007 = vrot.lane.b32.xlu0 %v3870, 24
      %v4008 = vpop.permute.xlu0 %4007
      %4009 = vrot.lane.b32.xlu0 %v3871, 24
      %v4010 = vpop.permute.xlu0 %4009
      %4011 = vrot.lane.b32.xlu0 %v3872, 24
      %v4012 = vpop.permute.xlu0 %4011
      %4013 = vrot.lane.b32.xlu0 %v3873, 24
      %v4014 = vpop.permute.xlu0 %4013
      %4015 = vrot.lane.b32.xlu0 %v3874, 24
      %v4016 = vpop.permute.xlu0 %4015
      %4017 = vrot.lane.b32.xlu0 %v3875, 24
      %v4018 = vpop.permute.xlu0 %4017
      %4019 = vrot.lane.b32.xlu0 %v3876, 24
      %v4020 = vpop.permute.xlu0 %4019
      %4021 = vrot.lane.b32.xlu0 %v3877, 24
      %v4022 = vpop.permute.xlu0 %4021
      %4023 = vrot.lane.b32.xlu0 %v3878, 24
      %v4024 = vpop.permute.xlu0 %4023
      %4025 = vrot.lane.b32.xlu0 %v3879, 24
      %v4026 = vpop.permute.xlu0 %4025
      %4027 = vrot.lane.b32.xlu0 %v3880, 24
      %v4028 = vpop.permute.xlu0 %4027
      %4029 = vrot.lane.b32.xlu0 %v3881, 24
      %v4030 = vpop.permute.xlu0 %4029
      %4031 = vrot.lane.b32.xlu0 %v3882, 24
      %v4032 = vpop.permute.xlu0 %4031
      %vm4083 = vcmask 261312
      %4084 = vst.msk [vmem:[#allocation4] sm:$0xff] %vm4083, %v3934
      %4085 = vst.msk [vmem:[#allocation4 + $0x8] sm:$0xff] %vm4083, %v3936
      %4086 = vst.msk [vmem:[#allocation4 + $0x10] sm:$0xff] %vm4083, %v3938
      %4087 = vst.msk [vmem:[#allocation4 + $0x18] sm:$0xff] %vm4083, %v3940
      %4088 = vst.msk [vmem:[#allocation4 + $0x20] sm:$0xff] %vm4083, %v3942
      %4089 = vst.msk [vmem:[#allocation4 + $0x28] sm:$0xff] %vm4083, %v3944
      %4090 = vst.msk [vmem:[#allocation4 + $0x30] sm:$0xff] %vm4083, %v3946
      %4091 = vst.msk [vmem:[#allocation4 + $0x38] sm:$0xff] %vm4083, %v3948
      %4092 = vst.msk [vmem:[#allocation4 + $0x40] sm:$0xff] %vm4083, %v3950
      %4093 = vst.msk [vmem:[#allocation4 + $0x48] sm:$0xff] %vm4083, %v3952
      %4094 = vst.msk [vmem:[#allocation4 + $0x50] sm:$0xff] %vm4083, %v3954
      %4095 = vst.msk [vmem:[#allocation4 + $0x58] sm:$0xff] %vm4083, %v3956
      %4096 = vst.msk [vmem:[#allocation4 + $0x60] sm:$0xff] %vm4083, %v3958
      %4097 = vst.msk [vmem:[#allocation4 + $0x68] sm:$0xff] %vm4083, %v3960
      %4098 = vst.msk [vmem:[#allocation4 + $0x70] sm:$0xff] %vm4083, %v3962
      %4099 = vst.msk [vmem:[#allocation4 + $0x78] sm:$0xff] %vm4083, %v3964
      %4100 = vst.msk [vmem:[#allocation4 + $0x80] sm:$0xff] %vm4083, %v3966
      %4101 = vst.msk [vmem:[#allocation4 + $0x88] sm:$0xff] %vm4083, %v3968
      %4102 = vst.msk [vmem:[#allocation4 + $0x90] sm:$0xff] %vm4083, %v3970
      %4103 = vst.msk [vmem:[#allocation4 + $0x98] sm:$0xff] %vm4083, %v3972
      %4104 = vst.msk [vmem:[#allocation4 + $0xa0] sm:$0xff] %vm4083, %v3974
      %4105 = vst.msk [vmem:[#allocation4 + $0xa8] sm:$0xff] %vm4083, %v3976
      %4106 = vst.msk [vmem:[#allocation4 + $0xb0] sm:$0xff] %vm4083, %v3978
      %4107 = vst.msk [vmem:[#allocation4 + $0xb8] sm:$0xff] %vm4083, %v3980
      %4108 = vst.msk [vmem:[#allocation4 + $0xc0] sm:$0xff] %vm4083, %v3982
      %4109 = vst.msk [vmem:[#allocation4 + $0xc8] sm:$0xff] %vm4083, %v3984
      %4110 = vst.msk [vmem:[#allocation4 + $0xd0] sm:$0xff] %vm4083, %v3986
      %4111 = vst.msk [vmem:[#allocation4 + $0xd8] sm:$0xff] %vm4083, %v3988
      %4112 = vst.msk [vmem:[#allocation4 + $0xe0] sm:$0xff] %vm4083, %v3990
      %4113 = vst.msk [vmem:[#allocation4 + $0xe8] sm:$0xff] %vm4083, %v3992
      %4114 = vst.msk [vmem:[#allocation4 + $0xf0] sm:$0xff] %vm4083, %v3994
      %4115 = vst.msk [vmem:[#allocation4 + $0xf8] sm:$0xff] %vm4083, %v3996
      %4116 = vst.msk [vmem:[#allocation4 + $0x100] sm:$0xff] %vm4083, %v3998
      %4117 = vst.msk [vmem:[#allocation4 + $0x108] sm:$0xff] %vm4083, %v4000
      %4118 = vst.msk [vmem:[#allocation4 + $0x110] sm:$0xff] %vm4083, %v4002
      %4119 = vst.msk [vmem:[#allocation4 + $0x118] sm:$0xff] %vm4083, %v4004
      %4120 = vst.msk [vmem:[#allocation4 + $0x120] sm:$0xff] %vm4083, %v4006
      %4121 = vst.msk [vmem:[#allocation4 + $0x128] sm:$0xff] %vm4083, %v4008
      %4122 = vst.msk [vmem:[#allocation4 + $0x130] sm:$0xff] %vm4083, %v4010
      %4123 = vst.msk [vmem:[#allocation4 + $0x138] sm:$0xff] %vm4083, %v4012
      %4124 = vst.msk [vmem:[#allocation4 + $0x140] sm:$0xff] %vm4083, %v4014
      %4125 = vst.msk [vmem:[#allocation4 + $0x148] sm:$0xff] %vm4083, %v4016
      %4126 = vst.msk [vmem:[#allocation4 + $0x150] sm:$0xff] %vm4083, %v4018
      %4127 = vst.msk [vmem:[#allocation4 + $0x158] sm:$0xff] %vm4083, %v4020
      %4128 = vst.msk [vmem:[#allocation4 + $0x160] sm:$0xff] %vm4083, %v4022
      %4129 = vst.msk [vmem:[#allocation4 + $0x168] sm:$0xff] %vm4083, %v4024
      %4130 = vst.msk [vmem:[#allocation4 + $0x170] sm:$0xff] %vm4083, %v4026
      %4131 = vst.msk [vmem:[#allocation4 + $0x178] sm:$0xff] %vm4083, %v4028
      %4132 = vst.msk [vmem:[#allocation4 + $0x180] sm:$0xff] %vm4083, %v4030
      %4133 = vst.msk [vmem:[#allocation4 + $0x188] sm:$0xff] %vm4083, %v4032
      %v4134 = vld [vmem:[#allocation3 + $0x15] sm:$0xff]
      %v4135 = vld [vmem:[#allocation3 + $0x1d] sm:$0xff]
      %v4136 = vld [vmem:[#allocation3 + $0x25] sm:$0xff]
      %v4137 = vld [vmem:[#allocation3 + $0x2d] sm:$0xff]
      %v4138 = vld [vmem:[#allocation3 + $0x35] sm:$0xff]
      %v4139 = vld [vmem:[#allocation3 + $0x3d] sm:$0xff]
      %v4140 = vld [vmem:[#allocation3 + $0x45] sm:$0xff]
      %v4141 = vld [vmem:[#allocation3 + $0x4d] sm:$0xff]
      %v4142 = vld [vmem:[#allocation3 + $0x55] sm:$0xff]
      %v4143 = vld [vmem:[#allocation3 + $0x5d] sm:$0xff]
      %v4144 = vld [vmem:[#allocation3 + $0x65] sm:$0xff]
      %v4145 = vld [vmem:[#allocation3 + $0x6d] sm:$0xff]
      %v4146 = vld [vmem:[#allocation3 + $0x75] sm:$0xff]
      %v4147 = vld [vmem:[#allocation3 + $0x7d] sm:$0xff]
      %v4148 = vld [vmem:[#allocation3 + $0x85] sm:$0xff]
      %v4149 = vld [vmem:[#allocation3 + $0x8d] sm:$0xff]
      %v4150 = vld [vmem:[#allocation3 + $0x95] sm:$0xff]
      %v4151 = vld [vmem:[#allocation3 + $0x9d] sm:$0xff]
      %v4152 = vld [vmem:[#allocation3 + $0xa5] sm:$0xff]
      %v4153 = vld [vmem:[#allocation3 + $0xad] sm:$0xff]
      %v4154 = vld [vmem:[#allocation3 + $0xb5] sm:$0xff]
      %v4155 = vld [vmem:[#allocation3 + $0xbd] sm:$0xff]
      %v4156 = vld [vmem:[#allocation3 + $0xc5] sm:$0xff]
      %v4157 = vld [vmem:[#allocation3 + $0xcd] sm:$0xff]
      %v4158 = vld [vmem:[#allocation3 + $0xd5] sm:$0xff]
      %v4159 = vld [vmem:[#allocation3 + $0xdd] sm:$0xff]
      %v4160 = vld [vmem:[#allocation3 + $0xe5] sm:$0xff]
      %v4161 = vld [vmem:[#allocation3 + $0xed] sm:$0xff]
      %v4162 = vld [vmem:[#allocation3 + $0xf5] sm:$0xff]
      %v4163 = vld [vmem:[#allocation3 + $0xfd] sm:$0xff]
      %v4164 = vld [vmem:[#allocation3 + $0x105] sm:$0xff]
      %v4165 = vld [vmem:[#allocation3 + $0x10d] sm:$0xff]
      %v4166 = vld [vmem:[#allocation3 + $0x115] sm:$0xff]
      %v4167 = vld [vmem:[#allocation3 + $0x11d] sm:$0xff]
      %v4168 = vld [vmem:[#allocation3 + $0x125] sm:$0xff]
      %v4169 = vld [vmem:[#allocation3 + $0x12d] sm:$0xff]
      %v4170 = vld [vmem:[#allocation3 + $0x135] sm:$0xff]
      %v4171 = vld [vmem:[#allocation3 + $0x13d] sm:$0xff]
      %v4172 = vld [vmem:[#allocation3 + $0x145] sm:$0xff]
      %v4173 = vld [vmem:[#allocation3 + $0x14d] sm:$0xff]
      %v4174 = vld [vmem:[#allocation3 + $0x155] sm:$0xff]
      %v4175 = vld [vmem:[#allocation3 + $0x15d] sm:$0xff]
      %v4176 = vld [vmem:[#allocation3 + $0x165] sm:$0xff]
      %v4177 = vld [vmem:[#allocation3 + $0x16d] sm:$0xff]
      %v4178 = vld [vmem:[#allocation3 + $0x175] sm:$0xff]
      %v4179 = vld [vmem:[#allocation3 + $0x17d] sm:$0xff]
      %v4180 = vld [vmem:[#allocation3 + $0x185] sm:$0xff]
      %v4181 = vld [vmem:[#allocation3 + $0x18d] sm:$0xff]
      %v4182 = vld [vmem:[#allocation3 + $0x195] sm:$0xff]
      %v4183 = vld [vmem:[#allocation3 + $0x19d] sm:$0xff]
      %4234 = vrot.lane.b32.xlu0 %v4134, 32
      %v4235 = vpop.permute.xlu0 %4234
      %4236 = vrot.lane.b32.xlu0 %v4135, 32
      %v4237 = vpop.permute.xlu0 %4236
      %4238 = vrot.lane.b32.xlu0 %v4136, 32
      %v4239 = vpop.permute.xlu0 %4238
      %4240 = vrot.lane.b32.xlu0 %v4137, 32
      %v4241 = vpop.permute.xlu0 %4240
      %4242 = vrot.lane.b32.xlu0 %v4138, 32
      %v4243 = vpop.permute.xlu0 %4242
      %4244 = vrot.lane.b32.xlu0 %v4139, 32
      %v4245 = vpop.permute.xlu0 %4244
      %4246 = vrot.lane.b32.xlu0 %v4140, 32
      %v4247 = vpop.permute.xlu0 %4246
      %4248 = vrot.lane.b32.xlu0 %v4141, 32
      %v4249 = vpop.permute.xlu0 %4248
      %4250 = vrot.lane.b32.xlu0 %v4142, 32
      %v4251 = vpop.permute.xlu0 %4250
      %4252 = vrot.lane.b32.xlu0 %v4143, 32
      %v4253 = vpop.permute.xlu0 %4252
      %4254 = vrot.lane.b32.xlu0 %v4144, 32
      %v4255 = vpop.permute.xlu0 %4254
      %4256 = vrot.lane.b32.xlu0 %v4145, 32
      %v4257 = vpop.permute.xlu0 %4256
      %4258 = vrot.lane.b32.xlu0 %v4146, 32
      %v4259 = vpop.permute.xlu0 %4258
      %4260 = vrot.lane.b32.xlu0 %v4147, 32
      %v4261 = vpop.permute.xlu0 %4260
      %4262 = vrot.lane.b32.xlu0 %v4148, 32
      %v4263 = vpop.permute.xlu0 %4262
      %4264 = vrot.lane.b32.xlu0 %v4149, 32
      %v4265 = vpop.permute.xlu0 %4264
      %4266 = vrot.lane.b32.xlu0 %v4150, 32
      %v4267 = vpop.permute.xlu0 %4266
      %4268 = vrot.lane.b32.xlu0 %v4151, 32
      %v4269 = vpop.permute.xlu0 %4268
      %4270 = vrot.lane.b32.xlu0 %v4152, 32
      %v4271 = vpop.permute.xlu0 %4270
      %4272 = vrot.lane.b32.xlu0 %v4153, 32
      %v4273 = vpop.permute.xlu0 %4272
      %4274 = vrot.lane.b32.xlu0 %v4154, 32
      %v4275 = vpop.permute.xlu0 %4274
      %4276 = vrot.lane.b32.xlu0 %v4155, 32
      %v4277 = vpop.permute.xlu0 %4276
      %4278 = vrot.lane.b32.xlu0 %v4156, 32
      %v4279 = vpop.permute.xlu0 %4278
      %4280 = vrot.lane.b32.xlu0 %v4157, 32
      %v4281 = vpop.permute.xlu0 %4280
      %4282 = vrot.lane.b32.xlu0 %v4158, 32
      %v4283 = vpop.permute.xlu0 %4282
      %4284 = vrot.lane.b32.xlu0 %v4159, 32
      %v4285 = vpop.permute.xlu0 %4284
      %4286 = vrot.lane.b32.xlu0 %v4160, 32
      %v4287 = vpop.permute.xlu0 %4286
      %4288 = vrot.lane.b32.xlu0 %v4161, 32
      %v4289 = vpop.permute.xlu0 %4288
      %4290 = vrot.lane.b32.xlu0 %v4162, 32
      %v4291 = vpop.permute.xlu0 %4290
      %4292 = vrot.lane.b32.xlu0 %v4163, 32
      %v4293 = vpop.permute.xlu0 %4292
      %4294 = vrot.lane.b32.xlu0 %v4164, 32
      %v4295 = vpop.permute.xlu0 %4294
      %4296 = vrot.lane.b32.xlu0 %v4165, 32
      %v4297 = vpop.permute.xlu0 %4296
      %4298 = vrot.lane.b32.xlu0 %v4166, 32
      %v4299 = vpop.permute.xlu0 %4298
      %4300 = vrot.lane.b32.xlu0 %v4167, 32
      %v4301 = vpop.permute.xlu0 %4300
      %4302 = vrot.lane.b32.xlu0 %v4168, 32
      %v4303 = vpop.permute.xlu0 %4302
      %4304 = vrot.lane.b32.xlu0 %v4169, 32
      %v4305 = vpop.permute.xlu0 %4304
      %4306 = vrot.lane.b32.xlu0 %v4170, 32
      %v4307 = vpop.permute.xlu0 %4306
      %4308 = vrot.lane.b32.xlu0 %v4171, 32
      %v4309 = vpop.permute.xlu0 %4308
      %4310 = vrot.lane.b32.xlu0 %v4172, 32
      %v4311 = vpop.permute.xlu0 %4310
      %4312 = vrot.lane.b32.xlu0 %v4173, 32
      %v4313 = vpop.permute.xlu0 %4312
      %4314 = vrot.lane.b32.xlu0 %v4174, 32
      %v4315 = vpop.permute.xlu0 %4314
      %4316 = vrot.lane.b32.xlu0 %v4175, 32
      %v4317 = vpop.permute.xlu0 %4316
      %4318 = vrot.lane.b32.xlu0 %v4176, 32
      %v4319 = vpop.permute.xlu0 %4318
      %4320 = vrot.lane.b32.xlu0 %v4177, 32
      %v4321 = vpop.permute.xlu0 %4320
      %4322 = vrot.lane.b32.xlu0 %v4178, 32
      %v4323 = vpop.permute.xlu0 %4322
      %4324 = vrot.lane.b32.xlu0 %v4179, 32
      %v4325 = vpop.permute.xlu0 %4324
      %4326 = vrot.lane.b32.xlu0 %v4180, 32
      %v4327 = vpop.permute.xlu0 %4326
      %4328 = vrot.lane.b32.xlu0 %v4181, 32
      %v4329 = vpop.permute.xlu0 %4328
      %4330 = vrot.lane.b32.xlu0 %v4182, 32
      %v4331 = vpop.permute.xlu0 %4330
      %4332 = vrot.lane.b32.xlu0 %v4183, 32
      %v4333 = vpop.permute.xlu0 %4332
      %vm4384 = vcmask 326912
      %4385 = vst.msk [vmem:[#allocation4] sm:$0xff] %vm4384, %v4235
      %4386 = vst.msk [vmem:[#allocation4 + $0x8] sm:$0xff] %vm4384, %v4237
      %4387 = vst.msk [vmem:[#allocation4 + $0x10] sm:$0xff] %vm4384, %v4239
      %4388 = vst.msk [vmem:[#allocation4 + $0x18] sm:$0xff] %vm4384, %v4241
      %4389 = vst.msk [vmem:[#allocation4 + $0x20] sm:$0xff] %vm4384, %v4243
      %4390 = vst.msk [vmem:[#allocation4 + $0x28] sm:$0xff] %vm4384, %v4245
      %4391 = vst.msk [vmem:[#allocation4 + $0x30] sm:$0xff] %vm4384, %v4247
      %4392 = vst.msk [vmem:[#allocation4 + $0x38] sm:$0xff] %vm4384, %v4249
      %4393 = vst.msk [vmem:[#allocation4 + $0x40] sm:$0xff] %vm4384, %v4251
      %4394 = vst.msk [vmem:[#allocation4 + $0x48] sm:$0xff] %vm4384, %v4253
      %4395 = vst.msk [vmem:[#allocation4 + $0x50] sm:$0xff] %vm4384, %v4255
      %4396 = vst.msk [vmem:[#allocation4 + $0x58] sm:$0xff] %vm4384, %v4257
      %4397 = vst.msk [vmem:[#allocation4 + $0x60] sm:$0xff] %vm4384, %v4259
      %4398 = vst.msk [vmem:[#allocation4 + $0x68] sm:$0xff] %vm4384, %v4261
      %4399 = vst.msk [vmem:[#allocation4 + $0x70] sm:$0xff] %vm4384, %v4263
      %4400 = vst.msk [vmem:[#allocation4 + $0x78] sm:$0xff] %vm4384, %v4265
      %4401 = vst.msk [vmem:[#allocation4 + $0x80] sm:$0xff] %vm4384, %v4267
      %4402 = vst.msk [vmem:[#allocation4 + $0x88] sm:$0xff] %vm4384, %v4269
      %4403 = vst.msk [vmem:[#allocation4 + $0x90] sm:$0xff] %vm4384, %v4271
      %4404 = vst.msk [vmem:[#allocation4 + $0x98] sm:$0xff] %vm4384, %v4273
      %4405 = vst.msk [vmem:[#allocation4 + $0xa0] sm:$0xff] %vm4384, %v4275
      %4406 = vst.msk [vmem:[#allocation4 + $0xa8] sm:$0xff] %vm4384, %v4277
      %4407 = vst.msk [vmem:[#allocation4 + $0xb0] sm:$0xff] %vm4384, %v4279
      %4408 = vst.msk [vmem:[#allocation4 + $0xb8] sm:$0xff] %vm4384, %v4281
      %4409 = vst.msk [vmem:[#allocation4 + $0xc0] sm:$0xff] %vm4384, %v4283
      %4410 = vst.msk [vmem:[#allocation4 + $0xc8] sm:$0xff] %vm4384, %v4285
      %4411 = vst.msk [vmem:[#allocation4 + $0xd0] sm:$0xff] %vm4384, %v4287
      %4412 = vst.msk [vmem:[#allocation4 + $0xd8] sm:$0xff] %vm4384, %v4289
      %4413 = vst.msk [vmem:[#allocation4 + $0xe0] sm:$0xff] %vm4384, %v4291
      %4414 = vst.msk [vmem:[#allocation4 + $0xe8] sm:$0xff] %vm4384, %v4293
      %4415 = vst.msk [vmem:[#allocation4 + $0xf0] sm:$0xff] %vm4384, %v4295
      %4416 = vst.msk [vmem:[#allocation4 + $0xf8] sm:$0xff] %vm4384, %v4297
      %4417 = vst.msk [vmem:[#allocation4 + $0x100] sm:$0xff] %vm4384, %v4299
      %4418 = vst.msk [vmem:[#allocation4 + $0x108] sm:$0xff] %vm4384, %v4301
      %4419 = vst.msk [vmem:[#allocation4 + $0x110] sm:$0xff] %vm4384, %v4303
      %4420 = vst.msk [vmem:[#allocation4 + $0x118] sm:$0xff] %vm4384, %v4305
      %4421 = vst.msk [vmem:[#allocation4 + $0x120] sm:$0xff] %vm4384, %v4307
      %4422 = vst.msk [vmem:[#allocation4 + $0x128] sm:$0xff] %vm4384, %v4309
      %4423 = vst.msk [vmem:[#allocation4 + $0x130] sm:$0xff] %vm4384, %v4311
      %4424 = vst.msk [vmem:[#allocation4 + $0x138] sm:$0xff] %vm4384, %v4313
      %4425 = vst.msk [vmem:[#allocation4 + $0x140] sm:$0xff] %vm4384, %v4315
      %4426 = vst.msk [vmem:[#allocation4 + $0x148] sm:$0xff] %vm4384, %v4317
      %4427 = vst.msk [vmem:[#allocation4 + $0x150] sm:$0xff] %vm4384, %v4319
      %4428 = vst.msk [vmem:[#allocation4 + $0x158] sm:$0xff] %vm4384, %v4321
      %4429 = vst.msk [vmem:[#allocation4 + $0x160] sm:$0xff] %vm4384, %v4323
      %4430 = vst.msk [vmem:[#allocation4 + $0x168] sm:$0xff] %vm4384, %v4325
      %4431 = vst.msk [vmem:[#allocation4 + $0x170] sm:$0xff] %vm4384, %v4327
      %4432 = vst.msk [vmem:[#allocation4 + $0x178] sm:$0xff] %vm4384, %v4329
      %4433 = vst.msk [vmem:[#allocation4 + $0x180] sm:$0xff] %vm4384, %v4331
      %4434 = vst.msk [vmem:[#allocation4 + $0x188] sm:$0xff] %vm4384, %v4333
      %v4435 = vld [vmem:[#allocation3 + $0x16] sm:$0xff]
      %v4436 = vld [vmem:[#allocation3 + $0x1e] sm:$0xff]
      %v4437 = vld [vmem:[#allocation3 + $0x26] sm:$0xff]
      %v4438 = vld [vmem:[#allocation3 + $0x2e] sm:$0xff]
      %v4439 = vld [vmem:[#allocation3 + $0x36] sm:$0xff]
      %v4440 = vld [vmem:[#allocation3 + $0x3e] sm:$0xff]
      %v4441 = vld [vmem:[#allocation3 + $0x46] sm:$0xff]
      %v4442 = vld [vmem:[#allocation3 + $0x4e] sm:$0xff]
      %v4443 = vld [vmem:[#allocation3 + $0x56] sm:$0xff]
      %v4444 = vld [vmem:[#allocation3 + $0x5e] sm:$0xff]
      %v4445 = vld [vmem:[#allocation3 + $0x66] sm:$0xff]
      %v4446 = vld [vmem:[#allocation3 + $0x6e] sm:$0xff]
      %v4447 = vld [vmem:[#allocation3 + $0x76] sm:$0xff]
      %v4448 = vld [vmem:[#allocation3 + $0x7e] sm:$0xff]
      %v4449 = vld [vmem:[#allocation3 + $0x86] sm:$0xff]
      %v4450 = vld [vmem:[#allocation3 + $0x8e] sm:$0xff]
      %v4451 = vld [vmem:[#allocation3 + $0x96] sm:$0xff]
      %v4452 = vld [vmem:[#allocation3 + $0x9e] sm:$0xff]
      %v4453 = vld [vmem:[#allocation3 + $0xa6] sm:$0xff]
      %v4454 = vld [vmem:[#allocation3 + $0xae] sm:$0xff]
      %v4455 = vld [vmem:[#allocation3 + $0xb6] sm:$0xff]
      %v4456 = vld [vmem:[#allocation3 + $0xbe] sm:$0xff]
      %v4457 = vld [vmem:[#allocation3 + $0xc6] sm:$0xff]
      %v4458 = vld [vmem:[#allocation3 + $0xce] sm:$0xff]
      %v4459 = vld [vmem:[#allocation3 + $0xd6] sm:$0xff]
      %v4460 = vld [vmem:[#allocation3 + $0xde] sm:$0xff]
      %v4461 = vld [vmem:[#allocation3 + $0xe6] sm:$0xff]
      %v4462 = vld [vmem:[#allocation3 + $0xee] sm:$0xff]
      %v4463 = vld [vmem:[#allocation3 + $0xf6] sm:$0xff]
      %v4464 = vld [vmem:[#allocation3 + $0xfe] sm:$0xff]
      %v4465 = vld [vmem:[#allocation3 + $0x106] sm:$0xff]
      %v4466 = vld [vmem:[#allocation3 + $0x10e] sm:$0xff]
      %v4467 = vld [vmem:[#allocation3 + $0x116] sm:$0xff]
      %v4468 = vld [vmem:[#allocation3 + $0x11e] sm:$0xff]
      %v4469 = vld [vmem:[#allocation3 + $0x126] sm:$0xff]
      %v4470 = vld [vmem:[#allocation3 + $0x12e] sm:$0xff]
      %v4471 = vld [vmem:[#allocation3 + $0x136] sm:$0xff]
      %v4472 = vld [vmem:[#allocation3 + $0x13e] sm:$0xff]
      %v4473 = vld [vmem:[#allocation3 + $0x146] sm:$0xff]
      %v4474 = vld [vmem:[#allocation3 + $0x14e] sm:$0xff]
      %v4475 = vld [vmem:[#allocation3 + $0x156] sm:$0xff]
      %v4476 = vld [vmem:[#allocation3 + $0x15e] sm:$0xff]
      %v4477 = vld [vmem:[#allocation3 + $0x166] sm:$0xff]
      %v4478 = vld [vmem:[#allocation3 + $0x16e] sm:$0xff]
      %v4479 = vld [vmem:[#allocation3 + $0x176] sm:$0xff]
      %v4480 = vld [vmem:[#allocation3 + $0x17e] sm:$0xff]
      %v4481 = vld [vmem:[#allocation3 + $0x186] sm:$0xff]
      %v4482 = vld [vmem:[#allocation3 + $0x18e] sm:$0xff]
      %v4483 = vld [vmem:[#allocation3 + $0x196] sm:$0xff]
      %v4484 = vld [vmem:[#allocation3 + $0x19e] sm:$0xff]
      %4535 = vrot.lane.b32.xlu0 %v4435, 40
      %v4536 = vpop.permute.xlu0 %4535
      %4537 = vrot.lane.b32.xlu0 %v4436, 40
      %v4538 = vpop.permute.xlu0 %4537
      %4539 = vrot.lane.b32.xlu0 %v4437, 40
      %v4540 = vpop.permute.xlu0 %4539
      %4541 = vrot.lane.b32.xlu0 %v4438, 40
      %v4542 = vpop.permute.xlu0 %4541
      %4543 = vrot.lane.b32.xlu0 %v4439, 40
      %v4544 = vpop.permute.xlu0 %4543
      %4545 = vrot.lane.b32.xlu0 %v4440, 40
      %v4546 = vpop.permute.xlu0 %4545
      %4547 = vrot.lane.b32.xlu0 %v4441, 40
      %v4548 = vpop.permute.xlu0 %4547
      %4549 = vrot.lane.b32.xlu0 %v4442, 40
      %v4550 = vpop.permute.xlu0 %4549
      %4551 = vrot.lane.b32.xlu0 %v4443, 40
      %v4552 = vpop.permute.xlu0 %4551
      %4553 = vrot.lane.b32.xlu0 %v4444, 40
      %v4554 = vpop.permute.xlu0 %4553
      %4555 = vrot.lane.b32.xlu0 %v4445, 40
      %v4556 = vpop.permute.xlu0 %4555
      %4557 = vrot.lane.b32.xlu0 %v4446, 40
      %v4558 = vpop.permute.xlu0 %4557
      %4559 = vrot.lane.b32.xlu0 %v4447, 40
      %v4560 = vpop.permute.xlu0 %4559
      %4561 = vrot.lane.b32.xlu0 %v4448, 40
      %v4562 = vpop.permute.xlu0 %4561
      %4563 = vrot.lane.b32.xlu0 %v4449, 40
      %v4564 = vpop.permute.xlu0 %4563
      %4565 = vrot.lane.b32.xlu0 %v4450, 40
      %v4566 = vpop.permute.xlu0 %4565
      %4567 = vrot.lane.b32.xlu0 %v4451, 40
      %v4568 = vpop.permute.xlu0 %4567
      %4569 = vrot.lane.b32.xlu0 %v4452, 40
      %v4570 = vpop.permute.xlu0 %4569
      %4571 = vrot.lane.b32.xlu0 %v4453, 40
      %v4572 = vpop.permute.xlu0 %4571
      %4573 = vrot.lane.b32.xlu0 %v4454, 40
      %v4574 = vpop.permute.xlu0 %4573
      %4575 = vrot.lane.b32.xlu0 %v4455, 40
      %v4576 = vpop.permute.xlu0 %4575
      %4577 = vrot.lane.b32.xlu0 %v4456, 40
      %v4578 = vpop.permute.xlu0 %4577
      %4579 = vrot.lane.b32.xlu0 %v4457, 40
      %v4580 = vpop.permute.xlu0 %4579
      %4581 = vrot.lane.b32.xlu0 %v4458, 40
      %v4582 = vpop.permute.xlu0 %4581
      %4583 = vrot.lane.b32.xlu0 %v4459, 40
      %v4584 = vpop.permute.xlu0 %4583
      %4585 = vrot.lane.b32.xlu0 %v4460, 40
      %v4586 = vpop.permute.xlu0 %4585
      %4587 = vrot.lane.b32.xlu0 %v4461, 40
      %v4588 = vpop.permute.xlu0 %4587
      %4589 = vrot.lane.b32.xlu0 %v4462, 40
      %v4590 = vpop.permute.xlu0 %4589
      %4591 = vrot.lane.b32.xlu0 %v4463, 40
      %v4592 = vpop.permute.xlu0 %4591
      %4593 = vrot.lane.b32.xlu0 %v4464, 40
      %v4594 = vpop.permute.xlu0 %4593
      %4595 = vrot.lane.b32.xlu0 %v4465, 40
      %v4596 = vpop.permute.xlu0 %4595
      %4597 = vrot.lane.b32.xlu0 %v4466, 40
      %v4598 = vpop.permute.xlu0 %4597
      %4599 = vrot.lane.b32.xlu0 %v4467, 40
      %v4600 = vpop.permute.xlu0 %4599
      %4601 = vrot.lane.b32.xlu0 %v4468, 40
      %v4602 = vpop.permute.xlu0 %4601
      %4603 = vrot.lane.b32.xlu0 %v4469, 40
      %v4604 = vpop.permute.xlu0 %4603
      %4605 = vrot.lane.b32.xlu0 %v4470, 40
      %v4606 = vpop.permute.xlu0 %4605
      %4607 = vrot.lane.b32.xlu0 %v4471, 40
      %v4608 = vpop.permute.xlu0 %4607
      %4609 = vrot.lane.b32.xlu0 %v4472, 40
      %v4610 = vpop.permute.xlu0 %4609
      %4611 = vrot.lane.b32.xlu0 %v4473, 40
      %v4612 = vpop.permute.xlu0 %4611
      %4613 = vrot.lane.b32.xlu0 %v4474, 40
      %v4614 = vpop.permute.xlu0 %4613
      %4615 = vrot.lane.b32.xlu0 %v4475, 40
      %v4616 = vpop.permute.xlu0 %4615
      %4617 = vrot.lane.b32.xlu0 %v4476, 40
      %v4618 = vpop.permute.xlu0 %4617
      %4619 = vrot.lane.b32.xlu0 %v4477, 40
      %v4620 = vpop.permute.xlu0 %4619
      %4621 = vrot.lane.b32.xlu0 %v4478, 40
      %v4622 = vpop.permute.xlu0 %4621
      %4623 = vrot.lane.b32.xlu0 %v4479, 40
      %v4624 = vpop.permute.xlu0 %4623
      %4625 = vrot.lane.b32.xlu0 %v4480, 40
      %v4626 = vpop.permute.xlu0 %4625
      %4627 = vrot.lane.b32.xlu0 %v4481, 40
      %v4628 = vpop.permute.xlu0 %4627
      %4629 = vrot.lane.b32.xlu0 %v4482, 40
      %v4630 = vpop.permute.xlu0 %4629
      %4631 = vrot.lane.b32.xlu0 %v4483, 40
      %v4632 = vpop.permute.xlu0 %4631
      %4633 = vrot.lane.b32.xlu0 %v4484, 40
      %v4634 = vpop.permute.xlu0 %4633
      %vm4685 = vcmask 392512
      %4686 = vst.msk [vmem:[#allocation4] sm:$0xff] %vm4685, %v4536
      %4687 = vst.msk [vmem:[#allocation4 + $0x8] sm:$0xff] %vm4685, %v4538
      %4688 = vst.msk [vmem:[#allocation4 + $0x10] sm:$0xff] %vm4685, %v4540
      %4689 = vst.msk [vmem:[#allocation4 + $0x18] sm:$0xff] %vm4685, %v4542
      %4690 = vst.msk [vmem:[#allocation4 + $0x20] sm:$0xff] %vm4685, %v4544
      %4691 = vst.msk [vmem:[#allocation4 + $0x28] sm:$0xff] %vm4685, %v4546
      %4692 = vst.msk [vmem:[#allocation4 + $0x30] sm:$0xff] %vm4685, %v4548
      %4693 = vst.msk [vmem:[#allocation4 + $0x38] sm:$0xff] %vm4685, %v4550
      %4694 = vst.msk [vmem:[#allocation4 + $0x40] sm:$0xff] %vm4685, %v4552
      %4695 = vst.msk [vmem:[#allocation4 + $0x48] sm:$0xff] %vm4685, %v4554
      %4696 = vst.msk [vmem:[#allocation4 + $0x50] sm:$0xff] %vm4685, %v4556
      %4697 = vst.msk [vmem:[#allocation4 + $0x58] sm:$0xff] %vm4685, %v4558
      %4698 = vst.msk [vmem:[#allocation4 + $0x60] sm:$0xff] %vm4685, %v4560
      %4699 = vst.msk [vmem:[#allocation4 + $0x68] sm:$0xff] %vm4685, %v4562
      %4700 = vst.msk [vmem:[#allocation4 + $0x70] sm:$0xff] %vm4685, %v4564
      %4701 = vst.msk [vmem:[#allocation4 + $0x78] sm:$0xff] %vm4685, %v4566
      %4702 = vst.msk [vmem:[#allocation4 + $0x80] sm:$0xff] %vm4685, %v4568
      %4703 = vst.msk [vmem:[#allocation4 + $0x88] sm:$0xff] %vm4685, %v4570
      %4704 = vst.msk [vmem:[#allocation4 + $0x90] sm:$0xff] %vm4685, %v4572
      %4705 = vst.msk [vmem:[#allocation4 + $0x98] sm:$0xff] %vm4685, %v4574
      %4706 = vst.msk [vmem:[#allocation4 + $0xa0] sm:$0xff] %vm4685, %v4576
      %4707 = vst.msk [vmem:[#allocation4 + $0xa8] sm:$0xff] %vm4685, %v4578
      %4708 = vst.msk [vmem:[#allocation4 + $0xb0] sm:$0xff] %vm4685, %v4580
      %4709 = vst.msk [vmem:[#allocation4 + $0xb8] sm:$0xff] %vm4685, %v4582
      %4710 = vst.msk [vmem:[#allocation4 + $0xc0] sm:$0xff] %vm4685, %v4584
      %4711 = vst.msk [vmem:[#allocation4 + $0xc8] sm:$0xff] %vm4685, %v4586
      %4712 = vst.msk [vmem:[#allocation4 + $0xd0] sm:$0xff] %vm4685, %v4588
      %4713 = vst.msk [vmem:[#allocation4 + $0xd8] sm:$0xff] %vm4685, %v4590
      %4714 = vst.msk [vmem:[#allocation4 + $0xe0] sm:$0xff] %vm4685, %v4592
      %4715 = vst.msk [vmem:[#allocation4 + $0xe8] sm:$0xff] %vm4685, %v4594
      %4716 = vst.msk [vmem:[#allocation4 + $0xf0] sm:$0xff] %vm4685, %v4596
      %4717 = vst.msk [vmem:[#allocation4 + $0xf8] sm:$0xff] %vm4685, %v4598
      %4718 = vst.msk [vmem:[#allocation4 + $0x100] sm:$0xff] %vm4685, %v4600
      %4719 = vst.msk [vmem:[#allocation4 + $0x108] sm:$0xff] %vm4685, %v4602
      %4720 = vst.msk [vmem:[#allocation4 + $0x110] sm:$0xff] %vm4685, %v4604
      %4721 = vst.msk [vmem:[#allocation4 + $0x118] sm:$0xff] %vm4685, %v4606
      %4722 = vst.msk [vmem:[#allocation4 + $0x120] sm:$0xff] %vm4685, %v4608
      %4723 = vst.msk [vmem:[#allocation4 + $0x128] sm:$0xff] %vm4685, %v4610
      %4724 = vst.msk [vmem:[#allocation4 + $0x130] sm:$0xff] %vm4685, %v4612
      %4725 = vst.msk [vmem:[#allocation4 + $0x138] sm:$0xff] %vm4685, %v4614
      %4726 = vst.msk [vmem:[#allocation4 + $0x140] sm:$0xff] %vm4685, %v4616
      %4727 = vst.msk [vmem:[#allocation4 + $0x148] sm:$0xff] %vm4685, %v4618
      %4728 = vst.msk [vmem:[#allocation4 + $0x150] sm:$0xff] %vm4685, %v4620
      %4729 = vst.msk [vmem:[#allocation4 + $0x158] sm:$0xff] %vm4685, %v4622
      %4730 = vst.msk [vmem:[#allocation4 + $0x160] sm:$0xff] %vm4685, %v4624
      %4731 = vst.msk [vmem:[#allocation4 + $0x168] sm:$0xff] %vm4685, %v4626
      %4732 = vst.msk [vmem:[#allocation4 + $0x170] sm:$0xff] %vm4685, %v4628
      %4733 = vst.msk [vmem:[#allocation4 + $0x178] sm:$0xff] %vm4685, %v4630
      %4734 = vst.msk [vmem:[#allocation4 + $0x180] sm:$0xff] %vm4685, %v4632
      %4735 = vst.msk [vmem:[#allocation4 + $0x188] sm:$0xff] %vm4685, %v4634
      %v4736 = vld [vmem:[#allocation3 + $0x28] sm:$0xff]
      %v4737 = vld [vmem:[#allocation3 + $0x30] sm:$0xff]
      %v4738 = vld [vmem:[#allocation3 + $0x38] sm:$0xff]
      %v4739 = vld [vmem:[#allocation3 + $0x40] sm:$0xff]
      %v4740 = vld [vmem:[#allocation3 + $0x48] sm:$0xff]
      %v4741 = vld [vmem:[#allocation3 + $0x50] sm:$0xff]
      %v4742 = vld [vmem:[#allocation3 + $0x58] sm:$0xff]
      %v4743 = vld [vmem:[#allocation3 + $0x60] sm:$0xff]
      %v4744 = vld [vmem:[#allocation3 + $0x68] sm:$0xff]
      %v4745 = vld [vmem:[#allocation3 + $0x70] sm:$0xff]
      %v4746 = vld [vmem:[#allocation3 + $0x78] sm:$0xff]
      %v4747 = vld [vmem:[#allocation3 + $0x80] sm:$0xff]
      %v4748 = vld [vmem:[#allocation3 + $0x88] sm:$0xff]
      %v4749 = vld [vmem:[#allocation3 + $0x90] sm:$0xff]
      %v4750 = vld [vmem:[#allocation3 + $0x98] sm:$0xff]
      %v4751 = vld [vmem:[#allocation3 + $0xa0] sm:$0xff]
      %v4752 = vld [vmem:[#allocation3 + $0xa8] sm:$0xff]
      %v4753 = vld [vmem:[#allocation3 + $0xb0] sm:$0xff]
      %v4754 = vld [vmem:[#allocation3 + $0xb8] sm:$0xff]
      %v4755 = vld [vmem:[#allocation3 + $0xc0] sm:$0xff]
      %v4756 = vld [vmem:[#allocation3 + $0xc8] sm:$0xff]
      %v4757 = vld [vmem:[#allocation3 + $0xd0] sm:$0xff]
      %v4758 = vld [vmem:[#allocation3 + $0xd8] sm:$0xff]
      %v4759 = vld [vmem:[#allocation3 + $0xe0] sm:$0xff]
      %v4760 = vld [vmem:[#allocation3 + $0xe8] sm:$0xff]
      %v4761 = vld [vmem:[#allocation3 + $0xf0] sm:$0xff]
      %v4762 = vld [vmem:[#allocation3 + $0xf8] sm:$0xff]
      %v4763 = vld [vmem:[#allocation3 + $0x100] sm:$0xff]
      %v4764 = vld [vmem:[#allocation3 + $0x108] sm:$0xff]
      %v4765 = vld [vmem:[#allocation3 + $0x110] sm:$0xff]
      %v4766 = vld [vmem:[#allocation3 + $0x118] sm:$0xff]
      %v4767 = vld [vmem:[#allocation3 + $0x120] sm:$0xff]
      %v4768 = vld [vmem:[#allocation3 + $0x128] sm:$0xff]
      %v4769 = vld [vmem:[#allocation3 + $0x130] sm:$0xff]
      %v4770 = vld [vmem:[#allocation3 + $0x138] sm:$0xff]
      %v4771 = vld [vmem:[#allocation3 + $0x140] sm:$0xff]
      %v4772 = vld [vmem:[#allocation3 + $0x148] sm:$0xff]
      %v4773 = vld [vmem:[#allocation3 + $0x150] sm:$0xff]
      %v4774 = vld [vmem:[#allocation3 + $0x158] sm:$0xff]
      %v4775 = vld [vmem:[#allocation3 + $0x160] sm:$0xff]
      %v4776 = vld [vmem:[#allocation3 + $0x168] sm:$0xff]
      %v4777 = vld [vmem:[#allocation3 + $0x170] sm:$0xff]
      %v4778 = vld [vmem:[#allocation3 + $0x178] sm:$0xff]
      %v4779 = vld [vmem:[#allocation3 + $0x180] sm:$0xff]
      %v4780 = vld [vmem:[#allocation3 + $0x188] sm:$0xff]
      %v4781 = vld [vmem:[#allocation3 + $0x190] sm:$0xff]
      %v4782 = vld [vmem:[#allocation3 + $0x198] sm:$0xff]
      %v4783 = vld [vmem:[#allocation3 + $0x1a0] sm:$0xff]
      %v4784 = vld [vmem:[#allocation3 + $0x1a8] sm:$0xff]
      %v4785 = vld [vmem:[#allocation3 + $0x1b0] sm:$0xff]
      %4836 = vrot.lane.b32.xlu0 %v4736, 48
      %v4837 = vpop.permute.xlu0 %4836
      %4838 = vrot.lane.b32.xlu0 %v4737, 48
      %v4839 = vpop.permute.xlu0 %4838
      %4840 = vrot.lane.b32.xlu0 %v4738, 48
      %v4841 = vpop.permute.xlu0 %4840
      %4842 = vrot.lane.b32.xlu0 %v4739, 48
      %v4843 = vpop.permute.xlu0 %4842
      %4844 = vrot.lane.b32.xlu0 %v4740, 48
      %v4845 = vpop.permute.xlu0 %4844
      %4846 = vrot.lane.b32.xlu0 %v4741, 48
      %v4847 = vpop.permute.xlu0 %4846
      %4848 = vrot.lane.b32.xlu0 %v4742, 48
      %v4849 = vpop.permute.xlu0 %4848
      %4850 = vrot.lane.b32.xlu0 %v4743, 48
      %v4851 = vpop.permute.xlu0 %4850
      %4852 = vrot.lane.b32.xlu0 %v4744, 48
      %v4853 = vpop.permute.xlu0 %4852
      %4854 = vrot.lane.b32.xlu0 %v4745, 48
      %v4855 = vpop.permute.xlu0 %4854
      %4856 = vrot.lane.b32.xlu0 %v4746, 48
      %v4857 = vpop.permute.xlu0 %4856
      %4858 = vrot.lane.b32.xlu0 %v4747, 48
      %v4859 = vpop.permute.xlu0 %4858
      %4860 = vrot.lane.b32.xlu0 %v4748, 48
      %v4861 = vpop.permute.xlu0 %4860
      %4862 = vrot.lane.b32.xlu0 %v4749, 48
      %v4863 = vpop.permute.xlu0 %4862
      %4864 = vrot.lane.b32.xlu0 %v4750, 48
      %v4865 = vpop.permute.xlu0 %4864
      %4866 = vrot.lane.b32.xlu0 %v4751, 48
      %v4867 = vpop.permute.xlu0 %4866
      %4868 = vrot.lane.b32.xlu0 %v4752, 48
      %v4869 = vpop.permute.xlu0 %4868
      %4870 = vrot.lane.b32.xlu0 %v4753, 48
      %v4871 = vpop.permute.xlu0 %4870
      %4872 = vrot.lane.b32.xlu0 %v4754, 48
      %v4873 = vpop.permute.xlu0 %4872
      %4874 = vrot.lane.b32.xlu0 %v4755, 48
      %v4875 = vpop.permute.xlu0 %4874
      %4876 = vrot.lane.b32.xlu0 %v4756, 48
      %v4877 = vpop.permute.xlu0 %4876
      %4878 = vrot.lane.b32.xlu0 %v4757, 48
      %v4879 = vpop.permute.xlu0 %4878
      %4880 = vrot.lane.b32.xlu0 %v4758, 48
      %v4881 = vpop.permute.xlu0 %4880
      %4882 = vrot.lane.b32.xlu0 %v4759, 48
      %v4883 = vpop.permute.xlu0 %4882
      %4884 = vrot.lane.b32.xlu0 %v4760, 48
      %v4885 = vpop.permute.xlu0 %4884
      %4886 = vrot.lane.b32.xlu0 %v4761, 48
      %v4887 = vpop.permute.xlu0 %4886
      %4888 = vrot.lane.b32.xlu0 %v4762, 48
      %v4889 = vpop.permute.xlu0 %4888
      %4890 = vrot.lane.b32.xlu0 %v4763, 48
      %v4891 = vpop.permute.xlu0 %4890
      %4892 = vrot.lane.b32.xlu0 %v4764, 48
      %v4893 = vpop.permute.xlu0 %4892
      %4894 = vrot.lane.b32.xlu0 %v4765, 48
      %v4895 = vpop.permute.xlu0 %4894
      %4896 = vrot.lane.b32.xlu0 %v4766, 48
      %v4897 = vpop.permute.xlu0 %4896
      %4898 = vrot.lane.b32.xlu0 %v4767, 48
      %v4899 = vpop.permute.xlu0 %4898
      %4900 = vrot.lane.b32.xlu0 %v4768, 48
      %v4901 = vpop.permute.xlu0 %4900
      %4902 = vrot.lane.b32.xlu0 %v4769, 48
      %v4903 = vpop.permute.xlu0 %4902
      %4904 = vrot.lane.b32.xlu0 %v4770, 48
      %v4905 = vpop.permute.xlu0 %4904
      %4906 = vrot.lane.b32.xlu0 %v4771, 48
      %v4907 = vpop.permute.xlu0 %4906
      %4908 = vrot.lane.b32.xlu0 %v4772, 48
      %v4909 = vpop.permute.xlu0 %4908
      %4910 = vrot.lane.b32.xlu0 %v4773, 48
      %v4911 = vpop.permute.xlu0 %4910
      %4912 = vrot.lane.b32.xlu0 %v4774, 48
      %v4913 = vpop.permute.xlu0 %4912
      %4914 = vrot.lane.b32.xlu0 %v4775, 48
      %v4915 = vpop.permute.xlu0 %4914
      %4916 = vrot.lane.b32.xlu0 %v4776, 48
      %v4917 = vpop.permute.xlu0 %4916
      %4918 = vrot.lane.b32.xlu0 %v4777, 48
      %v4919 = vpop.permute.xlu0 %4918
      %4920 = vrot.lane.b32.xlu0 %v4778, 48
      %v4921 = vpop.permute.xlu0 %4920
      %4922 = vrot.lane.b32.xlu0 %v4779, 48
      %v4923 = vpop.permute.xlu0 %4922
      %4924 = vrot.lane.b32.xlu0 %v4780, 48
      %v4925 = vpop.permute.xlu0 %4924
      %4926 = vrot.lane.b32.xlu0 %v4781, 48
      %v4927 = vpop.permute.xlu0 %4926
      %4928 = vrot.lane.b32.xlu0 %v4782, 48
      %v4929 = vpop.permute.xlu0 %4928
      %4930 = vrot.lane.b32.xlu0 %v4783, 48
      %v4931 = vpop.permute.xlu0 %4930
      %4932 = vrot.lane.b32.xlu0 %v4784, 48
      %v4933 = vpop.permute.xlu0 %4932
      %4934 = vrot.lane.b32.xlu0 %v4785, 48
      %v4935 = vpop.permute.xlu0 %4934
      %vm4986 = vcmask 458112
      %4987 = vst.msk [vmem:[#allocation4] sm:$0xff] %vm4986, %v4837
      %4988 = vst.msk [vmem:[#allocation4 + $0x8] sm:$0xff] %vm4986, %v4839
      %4989 = vst.msk [vmem:[#allocation4 + $0x10] sm:$0xff] %vm4986, %v4841
      %4990 = vst.msk [vmem:[#allocation4 + $0x18] sm:$0xff] %vm4986, %v4843
      %4991 = vst.msk [vmem:[#allocation4 + $0x20] sm:$0xff] %vm4986, %v4845
      %4992 = vst.msk [vmem:[#allocation4 + $0x28] sm:$0xff] %vm4986, %v4847
      %4993 = vst.msk [vmem:[#allocation4 + $0x30] sm:$0xff] %vm4986, %v4849
      %4994 = vst.msk [vmem:[#allocation4 + $0x38] sm:$0xff] %vm4986, %v4851
      %4995 = vst.msk [vmem:[#allocation4 + $0x40] sm:$0xff] %vm4986, %v4853
      %4996 = vst.msk [vmem:[#allocation4 + $0x48] sm:$0xff] %vm4986, %v4855
      %4997 = vst.msk [vmem:[#allocation4 + $0x50] sm:$0xff] %vm4986, %v4857
      %4998 = vst.msk [vmem:[#allocation4 + $0x58] sm:$0xff] %vm4986, %v4859
      %4999 = vst.msk [vmem:[#allocation4 + $0x60] sm:$0xff] %vm4986, %v4861
      %5000 = vst.msk [vmem:[#allocation4 + $0x68] sm:$0xff] %vm4986, %v4863
      %5001 = vst.msk [vmem:[#allocation4 + $0x70] sm:$0xff] %vm4986, %v4865
      %5002 = vst.msk [vmem:[#allocation4 + $0x78] sm:$0xff] %vm4986, %v4867
      %5003 = vst.msk [vmem:[#allocation4 + $0x80] sm:$0xff] %vm4986, %v4869
      %5004 = vst.msk [vmem:[#allocation4 + $0x88] sm:$0xff] %vm4986, %v4871
      %5005 = vst.msk [vmem:[#allocation4 + $0x90] sm:$0xff] %vm4986, %v4873
      %5006 = vst.msk [vmem:[#allocation4 + $0x98] sm:$0xff] %vm4986, %v4875
      %5007 = vst.msk [vmem:[#allocation4 + $0xa0] sm:$0xff] %vm4986, %v4877
      %5008 = vst.msk [vmem:[#allocation4 + $0xa8] sm:$0xff] %vm4986, %v4879
      %5009 = vst.msk [vmem:[#allocation4 + $0xb0] sm:$0xff] %vm4986, %v4881
      %5010 = vst.msk [vmem:[#allocation4 + $0xb8] sm:$0xff] %vm4986, %v4883
      %5011 = vst.msk [vmem:[#allocation4 + $0xc0] sm:$0xff] %vm4986, %v4885
      %5012 = vst.msk [vmem:[#allocation4 + $0xc8] sm:$0xff] %vm4986, %v4887
      %5013 = vst.msk [vmem:[#allocation4 + $0xd0] sm:$0xff] %vm4986, %v4889
      %5014 = vst.msk [vmem:[#allocation4 + $0xd8] sm:$0xff] %vm4986, %v4891
      %5015 = vst.msk [vmem:[#allocation4 + $0xe0] sm:$0xff] %vm4986, %v4893
      %5016 = vst.msk [vmem:[#allocation4 + $0xe8] sm:$0xff] %vm4986, %v4895
      %5017 = vst.msk [vmem:[#allocation4 + $0xf0] sm:$0xff] %vm4986, %v4897
      %5018 = vst.msk [vmem:[#allocation4 + $0xf8] sm:$0xff] %vm4986, %v4899
      %5019 = vst.msk [vmem:[#allocation4 + $0x100] sm:$0xff] %vm4986, %v4901
      %5020 = vst.msk [vmem:[#allocation4 + $0x108] sm:$0xff] %vm4986, %v4903
      %5021 = vst.msk [vmem:[#allocation4 + $0x110] sm:$0xff] %vm4986, %v4905
      %5022 = vst.msk [vmem:[#allocation4 + $0x118] sm:$0xff] %vm4986, %v4907
      %5023 = vst.msk [vmem:[#allocation4 + $0x120] sm:$0xff] %vm4986, %v4909
      %5024 = vst.msk [vmem:[#allocation4 + $0x128] sm:$0xff] %vm4986, %v4911
      %5025 = vst.msk [vmem:[#allocation4 + $0x130] sm:$0xff] %vm4986, %v4913
      %5026 = vst.msk [vmem:[#allocation4 + $0x138] sm:$0xff] %vm4986, %v4915
      %5027 = vst.msk [vmem:[#allocation4 + $0x140] sm:$0xff] %vm4986, %v4917
      %5028 = vst.msk [vmem:[#allocation4 + $0x148] sm:$0xff] %vm4986, %v4919
      %5029 = vst.msk [vmem:[#allocation4 + $0x150] sm:$0xff] %vm4986, %v4921
      %5030 = vst.msk [vmem:[#allocation4 + $0x158] sm:$0xff] %vm4986, %v4923
      %5031 = vst.msk [vmem:[#allocation4 + $0x160] sm:$0xff] %vm4986, %v4925
      %5032 = vst.msk [vmem:[#allocation4 + $0x168] sm:$0xff] %vm4986, %v4927
      %5033 = vst.msk [vmem:[#allocation4 + $0x170] sm:$0xff] %vm4986, %v4929
      %5034 = vst.msk [vmem:[#allocation4 + $0x178] sm:$0xff] %vm4986, %v4931
      %5035 = vst.msk [vmem:[#allocation4 + $0x180] sm:$0xff] %vm4986, %v4933
      %5036 = vst.msk [vmem:[#allocation4 + $0x188] sm:$0xff] %vm4986, %v4935
      %v5037 = vld [vmem:[#allocation3 + $0x29] sm:$0xff]
      %v5038 = vld [vmem:[#allocation3 + $0x31] sm:$0xff]
      %v5039 = vld [vmem:[#allocation3 + $0x39] sm:$0xff]
      %v5040 = vld [vmem:[#allocation3 + $0x41] sm:$0xff]
      %v5041 = vld [vmem:[#allocation3 + $0x49] sm:$0xff]
      %v5042 = vld [vmem:[#allocation3 + $0x51] sm:$0xff]
      %v5043 = vld [vmem:[#allocation3 + $0x59] sm:$0xff]
      %v5044 = vld [vmem:[#allocation3 + $0x61] sm:$0xff]
      %v5045 = vld [vmem:[#allocation3 + $0x69] sm:$0xff]
      %v5046 = vld [vmem:[#allocation3 + $0x71] sm:$0xff]
      %v5047 = vld [vmem:[#allocation3 + $0x79] sm:$0xff]
      %v5048 = vld [vmem:[#allocation3 + $0x81] sm:$0xff]
      %v5049 = vld [vmem:[#allocation3 + $0x89] sm:$0xff]
      %v5050 = vld [vmem:[#allocation3 + $0x91] sm:$0xff]
      %v5051 = vld [vmem:[#allocation3 + $0x99] sm:$0xff]
      %v5052 = vld [vmem:[#allocation3 + $0xa1] sm:$0xff]
      %v5053 = vld [vmem:[#allocation3 + $0xa9] sm:$0xff]
      %v5054 = vld [vmem:[#allocation3 + $0xb1] sm:$0xff]
      %v5055 = vld [vmem:[#allocation3 + $0xb9] sm:$0xff]
      %v5056 = vld [vmem:[#allocation3 + $0xc1] sm:$0xff]
      %v5057 = vld [vmem:[#allocation3 + $0xc9] sm:$0xff]
      %v5058 = vld [vmem:[#allocation3 + $0xd1] sm:$0xff]
      %v5059 = vld [vmem:[#allocation3 + $0xd9] sm:$0xff]
      %v5060 = vld [vmem:[#allocation3 + $0xe1] sm:$0xff]
      %v5061 = vld [vmem:[#allocation3 + $0xe9] sm:$0xff]
      %v5062 = vld [vmem:[#allocation3 + $0xf1] sm:$0xff]
      %v5063 = vld [vmem:[#allocation3 + $0xf9] sm:$0xff]
      %v5064 = vld [vmem:[#allocation3 + $0x101] sm:$0xff]
      %v5065 = vld [vmem:[#allocation3 + $0x109] sm:$0xff]
      %v5066 = vld [vmem:[#allocation3 + $0x111] sm:$0xff]
      %v5067 = vld [vmem:[#allocation3 + $0x119] sm:$0xff]
      %v5068 = vld [vmem:[#allocation3 + $0x121] sm:$0xff]
      %v5069 = vld [vmem:[#allocation3 + $0x129] sm:$0xff]
      %v5070 = vld [vmem:[#allocation3 + $0x131] sm:$0xff]
      %v5071 = vld [vmem:[#allocation3 + $0x139] sm:$0xff]
      %v5072 = vld [vmem:[#allocation3 + $0x141] sm:$0xff]
      %v5073 = vld [vmem:[#allocation3 + $0x149] sm:$0xff]
      %v5074 = vld [vmem:[#allocation3 + $0x151] sm:$0xff]
      %v5075 = vld [vmem:[#allocation3 + $0x159] sm:$0xff]
      %v5076 = vld [vmem:[#allocation3 + $0x161] sm:$0xff]
      %v5077 = vld [vmem:[#allocation3 + $0x169] sm:$0xff]
      %v5078 = vld [vmem:[#allocation3 + $0x171] sm:$0xff]
      %v5079 = vld [vmem:[#allocation3 + $0x179] sm:$0xff]
      %v5080 = vld [vmem:[#allocation3 + $0x181] sm:$0xff]
      %v5081 = vld [vmem:[#allocation3 + $0x189] sm:$0xff]
      %v5082 = vld [vmem:[#allocation3 + $0x191] sm:$0xff]
      %v5083 = vld [vmem:[#allocation3 + $0x199] sm:$0xff]
      %v5084 = vld [vmem:[#allocation3 + $0x1a1] sm:$0xff]
      %v5085 = vld [vmem:[#allocation3 + $0x1a9] sm:$0xff]
      %v5086 = vld [vmem:[#allocation3 + $0x1b1] sm:$0xff]
      %5137 = vrot.lane.b32.xlu0 %v5037, 56
      %v5138 = vpop.permute.xlu0 %5137
      %5139 = vrot.lane.b32.xlu0 %v5038, 56
      %v5140 = vpop.permute.xlu0 %5139
      %5141 = vrot.lane.b32.xlu0 %v5039, 56
      %v5142 = vpop.permute.xlu0 %5141
      %5143 = vrot.lane.b32.xlu0 %v5040, 56
      %v5144 = vpop.permute.xlu0 %5143
      %5145 = vrot.lane.b32.xlu0 %v5041, 56
      %v5146 = vpop.permute.xlu0 %5145
      %5147 = vrot.lane.b32.xlu0 %v5042, 56
      %v5148 = vpop.permute.xlu0 %5147
      %5149 = vrot.lane.b32.xlu0 %v5043, 56
      %v5150 = vpop.permute.xlu0 %5149
      %5151 = vrot.lane.b32.xlu0 %v5044, 56
      %v5152 = vpop.permute.xlu0 %5151
      %5153 = vrot.lane.b32.xlu0 %v5045, 56
      %v5154 = vpop.permute.xlu0 %5153
      %5155 = vrot.lane.b32.xlu0 %v5046, 56
      %v5156 = vpop.permute.xlu0 %5155
      %5157 = vrot.lane.b32.xlu0 %v5047, 56
      %v5158 = vpop.permute.xlu0 %5157
      %5159 = vrot.lane.b32.xlu0 %v5048, 56
      %v5160 = vpop.permute.xlu0 %5159
      %5161 = vrot.lane.b32.xlu0 %v5049, 56
      %v5162 = vpop.permute.xlu0 %5161
      %5163 = vrot.lane.b32.xlu0 %v5050, 56
      %v5164 = vpop.permute.xlu0 %5163
      %5165 = vrot.lane.b32.xlu0 %v5051, 56
      %v5166 = vpop.permute.xlu0 %5165
      %5167 = vrot.lane.b32.xlu0 %v5052, 56
      %v5168 = vpop.permute.xlu0 %5167
      %5169 = vrot.lane.b32.xlu0 %v5053, 56
      %v5170 = vpop.permute.xlu0 %5169
      %5171 = vrot.lane.b32.xlu0 %v5054, 56
      %v5172 = vpop.permute.xlu0 %5171
      %5173 = vrot.lane.b32.xlu0 %v5055, 56
      %v5174 = vpop.permute.xlu0 %5173
      %5175 = vrot.lane.b32.xlu0 %v5056, 56
      %v5176 = vpop.permute.xlu0 %5175
      %5177 = vrot.lane.b32.xlu0 %v5057, 56
      %v5178 = vpop.permute.xlu0 %5177
      %5179 = vrot.lane.b32.xlu0 %v5058, 56
      %v5180 = vpop.permute.xlu0 %5179
      %5181 = vrot.lane.b32.xlu0 %v5059, 56
      %v5182 = vpop.permute.xlu0 %5181
      %5183 = vrot.lane.b32.xlu0 %v5060, 56
      %v5184 = vpop.permute.xlu0 %5183
      %5185 = vrot.lane.b32.xlu0 %v5061, 56
      %v5186 = vpop.permute.xlu0 %5185
      %5187 = vrot.lane.b32.xlu0 %v5062, 56
      %v5188 = vpop.permute.xlu0 %5187
      %5189 = vrot.lane.b32.xlu0 %v5063, 56
      %v5190 = vpop.permute.xlu0 %5189
      %5191 = vrot.lane.b32.xlu0 %v5064, 56
      %v5192 = vpop.permute.xlu0 %5191
      %5193 = vrot.lane.b32.xlu0 %v5065, 56
      %v5194 = vpop.permute.xlu0 %5193
      %5195 = vrot.lane.b32.xlu0 %v5066, 56
      %v5196 = vpop.permute.xlu0 %5195
      %5197 = vrot.lane.b32.xlu0 %v5067, 56
      %v5198 = vpop.permute.xlu0 %5197
      %5199 = vrot.lane.b32.xlu0 %v5068, 56
      %v5200 = vpop.permute.xlu0 %5199
      %5201 = vrot.lane.b32.xlu0 %v5069, 56
      %v5202 = vpop.permute.xlu0 %5201
      %5203 = vrot.lane.b32.xlu0 %v5070, 56
      %v5204 = vpop.permute.xlu0 %5203
      %5205 = vrot.lane.b32.xlu0 %v5071, 56
      %v5206 = vpop.permute.xlu0 %5205
      %5207 = vrot.lane.b32.xlu0 %v5072, 56
      %v5208 = vpop.permute.xlu0 %5207
      %5209 = vrot.lane.b32.xlu0 %v5073, 56
      %v5210 = vpop.permute.xlu0 %5209
      %5211 = vrot.lane.b32.xlu0 %v5074, 56
      %v5212 = vpop.permute.xlu0 %5211
      %5213 = vrot.lane.b32.xlu0 %v5075, 56
      %v5214 = vpop.permute.xlu0 %5213
      %5215 = vrot.lane.b32.xlu0 %v5076, 56
      %v5216 = vpop.permute.xlu0 %5215
      %5217 = vrot.lane.b32.xlu0 %v5077, 56
      %v5218 = vpop.permute.xlu0 %5217
      %5219 = vrot.lane.b32.xlu0 %v5078, 56
      %v5220 = vpop.permute.xlu0 %5219
      %5221 = vrot.lane.b32.xlu0 %v5079, 56
      %v5222 = vpop.permute.xlu0 %5221
      %5223 = vrot.lane.b32.xlu0 %v5080, 56
      %v5224 = vpop.permute.xlu0 %5223
      %5225 = vrot.lane.b32.xlu0 %v5081, 56
      %v5226 = vpop.permute.xlu0 %5225
      %5227 = vrot.lane.b32.xlu0 %v5082, 56
      %v5228 = vpop.permute.xlu0 %5227
      %5229 = vrot.lane.b32.xlu0 %v5083, 56
      %v5230 = vpop.permute.xlu0 %5229
      %5231 = vrot.lane.b32.xlu0 %v5084, 56
      %v5232 = vpop.permute.xlu0 %5231
      %5233 = vrot.lane.b32.xlu0 %v5085, 56
      %v5234 = vpop.permute.xlu0 %5233
      %5235 = vrot.lane.b32.xlu0 %v5086, 56
      %v5236 = vpop.permute.xlu0 %5235
      %vm5287 = vcmask 523712
      %5288 = vst.msk [vmem:[#allocation4] sm:$0xff] %vm5287, %v5138
      %5289 = vst.msk [vmem:[#allocation4 + $0x8] sm:$0xff] %vm5287, %v5140
      %5290 = vst.msk [vmem:[#allocation4 + $0x10] sm:$0xff] %vm5287, %v5142
      %5291 = vst.msk [vmem:[#allocation4 + $0x18] sm:$0xff] %vm5287, %v5144
      %5292 = vst.msk [vmem:[#allocation4 + $0x20] sm:$0xff] %vm5287, %v5146
      %5293 = vst.msk [vmem:[#allocation4 + $0x28] sm:$0xff] %vm5287, %v5148
      %5294 = vst.msk [vmem:[#allocation4 + $0x30] sm:$0xff] %vm5287, %v5150
      %5295 = vst.msk [vmem:[#allocation4 + $0x38] sm:$0xff] %vm5287, %v5152
      %5296 = vst.msk [vmem:[#allocation4 + $0x40] sm:$0xff] %vm5287, %v5154
      %5297 = vst.msk [vmem:[#allocation4 + $0x48] sm:$0xff] %vm5287, %v5156
      %5298 = vst.msk [vmem:[#allocation4 + $0x50] sm:$0xff] %vm5287, %v5158
      %5299 = vst.msk [vmem:[#allocation4 + $0x58] sm:$0xff] %vm5287, %v5160
      %5300 = vst.msk [vmem:[#allocation4 + $0x60] sm:$0xff] %vm5287, %v5162
      %5301 = vst.msk [vmem:[#allocation4 + $0x68] sm:$0xff] %vm5287, %v5164
      %5302 = vst.msk [vmem:[#allocation4 + $0x70] sm:$0xff] %vm5287, %v5166
      %5303 = vst.msk [vmem:[#allocation4 + $0x78] sm:$0xff] %vm5287, %v5168
      %5304 = vst.msk [vmem:[#allocation4 + $0x80] sm:$0xff] %vm5287, %v5170
      %5305 = vst.msk [vmem:[#allocation4 + $0x88] sm:$0xff] %vm5287, %v5172
      %5306 = vst.msk [vmem:[#allocation4 + $0x90] sm:$0xff] %vm5287, %v5174
      %5307 = vst.msk [vmem:[#allocation4 + $0x98] sm:$0xff] %vm5287, %v5176
      %5308 = vst.msk [vmem:[#allocation4 + $0xa0] sm:$0xff] %vm5287, %v5178
      %5309 = vst.msk [vmem:[#allocation4 + $0xa8] sm:$0xff] %vm5287, %v5180
      %5310 = vst.msk [vmem:[#allocation4 + $0xb0] sm:$0xff] %vm5287, %v5182
      %5311 = vst.msk [vmem:[#allocation4 + $0xb8] sm:$0xff] %vm5287, %v5184
      %5312 = vst.msk [vmem:[#allocation4 + $0xc0] sm:$0xff] %vm5287, %v5186
      %5313 = vst.msk [vmem:[#allocation4 + $0xc8] sm:$0xff] %vm5287, %v5188
      %5314 = vst.msk [vmem:[#allocation4 + $0xd0] sm:$0xff] %vm5287, %v5190
      %5315 = vst.msk [vmem:[#allocation4 + $0xd8] sm:$0xff] %vm5287, %v5192
      %5316 = vst.msk [vmem:[#allocation4 + $0xe0] sm:$0xff] %vm5287, %v5194
      %5317 = vst.msk [vmem:[#allocation4 + $0xe8] sm:$0xff] %vm5287, %v5196
      %5318 = vst.msk [vmem:[#allocation4 + $0xf0] sm:$0xff] %vm5287, %v5198
      %5319 = vst.msk [vmem:[#allocation4 + $0xf8] sm:$0xff] %vm5287, %v5200
      %5320 = vst.msk [vmem:[#allocation4 + $0x100] sm:$0xff] %vm5287, %v5202
      %5321 = vst.msk [vmem:[#allocation4 + $0x108] sm:$0xff] %vm5287, %v5204
      %5322 = vst.msk [vmem:[#allocation4 + $0x110] sm:$0xff] %vm5287, %v5206
      %5323 = vst.msk [vmem:[#allocation4 + $0x118] sm:$0xff] %vm5287, %v5208
      %5324 = vst.msk [vmem:[#allocation4 + $0x120] sm:$0xff] %vm5287, %v5210
      %5325 = vst.msk [vmem:[#allocation4 + $0x128] sm:$0xff] %vm5287, %v5212
      %5326 = vst.msk [vmem:[#allocation4 + $0x130] sm:$0xff] %vm5287, %v5214
      %5327 = vst.msk [vmem:[#allocation4 + $0x138] sm:$0xff] %vm5287, %v5216
      %5328 = vst.msk [vmem:[#allocation4 + $0x140] sm:$0xff] %vm5287, %v5218
      %5329 = vst.msk [vmem:[#allocation4 + $0x148] sm:$0xff] %vm5287, %v5220
      %5330 = vst.msk [vmem:[#allocation4 + $0x150] sm:$0xff] %vm5287, %v5222
      %5331 = vst.msk [vmem:[#allocation4 + $0x158] sm:$0xff] %vm5287, %v5224
      %5332 = vst.msk [vmem:[#allocation4 + $0x160] sm:$0xff] %vm5287, %v5226
      %5333 = vst.msk [vmem:[#allocation4 + $0x168] sm:$0xff] %vm5287, %v5228
      %5334 = vst.msk [vmem:[#allocation4 + $0x170] sm:$0xff] %vm5287, %v5230
      %5335 = vst.msk [vmem:[#allocation4 + $0x178] sm:$0xff] %vm5287, %v5232
      %5336 = vst.msk [vmem:[#allocation4 + $0x180] sm:$0xff] %vm5287, %v5234
      %5337 = vst.msk [vmem:[#allocation4 + $0x188] sm:$0xff] %vm5287, %v5236
      %v5338 = vld [vmem:[#allocation3 + $0x2a] sm:$0xff]
      %v5339 = vld [vmem:[#allocation3 + $0x32] sm:$0xff]
      %v5340 = vld [vmem:[#allocation3 + $0x3a] sm:$0xff]
      %v5341 = vld [vmem:[#allocation3 + $0x42] sm:$0xff]
      %v5342 = vld [vmem:[#allocation3 + $0x4a] sm:$0xff]
      %v5343 = vld [vmem:[#allocation3 + $0x52] sm:$0xff]
      %v5344 = vld [vmem:[#allocation3 + $0x5a] sm:$0xff]
      %v5345 = vld [vmem:[#allocation3 + $0x62] sm:$0xff]
      %v5346 = vld [vmem:[#allocation3 + $0x6a] sm:$0xff]
      %v5347 = vld [vmem:[#allocation3 + $0x72] sm:$0xff]
      %v5348 = vld [vmem:[#allocation3 + $0x7a] sm:$0xff]
      %v5349 = vld [vmem:[#allocation3 + $0x82] sm:$0xff]
      %v5350 = vld [vmem:[#allocation3 + $0x8a] sm:$0xff]
      %v5351 = vld [vmem:[#allocation3 + $0x92] sm:$0xff]
      %v5352 = vld [vmem:[#allocation3 + $0x9a] sm:$0xff]
      %v5353 = vld [vmem:[#allocation3 + $0xa2] sm:$0xff]
      %v5354 = vld [vmem:[#allocation3 + $0xaa] sm:$0xff]
      %v5355 = vld [vmem:[#allocation3 + $0xb2] sm:$0xff]
      %v5356 = vld [vmem:[#allocation3 + $0xba] sm:$0xff]
      %v5357 = vld [vmem:[#allocation3 + $0xc2] sm:$0xff]
      %v5358 = vld [vmem:[#allocation3 + $0xca] sm:$0xff]
      %v5359 = vld [vmem:[#allocation3 + $0xd2] sm:$0xff]
      %v5360 = vld [vmem:[#allocation3 + $0xda] sm:$0xff]
      %v5361 = vld [vmem:[#allocation3 + $0xe2] sm:$0xff]
      %v5362 = vld [vmem:[#allocation3 + $0xea] sm:$0xff]
      %v5363 = vld [vmem:[#allocation3 + $0xf2] sm:$0xff]
      %v5364 = vld [vmem:[#allocation3 + $0xfa] sm:$0xff]
      %v5365 = vld [vmem:[#allocation3 + $0x102] sm:$0xff]
      %v5366 = vld [vmem:[#allocation3 + $0x10a] sm:$0xff]
      %v5367 = vld [vmem:[#allocation3 + $0x112] sm:$0xff]
      %v5368 = vld [vmem:[#allocation3 + $0x11a] sm:$0xff]
      %v5369 = vld [vmem:[#allocation3 + $0x122] sm:$0xff]
      %v5370 = vld [vmem:[#allocation3 + $0x12a] sm:$0xff]
      %v5371 = vld [vmem:[#allocation3 + $0x132] sm:$0xff]
      %v5372 = vld [vmem:[#allocation3 + $0x13a] sm:$0xff]
      %v5373 = vld [vmem:[#allocation3 + $0x142] sm:$0xff]
      %v5374 = vld [vmem:[#allocation3 + $0x14a] sm:$0xff]
      %v5375 = vld [vmem:[#allocation3 + $0x152] sm:$0xff]
      %v5376 = vld [vmem:[#allocation3 + $0x15a] sm:$0xff]
      %v5377 = vld [vmem:[#allocation3 + $0x162] sm:$0xff]
      %v5378 = vld [vmem:[#allocation3 + $0x16a] sm:$0xff]
      %v5379 = vld [vmem:[#allocation3 + $0x172] sm:$0xff]
      %v5380 = vld [vmem:[#allocation3 + $0x17a] sm:$0xff]
      %v5381 = vld [vmem:[#allocation3 + $0x182] sm:$0xff]
      %v5382 = vld [vmem:[#allocation3 + $0x18a] sm:$0xff]
      %v5383 = vld [vmem:[#allocation3 + $0x192] sm:$0xff]
      %v5384 = vld [vmem:[#allocation3 + $0x19a] sm:$0xff]
      %v5385 = vld [vmem:[#allocation3 + $0x1a2] sm:$0xff]
      %v5386 = vld [vmem:[#allocation3 + $0x1aa] sm:$0xff]
      %v5387 = vld [vmem:[#allocation3 + $0x1b2] sm:$0xff]
      %5438 = vrot.lane.b32.xlu0 %v5338, 64
      %v5439 = vpop.permute.xlu0 %5438
      %5440 = vrot.lane.b32.xlu0 %v5339, 64
      %v5441 = vpop.permute.xlu0 %5440
      %5442 = vrot.lane.b32.xlu0 %v5340, 64
      %v5443 = vpop.permute.xlu0 %5442
      %5444 = vrot.lane.b32.xlu0 %v5341, 64
      %v5445 = vpop.permute.xlu0 %5444
      %5446 = vrot.lane.b32.xlu0 %v5342, 64
      %v5447 = vpop.permute.xlu0 %5446
      %5448 = vrot.lane.b32.xlu0 %v5343, 64
      %v5449 = vpop.permute.xlu0 %5448
      %5450 = vrot.lane.b32.xlu0 %v5344, 64
      %v5451 = vpop.permute.xlu0 %5450
      %5452 = vrot.lane.b32.xlu0 %v5345, 64
      %v5453 = vpop.permute.xlu0 %5452
      %5454 = vrot.lane.b32.xlu0 %v5346, 64
      %v5455 = vpop.permute.xlu0 %5454
      %5456 = vrot.lane.b32.xlu0 %v5347, 64
      %v5457 = vpop.permute.xlu0 %5456
      %5458 = vrot.lane.b32.xlu0 %v5348, 64
      %v5459 = vpop.permute.xlu0 %5458
      %5460 = vrot.lane.b32.xlu0 %v5349, 64
      %v5461 = vpop.permute.xlu0 %5460
      %5462 = vrot.lane.b32.xlu0 %v5350, 64
      %v5463 = vpop.permute.xlu0 %5462
      %5464 = vrot.lane.b32.xlu0 %v5351, 64
      %v5465 = vpop.permute.xlu0 %5464
      %5466 = vrot.lane.b32.xlu0 %v5352, 64
      %v5467 = vpop.permute.xlu0 %5466
      %5468 = vrot.lane.b32.xlu0 %v5353, 64
      %v5469 = vpop.permute.xlu0 %5468
      %5470 = vrot.lane.b32.xlu0 %v5354, 64
      %v5471 = vpop.permute.xlu0 %5470
      %5472 = vrot.lane.b32.xlu0 %v5355, 64
      %v5473 = vpop.permute.xlu0 %5472
      %5474 = vrot.lane.b32.xlu0 %v5356, 64
      %v5475 = vpop.permute.xlu0 %5474
      %5476 = vrot.lane.b32.xlu0 %v5357, 64
      %v5477 = vpop.permute.xlu0 %5476
      %5478 = vrot.lane.b32.xlu0 %v5358, 64
      %v5479 = vpop.permute.xlu0 %5478
      %5480 = vrot.lane.b32.xlu0 %v5359, 64
      %v5481 = vpop.permute.xlu0 %5480
      %5482 = vrot.lane.b32.xlu0 %v5360, 64
      %v5483 = vpop.permute.xlu0 %5482
      %5484 = vrot.lane.b32.xlu0 %v5361, 64
      %v5485 = vpop.permute.xlu0 %5484
      %5486 = vrot.lane.b32.xlu0 %v5362, 64
      %v5487 = vpop.permute.xlu0 %5486
      %5488 = vrot.lane.b32.xlu0 %v5363, 64
      %v5489 = vpop.permute.xlu0 %5488
      %5490 = vrot.lane.b32.xlu0 %v5364, 64
      %v5491 = vpop.permute.xlu0 %5490
      %5492 = vrot.lane.b32.xlu0 %v5365, 64
      %v5493 = vpop.permute.xlu0 %5492
      %5494 = vrot.lane.b32.xlu0 %v5366, 64
      %v5495 = vpop.permute.xlu0 %5494
      %5496 = vrot.lane.b32.xlu0 %v5367, 64
      %v5497 = vpop.permute.xlu0 %5496
      %5498 = vrot.lane.b32.xlu0 %v5368, 64
      %v5499 = vpop.permute.xlu0 %5498
      %5500 = vrot.lane.b32.xlu0 %v5369, 64
      %v5501 = vpop.permute.xlu0 %5500
      %5502 = vrot.lane.b32.xlu0 %v5370, 64
      %v5503 = vpop.permute.xlu0 %5502
      %5504 = vrot.lane.b32.xlu0 %v5371, 64
      %v5505 = vpop.permute.xlu0 %5504
      %5506 = vrot.lane.b32.xlu0 %v5372, 64
      %v5507 = vpop.permute.xlu0 %5506
      %5508 = vrot.lane.b32.xlu0 %v5373, 64
      %v5509 = vpop.permute.xlu0 %5508
      %5510 = vrot.lane.b32.xlu0 %v5374, 64
      %v5511 = vpop.permute.xlu0 %5510
      %5512 = vrot.lane.b32.xlu0 %v5375, 64
      %v5513 = vpop.permute.xlu0 %5512
      %5514 = vrot.lane.b32.xlu0 %v5376, 64
      %v5515 = vpop.permute.xlu0 %5514
      %5516 = vrot.lane.b32.xlu0 %v5377, 64
      %v5517 = vpop.permute.xlu0 %5516
      %5518 = vrot.lane.b32.xlu0 %v5378, 64
      %v5519 = vpop.permute.xlu0 %5518
      %5520 = vrot.lane.b32.xlu0 %v5379, 64
      %v5521 = vpop.permute.xlu0 %5520
      %5522 = vrot.lane.b32.xlu0 %v5380, 64
      %v5523 = vpop.permute.xlu0 %5522
      %5524 = vrot.lane.b32.xlu0 %v5381, 64
      %v5525 = vpop.permute.xlu0 %5524
      %5526 = vrot.lane.b32.xlu0 %v5382, 64
      %v5527 = vpop.permute.xlu0 %5526
      %5528 = vrot.lane.b32.xlu0 %v5383, 64
      %v5529 = vpop.permute.xlu0 %5528
      %5530 = vrot.lane.b32.xlu0 %v5384, 64
      %v5531 = vpop.permute.xlu0 %5530
      %5532 = vrot.lane.b32.xlu0 %v5385, 64
      %v5533 = vpop.permute.xlu0 %5532
      %5534 = vrot.lane.b32.xlu0 %v5386, 64
      %v5535 = vpop.permute.xlu0 %5534
      %5536 = vrot.lane.b32.xlu0 %v5387, 64
      %v5537 = vpop.permute.xlu0 %5536
      %vm5588 = vcmask 589312
      %5589 = vst.msk [vmem:[#allocation4] sm:$0xff] %vm5588, %v5439
      %5590 = vst.msk [vmem:[#allocation4 + $0x8] sm:$0xff] %vm5588, %v5441
      %5591 = vst.msk [vmem:[#allocation4 + $0x10] sm:$0xff] %vm5588, %v5443
      %5592 = vst.msk [vmem:[#allocation4 + $0x18] sm:$0xff] %vm5588, %v5445
      %5593 = vst.msk [vmem:[#allocation4 + $0x20] sm:$0xff] %vm5588, %v5447
      %5594 = vst.msk [vmem:[#allocation4 + $0x28] sm:$0xff] %vm5588, %v5449
      %5595 = vst.msk [vmem:[#allocation4 + $0x30] sm:$0xff] %vm5588, %v5451
      %5596 = vst.msk [vmem:[#allocation4 + $0x38] sm:$0xff] %vm5588, %v5453
      %5597 = vst.msk [vmem:[#allocation4 + $0x40] sm:$0xff] %vm5588, %v5455
      %5598 = vst.msk [vmem:[#allocation4 + $0x48] sm:$0xff] %vm5588, %v5457
      %5599 = vst.msk [vmem:[#allocation4 + $0x50] sm:$0xff] %vm5588, %v5459
      %5600 = vst.msk [vmem:[#allocation4 + $0x58] sm:$0xff] %vm5588, %v5461
      %5601 = vst.msk [vmem:[#allocation4 + $0x60] sm:$0xff] %vm5588, %v5463
      %5602 = vst.msk [vmem:[#allocation4 + $0x68] sm:$0xff] %vm5588, %v5465
      %5603 = vst.msk [vmem:[#allocation4 + $0x70] sm:$0xff] %vm5588, %v5467
      %5604 = vst.msk [vmem:[#allocation4 + $0x78] sm:$0xff] %vm5588, %v5469
      %5605 = vst.msk [vmem:[#allocation4 + $0x80] sm:$0xff] %vm5588, %v5471
      %5606 = vst.msk [vmem:[#allocation4 + $0x88] sm:$0xff] %vm5588, %v5473
      %5607 = vst.msk [vmem:[#allocation4 + $0x90] sm:$0xff] %vm5588, %v5475
      %5608 = vst.msk [vmem:[#allocation4 + $0x98] sm:$0xff] %vm5588, %v5477
      %5609 = vst.msk [vmem:[#allocation4 + $0xa0] sm:$0xff] %vm5588, %v5479
      %5610 = vst.msk [vmem:[#allocation4 + $0xa8] sm:$0xff] %vm5588, %v5481
      %5611 = vst.msk [vmem:[#allocation4 + $0xb0] sm:$0xff] %vm5588, %v5483
      %5612 = vst.msk [vmem:[#allocation4 + $0xb8] sm:$0xff] %vm5588, %v5485
      %5613 = vst.msk [vmem:[#allocation4 + $0xc0] sm:$0xff] %vm5588, %v5487
      %5614 = vst.msk [vmem:[#allocation4 + $0xc8] sm:$0xff] %vm5588, %v5489
      %5615 = vst.msk [vmem:[#allocation4 + $0xd0] sm:$0xff] %vm5588, %v5491
      %5616 = vst.msk [vmem:[#allocation4 + $0xd8] sm:$0xff] %vm5588, %v5493
      %5617 = vst.msk [vmem:[#allocation4 + $0xe0] sm:$0xff] %vm5588, %v5495
      %5618 = vst.msk [vmem:[#allocation4 + $0xe8] sm:$0xff] %vm5588, %v5497
      %5619 = vst.msk [vmem:[#allocation4 + $0xf0] sm:$0xff] %vm5588, %v5499
      %5620 = vst.msk [vmem:[#allocation4 + $0xf8] sm:$0xff] %vm5588, %v5501
      %5621 = vst.msk [vmem:[#allocation4 + $0x100] sm:$0xff] %vm5588, %v5503
      %5622 = vst.msk [vmem:[#allocation4 + $0x108] sm:$0xff] %vm5588, %v5505
      %5623 = vst.msk [vmem:[#allocation4 + $0x110] sm:$0xff] %vm5588, %v5507
      %5624 = vst.msk [vmem:[#allocation4 + $0x118] sm:$0xff] %vm5588, %v5509
      %5625 = vst.msk [vmem:[#allocation4 + $0x120] sm:$0xff] %vm5588, %v5511
      %5626 = vst.msk [vmem:[#allocation4 + $0x128] sm:$0xff] %vm5588, %v5513
      %5627 = vst.msk [vmem:[#allocation4 + $0x130] sm:$0xff] %vm5588, %v5515
      %5628 = vst.msk [vmem:[#allocation4 + $0x138] sm:$0xff] %vm5588, %v5517
      %5629 = vst.msk [vmem:[#allocation4 + $0x140] sm:$0xff] %vm5588, %v5519
      %5630 = vst.msk [vmem:[#allocation4 + $0x148] sm:$0xff] %vm5588, %v5521
      %5631 = vst.msk [vmem:[#allocation4 + $0x150] sm:$0xff] %vm5588, %v5523
      %5632 = vst.msk [vmem:[#allocation4 + $0x158] sm:$0xff] %vm5588, %v5525
      %5633 = vst.msk [vmem:[#allocation4 + $0x160] sm:$0xff] %vm5588, %v5527
      %5634 = vst.msk [vmem:[#allocation4 + $0x168] sm:$0xff] %vm5588, %v5529
      %5635 = vst.msk [vmem:[#allocation4 + $0x170] sm:$0xff] %vm5588, %v5531
      %5636 = vst.msk [vmem:[#allocation4 + $0x178] sm:$0xff] %vm5588, %v5533
      %5637 = vst.msk [vmem:[#allocation4 + $0x180] sm:$0xff] %vm5588, %v5535
      %5638 = vst.msk [vmem:[#allocation4 + $0x188] sm:$0xff] %vm5588, %v5537
      %v5639 = vld [vmem:[%s246] sm:$0xff]
      %v5640 = vld [vmem:[%s246 + $0x8] sm:$0xff]
      %v5641 = vld [vmem:[%s246 + $0x10] sm:$0xff]
      %v5642 = vld [vmem:[%s246 + $0x18] sm:$0xff]
      %v5643 = vld [vmem:[%s246 + $0x20] sm:$0xff]
      %v5644 = vld [vmem:[%s246 + $0x28] sm:$0xff]
      %v5645 = vld [vmem:[%s246 + $0x30] sm:$0xff]
      %v5646 = vld [vmem:[%s246 + $0x38] sm:$0xff]
      %v5647 = vld [vmem:[%s246 + $0x40] sm:$0xff]
      %v5648 = vld [vmem:[%s246 + $0x48] sm:$0xff]
      %v5649 = vld [vmem:[%s246 + $0x50] sm:$0xff]
      %v5650 = vld [vmem:[%s246 + $0x58] sm:$0xff]
      %v5651 = vld [vmem:[%s246 + $0x60] sm:$0xff]
      %v5652 = vld [vmem:[%s246 + $0x68] sm:$0xff]
      %v5653 = vld [vmem:[%s246 + $0x70] sm:$0xff]
      %v5654 = vld [vmem:[%s246 + $0x78] sm:$0xff]
      %v5655 = vld [vmem:[%s246 + $0x80] sm:$0xff]
      %v5656 = vld [vmem:[%s246 + $0x88] sm:$0xff]
      %v5657 = vld [vmem:[%s246 + $0x90] sm:$0xff]
      %v5658 = vld [vmem:[%s246 + $0x98] sm:$0xff]
      %v5659 = vld [vmem:[%s246 + $0xa0] sm:$0xff]
      %v5660 = vld [vmem:[%s246 + $0xa8] sm:$0xff]
      %v5661 = vld [vmem:[%s246 + $0xb0] sm:$0xff]
      %v5662 = vld [vmem:[%s246 + $0xb8] sm:$0xff]
      %v5663 = vld [vmem:[%s246 + $0xc0] sm:$0xff]
      %v5664 = vld [vmem:[%s246 + $0xc8] sm:$0xff]
      %v5665 = vld [vmem:[%s246 + $0xd0] sm:$0xff]
      %v5666 = vld [vmem:[%s246 + $0xd8] sm:$0xff]
      %v5667 = vld [vmem:[%s246 + $0xe0] sm:$0xff]
      %v5668 = vld [vmem:[%s246 + $0xe8] sm:$0xff]
      %v5669 = vld [vmem:[%s246 + $0xf0] sm:$0xff]
      %v5670 = vld [vmem:[%s246 + $0xf8] sm:$0xff]
      %v5671 = vld [vmem:[%s246 + $0x100] sm:$0xff]
      %v5672 = vld [vmem:[%s246 + $0x108] sm:$0xff]
      %v5673 = vld [vmem:[%s246 + $0x110] sm:$0xff]
      %v5674 = vld [vmem:[%s246 + $0x118] sm:$0xff]
      %v5675 = vld [vmem:[%s246 + $0x120] sm:$0xff]
      %v5676 = vld [vmem:[%s246 + $0x128] sm:$0xff]
      %v5677 = vld [vmem:[%s246 + $0x130] sm:$0xff]
      %v5678 = vld [vmem:[%s246 + $0x138] sm:$0xff]
      %v5679 = vld [vmem:[%s246 + $0x140] sm:$0xff]
      %v5680 = vld [vmem:[%s246 + $0x148] sm:$0xff]
      %v5681 = vld [vmem:[%s246 + $0x150] sm:$0xff]
      %v5682 = vld [vmem:[%s246 + $0x158] sm:$0xff]
      %v5683 = vld [vmem:[%s246 + $0x160] sm:$0xff]
      %v5684 = vld [vmem:[%s246 + $0x168] sm:$0xff]
      %v5685 = vld [vmem:[%s246 + $0x170] sm:$0xff]
      %v5686 = vld [vmem:[%s246 + $0x178] sm:$0xff]
      %v5687 = vld [vmem:[%s246 + $0x180] sm:$0xff]
      %v5688 = vld [vmem:[%s246 + $0x188] sm:$0xff]
      %5739 = vrot.lane.b32.xlu0 %v5639, 72
      %v5740 = vpop.permute.xlu0 %5739
      %5741 = vrot.lane.b32.xlu0 %v5640, 72
      %v5742 = vpop.permute.xlu0 %5741
      %5743 = vrot.lane.b32.xlu0 %v5641, 72
      %v5744 = vpop.permute.xlu0 %5743
      %5745 = vrot.lane.b32.xlu0 %v5642, 72
      %v5746 = vpop.permute.xlu0 %5745
      %5747 = vrot.lane.b32.xlu0 %v5643, 72
      %v5748 = vpop.permute.xlu0 %5747
      %5749 = vrot.lane.b32.xlu0 %v5644, 72
      %v5750 = vpop.permute.xlu0 %5749
      %5751 = vrot.lane.b32.xlu0 %v5645, 72
      %v5752 = vpop.permute.xlu0 %5751
      %5753 = vrot.lane.b32.xlu0 %v5646, 72
      %v5754 = vpop.permute.xlu0 %5753
      %5755 = vrot.lane.b32.xlu0 %v5647, 72
      %v5756 = vpop.permute.xlu0 %5755
      %5757 = vrot.lane.b32.xlu0 %v5648, 72
      %v5758 = vpop.permute.xlu0 %5757
      %5759 = vrot.lane.b32.xlu0 %v5649, 72
      %v5760 = vpop.permute.xlu0 %5759
      %5761 = vrot.lane.b32.xlu0 %v5650, 72
      %v5762 = vpop.permute.xlu0 %5761
      %5763 = vrot.lane.b32.xlu0 %v5651, 72
      %v5764 = vpop.permute.xlu0 %5763
      %5765 = vrot.lane.b32.xlu0 %v5652, 72
      %v5766 = vpop.permute.xlu0 %5765
      %5767 = vrot.lane.b32.xlu0 %v5653, 72
      %v5768 = vpop.permute.xlu0 %5767
      %5769 = vrot.lane.b32.xlu0 %v5654, 72
      %v5770 = vpop.permute.xlu0 %5769
      %5771 = vrot.lane.b32.xlu0 %v5655, 72
      %v5772 = vpop.permute.xlu0 %5771
      %5773 = vrot.lane.b32.xlu0 %v5656, 72
      %v5774 = vpop.permute.xlu0 %5773
      %5775 = vrot.lane.b32.xlu0 %v5657, 72
      %v5776 = vpop.permute.xlu0 %5775
      %5777 = vrot.lane.b32.xlu0 %v5658, 72
      %v5778 = vpop.permute.xlu0 %5777
      %5779 = vrot.lane.b32.xlu0 %v5659, 72
      %v5780 = vpop.permute.xlu0 %5779
      %5781 = vrot.lane.b32.xlu0 %v5660, 72
      %v5782 = vpop.permute.xlu0 %5781
      %5783 = vrot.lane.b32.xlu0 %v5661, 72
      %v5784 = vpop.permute.xlu0 %5783
      %5785 = vrot.lane.b32.xlu0 %v5662, 72
      %v5786 = vpop.permute.xlu0 %5785
      %5787 = vrot.lane.b32.xlu0 %v5663, 72
      %v5788 = vpop.permute.xlu0 %5787
      %5789 = vrot.lane.b32.xlu0 %v5664, 72
      %v5790 = vpop.permute.xlu0 %5789
      %5791 = vrot.lane.b32.xlu0 %v5665, 72
      %v5792 = vpop.permute.xlu0 %5791
      %5793 = vrot.lane.b32.xlu0 %v5666, 72
      %v5794 = vpop.permute.xlu0 %5793
      %5795 = vrot.lane.b32.xlu0 %v5667, 72
      %v5796 = vpop.permute.xlu0 %5795
      %5797 = vrot.lane.b32.xlu0 %v5668, 72
      %v5798 = vpop.permute.xlu0 %5797
      %5799 = vrot.lane.b32.xlu0 %v5669, 72
      %v5800 = vpop.permute.xlu0 %5799
      %5801 = vrot.lane.b32.xlu0 %v5670, 72
      %v5802 = vpop.permute.xlu0 %5801
      %5803 = vrot.lane.b32.xlu0 %v5671, 72
      %v5804 = vpop.permute.xlu0 %5803
      %5805 = vrot.lane.b32.xlu0 %v5672, 72
      %v5806 = vpop.permute.xlu0 %5805
      %5807 = vrot.lane.b32.xlu0 %v5673, 72
      %v5808 = vpop.permute.xlu0 %5807
      %5809 = vrot.lane.b32.xlu0 %v5674, 72
      %v5810 = vpop.permute.xlu0 %5809
      %5811 = vrot.lane.b32.xlu0 %v5675, 72
      %v5812 = vpop.permute.xlu0 %5811
      %5813 = vrot.lane.b32.xlu0 %v5676, 72
      %v5814 = vpop.permute.xlu0 %5813
      %5815 = vrot.lane.b32.xlu0 %v5677, 72
      %v5816 = vpop.permute.xlu0 %5815
      %5817 = vrot.lane.b32.xlu0 %v5678, 72
      %v5818 = vpop.permute.xlu0 %5817
      %5819 = vrot.lane.b32.xlu0 %v5679, 72
      %v5820 = vpop.permute.xlu0 %5819
      %5821 = vrot.lane.b32.xlu0 %v5680, 72
      %v5822 = vpop.permute.xlu0 %5821
      %5823 = vrot.lane.b32.xlu0 %v5681, 72
      %v5824 = vpop.permute.xlu0 %5823
      %5825 = vrot.lane.b32.xlu0 %v5682, 72
      %v5826 = vpop.permute.xlu0 %5825
      %5827 = vrot.lane.b32.xlu0 %v5683, 72
      %v5828 = vpop.permute.xlu0 %5827
      %5829 = vrot.lane.b32.xlu0 %v5684, 72
      %v5830 = vpop.permute.xlu0 %5829
      %5831 = vrot.lane.b32.xlu0 %v5685, 72
      %v5832 = vpop.permute.xlu0 %5831
      %5833 = vrot.lane.b32.xlu0 %v5686, 72
      %v5834 = vpop.permute.xlu0 %5833
      %5835 = vrot.lane.b32.xlu0 %v5687, 72
      %v5836 = vpop.permute.xlu0 %5835
      %5837 = vrot.lane.b32.xlu0 %v5688, 72
      %v5838 = vpop.permute.xlu0 %5837
      %vm5889 = vcmask 622144
      %5890 = vst.msk [vmem:[#allocation4] sm:$0xff] %vm5889, %v5740
      %5891 = vst.msk [vmem:[#allocation4 + $0x8] sm:$0xff] %vm5889, %v5742
      %5892 = vst.msk [vmem:[#allocation4 + $0x10] sm:$0xff] %vm5889, %v5744
      %5893 = vst.msk [vmem:[#allocation4 + $0x18] sm:$0xff] %vm5889, %v5746
      %5894 = vst.msk [vmem:[#allocation4 + $0x20] sm:$0xff] %vm5889, %v5748
      %5895 = vst.msk [vmem:[#allocation4 + $0x28] sm:$0xff] %vm5889, %v5750
      %5896 = vst.msk [vmem:[#allocation4 + $0x30] sm:$0xff] %vm5889, %v5752
      %5897 = vst.msk [vmem:[#allocation4 + $0x38] sm:$0xff] %vm5889, %v5754
      %5898 = vst.msk [vmem:[#allocation4 + $0x40] sm:$0xff] %vm5889, %v5756
      %5899 = vst.msk [vmem:[#allocation4 + $0x48] sm:$0xff] %vm5889, %v5758
      %5900 = vst.msk [vmem:[#allocation4 + $0x50] sm:$0xff] %vm5889, %v5760
      %5901 = vst.msk [vmem:[#allocation4 + $0x58] sm:$0xff] %vm5889, %v5762
      %5902 = vst.msk [vmem:[#allocation4 + $0x60] sm:$0xff] %vm5889, %v5764
      %5903 = vst.msk [vmem:[#allocation4 + $0x68] sm:$0xff] %vm5889, %v5766
      %5904 = vst.msk [vmem:[#allocation4 + $0x70] sm:$0xff] %vm5889, %v5768
      %5905 = vst.msk [vmem:[#allocation4 + $0x78] sm:$0xff] %vm5889, %v5770
      %5906 = vst.msk [vmem:[#allocation4 + $0x80] sm:$0xff] %vm5889, %v5772
      %5907 = vst.msk [vmem:[#allocation4 + $0x88] sm:$0xff] %vm5889, %v5774
      %5908 = vst.msk [vmem:[#allocation4 + $0x90] sm:$0xff] %vm5889, %v5776
      %5909 = vst.msk [vmem:[#allocation4 + $0x98] sm:$0xff] %vm5889, %v5778
      %5910 = vst.msk [vmem:[#allocation4 + $0xa0] sm:$0xff] %vm5889, %v5780
      %5911 = vst.msk [vmem:[#allocation4 + $0xa8] sm:$0xff] %vm5889, %v5782
      %5912 = vst.msk [vmem:[#allocation4 + $0xb0] sm:$0xff] %vm5889, %v5784
      %5913 = vst.msk [vmem:[#allocation4 + $0xb8] sm:$0xff] %vm5889, %v5786
      %5914 = vst.msk [vmem:[#allocation4 + $0xc0] sm:$0xff] %vm5889, %v5788
      %5915 = vst.msk [vmem:[#allocation4 + $0xc8] sm:$0xff] %vm5889, %v5790
      %5916 = vst.msk [vmem:[#allocation4 + $0xd0] sm:$0xff] %vm5889, %v5792
      %5917 = vst.msk [vmem:[#allocation4 + $0xd8] sm:$0xff] %vm5889, %v5794
      %5918 = vst.msk [vmem:[#allocation4 + $0xe0] sm:$0xff] %vm5889, %v5796
      %5919 = vst.msk [vmem:[#allocation4 + $0xe8] sm:$0xff] %vm5889, %v5798
      %5920 = vst.msk [vmem:[#allocation4 + $0xf0] sm:$0xff] %vm5889, %v5800
      %5921 = vst.msk [vmem:[#allocation4 + $0xf8] sm:$0xff] %vm5889, %v5802
      %5922 = vst.msk [vmem:[#allocation4 + $0x100] sm:$0xff] %vm5889, %v5804
      %5923 = vst.msk [vmem:[#allocation4 + $0x108] sm:$0xff] %vm5889, %v5806
      %5924 = vst.msk [vmem:[#allocation4 + $0x110] sm:$0xff] %vm5889, %v5808
      %5925 = vst.msk [vmem:[#allocation4 + $0x118] sm:$0xff] %vm5889, %v5810
      %5926 = vst.msk [vmem:[#allocation4 + $0x120] sm:$0xff] %vm5889, %v5812
      %5927 = vst.msk [vmem:[#allocation4 + $0x128] sm:$0xff] %vm5889, %v5814
      %5928 = vst.msk [vmem:[#allocation4 + $0x130] sm:$0xff] %vm5889, %v5816
      %5929 = vst.msk [vmem:[#allocation4 + $0x138] sm:$0xff] %vm5889, %v5818
      %5930 = vst.msk [vmem:[#allocation4 + $0x140] sm:$0xff] %vm5889, %v5820
      %5931 = vst.msk [vmem:[#allocation4 + $0x148] sm:$0xff] %vm5889, %v5822
      %5932 = vst.msk [vmem:[#allocation4 + $0x150] sm:$0xff] %vm5889, %v5824
      %5933 = vst.msk [vmem:[#allocation4 + $0x158] sm:$0xff] %vm5889, %v5826
      %5934 = vst.msk [vmem:[#allocation4 + $0x160] sm:$0xff] %vm5889, %v5828
      %5935 = vst.msk [vmem:[#allocation4 + $0x168] sm:$0xff] %vm5889, %v5830
      %5936 = vst.msk [vmem:[#allocation4 + $0x170] sm:$0xff] %vm5889, %v5832
      %5937 = vst.msk [vmem:[#allocation4 + $0x178] sm:$0xff] %vm5889, %v5834
      %5938 = vst.msk [vmem:[#allocation4 + $0x180] sm:$0xff] %vm5889, %v5836
      %5939 = vst.msk [vmem:[#allocation4 + $0x188] sm:$0xff] %vm5889, %v5838
      %v5940 = vld [vmem:[#allocation4] sm:$0xff]
      %v5941 = vld [vmem:[#allocation4 + $0x8] sm:$0xff]
      %v5942 = vld [vmem:[#allocation4 + $0x10] sm:$0xff]
      %v5943 = vld [vmem:[#allocation4 + $0x18] sm:$0xff]
      %v5944 = vld [vmem:[#allocation4 + $0x20] sm:$0xff]
      %v5945 = vld [vmem:[#allocation4 + $0x28] sm:$0xff]
      %v5946 = vld [vmem:[#allocation4 + $0x30] sm:$0xff]
      %v5947 = vld [vmem:[#allocation4 + $0x38] sm:$0xff]
      %v5948 = vld [vmem:[#allocation4 + $0x40] sm:$0xff]
      %v5949 = vld [vmem:[#allocation4 + $0x48] sm:$0xff]
      %v5950 = vld [vmem:[#allocation4 + $0x50] sm:$0xff]
      %v5951 = vld [vmem:[#allocation4 + $0x58] sm:$0xff]
      %v5952 = vld [vmem:[#allocation4 + $0x60] sm:$0xff]
      %v5953 = vld [vmem:[#allocation4 + $0x68] sm:$0xff]
      %v5954 = vld [vmem:[#allocation4 + $0x70] sm:$0xff]
      %v5955 = vld [vmem:[#allocation4 + $0x78] sm:$0xff]
      %v5956 = vld [vmem:[#allocation4 + $0x80] sm:$0xff]
      %v5957 = vld [vmem:[#allocation4 + $0x88] sm:$0xff]
      %v5958 = vld [vmem:[#allocation4 + $0x90] sm:$0xff]
      %v5959 = vld [vmem:[#allocation4 + $0x98] sm:$0xff]
      %v5960 = vld [vmem:[#allocation4 + $0xa0] sm:$0xff]
      %v5961 = vld [vmem:[#allocation4 + $0xa8] sm:$0xff]
      %v5962 = vld [vmem:[#allocation4 + $0xb0] sm:$0xff]
      %v5963 = vld [vmem:[#allocation4 + $0xb8] sm:$0xff]
      %v5964 = vld [vmem:[#allocation4 + $0xc0] sm:$0xff]
      %v5965 = vld [vmem:[#allocation4 + $0xc8] sm:$0xff]
      %v5966 = vld [vmem:[#allocation4 + $0xd0] sm:$0xff]
      %v5967 = vld [vmem:[#allocation4 + $0xd8] sm:$0xff]
      %v5968 = vld [vmem:[#allocation4 + $0xe0] sm:$0xff]
      %v5969 = vld [vmem:[#allocation4 + $0xe8] sm:$0xff]
      %v5970 = vld [vmem:[#allocation4 + $0xf0] sm:$0xff]
      %v5971 = vld [vmem:[#allocation4 + $0xf8] sm:$0xff]
      %v5972 = vld [vmem:[#allocation4 + $0x100] sm:$0xff]
      %v5973 = vld [vmem:[#allocation4 + $0x108] sm:$0xff]
      %v5974 = vld [vmem:[#allocation4 + $0x110] sm:$0xff]
      %v5975 = vld [vmem:[#allocation4 + $0x118] sm:$0xff]
      %v5976 = vld [vmem:[#allocation4 + $0x120] sm:$0xff]
      %v5977 = vld [vmem:[#allocation4 + $0x128] sm:$0xff]
      %v5978 = vld [vmem:[#allocation4 + $0x130] sm:$0xff]
      %v5979 = vld [vmem:[#allocation4 + $0x138] sm:$0xff]
      %v5980 = vld [vmem:[#allocation4 + $0x140] sm:$0xff]
      %v5981 = vld [vmem:[#allocation4 + $0x148] sm:$0xff]
      %v5982 = vld [vmem:[#allocation4 + $0x150] sm:$0xff]
      %v5983 = vld [vmem:[#allocation4 + $0x158] sm:$0xff]
      %v5984 = vld [vmem:[#allocation4 + $0x160] sm:$0xff]
      %v5985 = vld [vmem:[#allocation4 + $0x168] sm:$0xff]
      %v5986 = vld [vmem:[#allocation4 + $0x170] sm:$0xff]
      %v5987 = vld [vmem:[#allocation4 + $0x178] sm:$0xff]
      %v5988 = vld [vmem:[#allocation4 + $0x180] sm:$0xff]
      %v5989 = vld [vmem:[#allocation4 + $0x188] sm:$0xff]
      %v5990 = vld [vmem:[%s4] sm:$0xff]
      %v5991 = vld [vmem:[%s4 + $0x8] sm:$0xff]
      %v5992 = vld [vmem:[%s4 + $0x10] sm:$0xff]
      %v5993 = vld [vmem:[%s4 + $0x18] sm:$0xff]
      %v5994 = vld [vmem:[%s4 + $0x20] sm:$0xff]
      %v5995 = vld [vmem:[%s4 + $0x28] sm:$0xff]
      %v5996 = vld [vmem:[%s4 + $0x30] sm:$0xff]
      %v5997 = vld [vmem:[%s4 + $0x38] sm:$0xff]
      %v5998 = vld [vmem:[%s4 + $0x40] sm:$0xff]
      %v5999 = vld [vmem:[%s4 + $0x48] sm:$0xf]
      %v6000 = vld [vmem:[%s5] sm:$0x1]
      %v6002 = vlaneseq
      %v6003 = vshrl.u32 %v6002, 7
      %v6004 = vsub.s32 0, %v6003
      %v6005 = vrot.slane %v6000, %v6004
      %vm6007 = vcmask 621568
      %v6009 = vsel %vm6007, %v5940, 0
      %v6012 = vsel %vm6007, %v5941, 0
      %v6015 = vsel %vm6007, %v5942, 0
      %v6018 = vsel %vm6007, %v5943, 0
      %v6021 = vsel %vm6007, %v5944, 0
      %v6024 = vsel %vm6007, %v5945, 0
      %v6027 = vsel %vm6007, %v5946, 0
      %v6030 = vsel %vm6007, %v5947, 0
      %v6033 = vsel %vm6007, %v5948, 0
      %v6036 = vsel %vm6007, %v5949, 0
      %v6039 = vsel %vm6007, %v5950, 0
      %v6042 = vsel %vm6007, %v5951, 0
      %v6045 = vsel %vm6007, %v5952, 0
      %v6048 = vsel %vm6007, %v5953, 0
      %v6051 = vsel %vm6007, %v5954, 0
      %v6054 = vsel %vm6007, %v5955, 0
      %v6057 = vsel %vm6007, %v5956, 0
      %v6060 = vsel %vm6007, %v5957, 0
      %v6063 = vsel %vm6007, %v5958, 0
      %v6066 = vsel %vm6007, %v5959, 0
      %v6069 = vsel %vm6007, %v5960, 0
      %v6072 = vsel %vm6007, %v5961, 0
      %v6075 = vsel %vm6007, %v5962, 0
      %v6078 = vsel %vm6007, %v5963, 0
      %v6081 = vsel %vm6007, %v5964, 0
      %v6084 = vsel %vm6007, %v5965, 0
      %v6087 = vsel %vm6007, %v5966, 0
      %v6090 = vsel %vm6007, %v5967, 0
      %v6093 = vsel %vm6007, %v5968, 0
      %v6096 = vsel %vm6007, %v5969, 0
      %v6099 = vsel %vm6007, %v5970, 0
      %v6102 = vsel %vm6007, %v5971, 0
      %v6105 = vsel %vm6007, %v5972, 0
      %v6108 = vsel %vm6007, %v5973, 0
      %v6111 = vsel %vm6007, %v5974, 0
      %v6114 = vsel %vm6007, %v5975, 0
      %v6117 = vsel %vm6007, %v5976, 0
      %v6120 = vsel %vm6007, %v5977, 0
      %v6123 = vsel %vm6007, %v5978, 0
      %v6126 = vsel %vm6007, %v5979, 0
      %v6129 = vsel %vm6007, %v5980, 0
      %v6132 = vsel %vm6007, %v5981, 0
      %v6135 = vsel %vm6007, %v5982, 0
      %v6138 = vsel %vm6007, %v5983, 0
      %v6141 = vsel %vm6007, %v5984, 0
      %v6144 = vsel %vm6007, %v5985, 0
      %v6147 = vsel %vm6007, %v5986, 0
      %v6150 = vsel %vm6007, %v5987, 0
      %v6153 = vsel %vm6007, %v5988, 0
      %v6156 = vsel %vm6007, %v5989, 0
      %v6159 = vsel %vm2443, %v5999, 0
      %6161 = vmatprep.subr.mxu0 0.0
      %6162 = vmatpush1.msra.mxu0 0.0
      %6163 = vmatprep.subr.mxu0 0.0
      %6164 = vmatpush1.msra.mxu0 0.0
      %6165 = vmatprep.subr.mxu0 0.0
      %6166 = vmatpush1.msra.mxu0 0.0
      %6167 = vmatprep.subr.mxu0 0.0
      %6168 = vmatpush1.msra.mxu0 0.0
      %6169 = vmatprep.subr.mxu0 0.0
      %6170 = vmatpush1.msra.mxu0 0.0
      %6171 = vmatprep.subr.mxu0 0.0
      %6172 = vmatpush1.msra.mxu0 0.0
      %6173 = vmatprep.subr.mxu0 0.0
      %6174 = vmatpush1.msra.mxu0 %v6159
      %6175 = vmatprep.subr.mxu0 0.0
      %6176 = vmatpush1.msra.mxu0 %v5998
      %6177 = vmatprep.subr.mxu0 0.0
      %6178 = vmatpush1.msra.mxu0 %v5997
      %6179 = vmatprep.subr.mxu0 0.0
      %6180 = vmatpush1.msra.mxu0 %v5996
      %6181 = vmatprep.subr.mxu0 0.0
      %6182 = vmatpush1.msra.mxu0 %v5995
      %6183 = vmatprep.subr.mxu0 0.0
      %6184 = vmatpush1.msra.mxu0 %v5994
      %6185 = vmatprep.subr.mxu0 0.0
      %6186 = vmatpush1.msra.mxu0 %v5993
      %6187 = vmatprep.subr.mxu0 0.0
      %6188 = vmatpush1.msra.mxu0 %v5992
      %6189 = vmatprep.subr.mxu0 0.0
      %6190 = vmatpush1.msra.mxu0 %v5991
      %6191 = vmatprep.subr.mxu0 0.0
      %6192 = vmatpush1.msra.mxu0 %v5990
      %6193 = vmatprep.subr.mxu0 0.0
      %6194 = vmatpush2.msra.mxu0 0.0
      %6195 = vmatprep.subr.mxu0 0.0
      %6196 = vmatpush2.msra.mxu0 0.0
      %6197 = vmatprep.subr.mxu0 0.0
      %6198 = vmatpush2.msra.mxu0 0.0
      %6199 = vmatprep.subr.mxu0 0.0
      %6200 = vmatpush2.msra.mxu0 0.0
      %6201 = vmatprep.subr.mxu0 0.0
      %6202 = vmatpush2.msra.mxu0 0.0
      %6203 = vmatprep.subr.mxu0 0.0
      %6204 = vmatpush2.msra.mxu0 0.0
      %6205 = vmatprep.subr.mxu0 0.0
      %6206 = vmatpush2.msra.mxu0 0.0
      %6207 = vmatprep.subr.mxu0 0.0
      %6208 = vmatpush2.msra.mxu0 0.0
      %6209 = vmatprep.subr.mxu0 0.0
      %6210 = vmatpush2.msra.mxu0 0.0
      %6211 = vmatprep.subr.mxu0 0.0
      %6212 = vmatpush2.msra.mxu0 0.0
      %6213 = vmatprep.subr.mxu0 0.0
      %6214 = vmatpush2.msra.mxu0 0.0
      %6215 = vmatprep.subr.mxu0 0.0
      %6216 = vmatpush2.msra.mxu0 0.0
      %6217 = vmatprep.subr.mxu0 0.0
      %6218 = vmatpush2.msra.mxu0 0.0
      %6219 = vmatprep.subr.mxu0 0.0
      %6220 = vmatpush2.msra.mxu0 0.0
      %6221 = vmatprep.subr.mxu0 0.0
      %6222 = vmatpush2.msra.mxu0 0.0
      %6223 = vmatprep.subr.mxu0 0.0
      %6224 = vmatpush2.msra.mxu0 0.0
      %6225 = vmatprep.mubr.f32.mxu0 0.0
      %6226 = vmatmul.mubr.f32.gmra.mxu0 %v6009
      %v6227 = vpop.f32.mrf.mxu0
      %v6228 = vadd.f32 %v6005, %v6227
      %v6229 = vpop.f32.mrf.mxu0
      %6230 = vmatprep.mubr.f32.mxu0 0.0
      %6231 = vmatmul.mubr.f32.gmra.mxu0 %v6012
      %v6232 = vpop.f32.mrf.mxu0
      %v6233 = vadd.f32 %v6005, %v6232
      %v6234 = vpop.f32.mrf.mxu0
      %6235 = vmatprep.mubr.f32.mxu0 0.0
      %6236 = vmatmul.mubr.f32.gmra.mxu0 %v6015
      %v6237 = vpop.f32.mrf.mxu0
      %v6238 = vadd.f32 %v6005, %v6237
      %v6239 = vpop.f32.mrf.mxu0
      %6240 = vmatprep.mubr.f32.mxu0 0.0
      %6241 = vmatmul.mubr.f32.gmra.mxu0 %v6018
      %v6242 = vpop.f32.mrf.mxu0
      %v6243 = vadd.f32 %v6005, %v6242
      %v6244 = vpop.f32.mrf.mxu0
      %6245 = vmatprep.mubr.f32.mxu0 0.0
      %6246 = vmatmul.mubr.f32.gmra.mxu0 %v6021
      %v6247 = vpop.f32.mrf.mxu0
      %v6248 = vadd.f32 %v6005, %v6247
      %v6249 = vpop.f32.mrf.mxu0
      %6250 = vmatprep.mubr.f32.mxu0 0.0
      %6251 = vmatmul.mubr.f32.gmra.mxu0 %v6024
      %v6252 = vpop.f32.mrf.mxu0
      %v6253 = vadd.f32 %v6005, %v6252
      %v6254 = vpop.f32.mrf.mxu0
      %6255 = vmatprep.mubr.f32.mxu0 0.0
      %6256 = vmatmul.mubr.f32.gmra.mxu0 %v6027
      %v6257 = vpop.f32.mrf.mxu0
      %v6258 = vadd.f32 %v6005, %v6257
      %v6259 = vpop.f32.mrf.mxu0
      %6260 = vmatprep.mubr.f32.mxu0 0.0
      %6261 = vmatmul.mubr.f32.gmra.mxu0 %v6030
      %v6262 = vpop.f32.mrf.mxu0
      %v6263 = vadd.f32 %v6005, %v6262
      %v6264 = vpop.f32.mrf.mxu0
      %6265 = vmatprep.mubr.f32.mxu0 0.0
      %6266 = vmatmul.mubr.f32.gmra.mxu0 %v6033
      %v6267 = vpop.f32.mrf.mxu0
      %v6268 = vadd.f32 %v6005, %v6267
      %v6269 = vpop.f32.mrf.mxu0
      %6270 = vmatprep.mubr.f32.mxu0 0.0
      %6271 = vmatmul.mubr.f32.gmra.mxu0 %v6036
      %v6272 = vpop.f32.mrf.mxu0
      %v6273 = vadd.f32 %v6005, %v6272
      %v6274 = vpop.f32.mrf.mxu0
      %6275 = vmatprep.mubr.f32.mxu0 0.0
      %6276 = vmatmul.mubr.f32.gmra.mxu0 %v6039
      %v6277 = vpop.f32.mrf.mxu0
      %v6278 = vadd.f32 %v6005, %v6277
      %v6279 = vpop.f32.mrf.mxu0
      %6280 = vmatprep.mubr.f32.mxu0 0.0
      %6281 = vmatmul.mubr.f32.gmra.mxu0 %v6042
      %v6282 = vpop.f32.mrf.mxu0
      %v6283 = vadd.f32 %v6005, %v6282
      %v6284 = vpop.f32.mrf.mxu0
      %6285 = vmatprep.mubr.f32.mxu0 0.0
      %6286 = vmatmul.mubr.f32.gmra.mxu0 %v6045
      %v6287 = vpop.f32.mrf.mxu0
      %v6288 = vadd.f32 %v6005, %v6287
      %v6289 = vpop.f32.mrf.mxu0
      %6290 = vmatprep.mubr.f32.mxu0 0.0
      %6291 = vmatmul.mubr.f32.gmra.mxu0 %v6048
      %v6292 = vpop.f32.mrf.mxu0
      %v6293 = vadd.f32 %v6005, %v6292
      %v6294 = vpop.f32.mrf.mxu0
      %6295 = vmatprep.mubr.f32.mxu0 0.0
      %6296 = vmatmul.mubr.f32.gmra.mxu0 %v6051
      %v6297 = vpop.f32.mrf.mxu0
      %v6298 = vadd.f32 %v6005, %v6297
      %v6299 = vpop.f32.mrf.mxu0
      %6300 = vmatprep.mubr.f32.mxu0 0.0
      %6301 = vmatmul.mubr.f32.gmra.mxu0 %v6054
      %v6302 = vpop.f32.mrf.mxu0
      %v6303 = vadd.f32 %v6005, %v6302
      %v6304 = vpop.f32.mrf.mxu0
      %6305 = vmatprep.mubr.f32.mxu0 0.0
      %6306 = vmatmul.mubr.f32.gmra.mxu0 %v6057
      %v6307 = vpop.f32.mrf.mxu0
      %v6308 = vadd.f32 %v6005, %v6307
      %v6309 = vpop.f32.mrf.mxu0
      %6310 = vmatprep.mubr.f32.mxu0 0.0
      %6311 = vmatmul.mubr.f32.gmra.mxu0 %v6060
      %v6312 = vpop.f32.mrf.mxu0
      %v6313 = vadd.f32 %v6005, %v6312
      %v6314 = vpop.f32.mrf.mxu0
      %6315 = vmatprep.mubr.f32.mxu0 0.0
      %6316 = vmatmul.mubr.f32.gmra.mxu0 %v6063
      %v6317 = vpop.f32.mrf.mxu0
      %v6318 = vadd.f32 %v6005, %v6317
      %v6319 = vpop.f32.mrf.mxu0
      %6320 = vmatprep.mubr.f32.mxu0 0.0
      %6321 = vmatmul.mubr.f32.gmra.mxu0 %v6066
      %v6322 = vpop.f32.mrf.mxu0
      %v6323 = vadd.f32 %v6005, %v6322
      %v6324 = vpop.f32.mrf.mxu0
      %6325 = vmatprep.mubr.f32.mxu0 0.0
      %6326 = vmatmul.mubr.f32.gmra.mxu0 %v6069
      %v6327 = vpop.f32.mrf.mxu0
      %v6328 = vadd.f32 %v6005, %v6327
      %v6329 = vpop.f32.mrf.mxu0
      %6330 = vmatprep.mubr.f32.mxu0 0.0
      %6331 = vmatmul.mubr.f32.gmra.mxu0 %v6072
      %v6332 = vpop.f32.mrf.mxu0
      %v6333 = vadd.f32 %v6005, %v6332
      %v6334 = vpop.f32.mrf.mxu0
      %6335 = vmatprep.mubr.f32.mxu0 0.0
      %6336 = vmatmul.mubr.f32.gmra.mxu0 %v6075
      %v6337 = vpop.f32.mrf.mxu0
      %v6338 = vadd.f32 %v6005, %v6337
      %v6339 = vpop.f32.mrf.mxu0
      %6340 = vmatprep.mubr.f32.mxu0 0.0
      %6341 = vmatmul.mubr.f32.gmra.mxu0 %v6078
      %v6342 = vpop.f32.mrf.mxu0
      %v6343 = vadd.f32 %v6005, %v6342
      %v6344 = vpop.f32.mrf.mxu0
      %6345 = vmatprep.mubr.f32.mxu0 0.0
      %6346 = vmatmul.mubr.f32.gmra.mxu0 %v6081
      %v6347 = vpop.f32.mrf.mxu0
      %v6348 = vadd.f32 %v6005, %v6347
      %v6349 = vpop.f32.mrf.mxu0
      %6350 = vmatprep.mubr.f32.mxu0 0.0
      %6351 = vmatmul.mubr.f32.gmra.mxu0 %v6084
      %v6352 = vpop.f32.mrf.mxu0
      %v6353 = vadd.f32 %v6005, %v6352
      %v6354 = vpop.f32.mrf.mxu0
      %6355 = vmatprep.mubr.f32.mxu0 0.0
      %6356 = vmatmul.mubr.f32.gmra.mxu0 %v6087
      %v6357 = vpop.f32.mrf.mxu0
      %v6358 = vadd.f32 %v6005, %v6357
      %v6359 = vpop.f32.mrf.mxu0
      %6360 = vmatprep.mubr.f32.mxu0 0.0
      %6361 = vmatmul.mubr.f32.gmra.mxu0 %v6090
      %v6362 = vpop.f32.mrf.mxu0
      %v6363 = vadd.f32 %v6005, %v6362
      %v6364 = vpop.f32.mrf.mxu0
      %6365 = vmatprep.mubr.f32.mxu0 0.0
      %6366 = vmatmul.mubr.f32.gmra.mxu0 %v6093
      %v6367 = vpop.f32.mrf.mxu0
      %v6368 = vadd.f32 %v6005, %v6367
      %v6369 = vpop.f32.mrf.mxu0
      %6370 = vmatprep.mubr.f32.mxu0 0.0
      %6371 = vmatmul.mubr.f32.gmra.mxu0 %v6096
      %v6372 = vpop.f32.mrf.mxu0
      %v6373 = vadd.f32 %v6005, %v6372
      %v6374 = vpop.f32.mrf.mxu0
      %6375 = vmatprep.mubr.f32.mxu0 0.0
      %6376 = vmatmul.mubr.f32.gmra.mxu0 %v6099
      %v6377 = vpop.f32.mrf.mxu0
      %v6378 = vadd.f32 %v6005, %v6377
      %v6379 = vpop.f32.mrf.mxu0
      %6380 = vmatprep.mubr.f32.mxu0 0.0
      %6381 = vmatmul.mubr.f32.gmra.mxu0 %v6102
      %v6382 = vpop.f32.mrf.mxu0
      %v6383 = vadd.f32 %v6005, %v6382
      %v6384 = vpop.f32.mrf.mxu0
      %6385 = vmatprep.mubr.f32.mxu0 0.0
      %6386 = vmatmul.mubr.f32.gmra.mxu0 %v6105
      %v6387 = vpop.f32.mrf.mxu0
      %v6388 = vadd.f32 %v6005, %v6387
      %v6389 = vpop.f32.mrf.mxu0
      %6390 = vmatprep.mubr.f32.mxu0 0.0
      %6391 = vmatmul.mubr.f32.gmra.mxu0 %v6108
      %v6392 = vpop.f32.mrf.mxu0
      %v6393 = vadd.f32 %v6005, %v6392
      %v6394 = vpop.f32.mrf.mxu0
      %6395 = vmatprep.mubr.f32.mxu0 0.0
      %6396 = vmatmul.mubr.f32.gmra.mxu0 %v6111
      %v6397 = vpop.f32.mrf.mxu0
      %v6398 = vadd.f32 %v6005, %v6397
      %v6399 = vpop.f32.mrf.mxu0
      %6400 = vmatprep.mubr.f32.mxu0 0.0
      %6401 = vmatmul.mubr.f32.gmra.mxu0 %v6114
      %v6402 = vpop.f32.mrf.mxu0
      %v6403 = vadd.f32 %v6005, %v6402
      %v6404 = vpop.f32.mrf.mxu0
      %6405 = vmatprep.mubr.f32.mxu0 0.0
      %6406 = vmatmul.mubr.f32.gmra.mxu0 %v6117
      %v6407 = vpop.f32.mrf.mxu0
      %v6408 = vadd.f32 %v6005, %v6407
      %v6409 = vpop.f32.mrf.mxu0
      %6410 = vmatprep.mubr.f32.mxu0 0.0
      %6411 = vmatmul.mubr.f32.gmra.mxu0 %v6120
      %v6412 = vpop.f32.mrf.mxu0
      %v6413 = vadd.f32 %v6005, %v6412
      %v6414 = vpop.f32.mrf.mxu0
      %6415 = vmatprep.mubr.f32.mxu0 0.0
      %6416 = vmatmul.mubr.f32.gmra.mxu0 %v6123
      %v6417 = vpop.f32.mrf.mxu0
      %v6418 = vadd.f32 %v6005, %v6417
      %v6419 = vpop.f32.mrf.mxu0
      %6420 = vmatprep.mubr.f32.mxu0 0.0
      %6421 = vmatmul.mubr.f32.gmra.mxu0 %v6126
      %v6422 = vpop.f32.mrf.mxu0
      %v6423 = vadd.f32 %v6005, %v6422
      %v6424 = vpop.f32.mrf.mxu0
      %6425 = vmatprep.mubr.f32.mxu0 0.0
      %6426 = vmatmul.mubr.f32.gmra.mxu0 %v6129
      %v6427 = vpop.f32.mrf.mxu0
      %v6428 = vadd.f32 %v6005, %v6427
      %v6429 = vpop.f32.mrf.mxu0
      %6430 = vmatprep.mubr.f32.mxu0 0.0
      %6431 = vmatmul.mubr.f32.gmra.mxu0 %v6132
      %v6432 = vpop.f32.mrf.mxu0
      %v6433 = vadd.f32 %v6005, %v6432
      %v6434 = vpop.f32.mrf.mxu0
      %6435 = vmatprep.mubr.f32.mxu0 0.0
      %6436 = vmatmul.mubr.f32.gmra.mxu0 %v6135
      %v6437 = vpop.f32.mrf.mxu0
      %v6438 = vadd.f32 %v6005, %v6437
      %v6439 = vpop.f32.mrf.mxu0
      %6440 = vmatprep.mubr.f32.mxu0 0.0
      %6441 = vmatmul.mubr.f32.gmra.mxu0 %v6138
      %v6442 = vpop.f32.mrf.mxu0
      %v6443 = vadd.f32 %v6005, %v6442
      %v6444 = vpop.f32.mrf.mxu0
      %6445 = vmatprep.mubr.f32.mxu0 0.0
      %6446 = vmatmul.mubr.f32.gmra.mxu0 %v6141
      %v6447 = vpop.f32.mrf.mxu0
      %v6448 = vadd.f32 %v6005, %v6447
      %v6449 = vpop.f32.mrf.mxu0
      %6450 = vmatprep.mubr.f32.mxu0 0.0
      %6451 = vmatmul.mubr.f32.gmra.mxu0 %v6144
      %v6452 = vpop.f32.mrf.mxu0
      %v6453 = vadd.f32 %v6005, %v6452
      %v6454 = vpop.f32.mrf.mxu0
      %6455 = vmatprep.mubr.f32.mxu0 0.0
      %6456 = vmatmul.mubr.f32.gmra.mxu0 %v6147
      %v6457 = vpop.f32.mrf.mxu0
      %v6458 = vadd.f32 %v6005, %v6457
      %v6459 = vpop.f32.mrf.mxu0
      %6460 = vmatprep.mubr.f32.mxu0 0.0
      %6461 = vmatmul.mubr.f32.gmra.mxu0 %v6150
      %v6462 = vpop.f32.mrf.mxu0
      %v6463 = vadd.f32 %v6005, %v6462
      %v6464 = vpop.f32.mrf.mxu0
      %6465 = vmatprep.mubr.f32.mxu0 0.0
      %6466 = vmatmul.mubr.f32.gmra.mxu0 %v6153
      %v6467 = vpop.f32.mrf.mxu0
      %v6468 = vadd.f32 %v6005, %v6467
      %v6469 = vpop.f32.mrf.mxu0
      %6470 = vmatprep.mubr.f32.mxu0 0.0
      %6471 = vmatmul.mubr.f32.gmra.mxu0 %v6156
      %v6472 = vpop.f32.mrf.mxu0
      %v6473 = vadd.f32 %v6005, %v6472
      %v6474 = vpop.f32.mrf.mxu0
      %6475 = vdwg.mxu0
      %v6476 = vmax.f32 %v6228, 0.0
      %v6477 = vmax.f32 %v6233, 0.0
      %v6478 = vmax.f32 %v6238, 0.0
      %v6479 = vmax.f32 %v6243, 0.0
      %v6480 = vmax.f32 %v6248, 0.0
      %v6481 = vmax.f32 %v6253, 0.0
      %v6482 = vmax.f32 %v6258, 0.0
      %v6483 = vmax.f32 %v6263, 0.0
      %v6484 = vmax.f32 %v6268, 0.0
      %v6485 = vmax.f32 %v6273, 0.0
      %v6486 = vmax.f32 %v6278, 0.0
      %v6487 = vmax.f32 %v6283, 0.0
      %v6488 = vmax.f32 %v6288, 0.0
      %v6489 = vmax.f32 %v6293, 0.0
      %v6490 = vmax.f32 %v6298, 0.0
      %v6491 = vmax.f32 %v6303, 0.0
      %v6492 = vmax.f32 %v6308, 0.0
      %v6493 = vmax.f32 %v6313, 0.0
      %v6494 = vmax.f32 %v6318, 0.0
      %v6495 = vmax.f32 %v6323, 0.0
      %v6496 = vmax.f32 %v6328, 0.0
      %v6497 = vmax.f32 %v6333, 0.0
      %v6498 = vmax.f32 %v6338, 0.0
      %v6499 = vmax.f32 %v6343, 0.0
      %v6500 = vmax.f32 %v6348, 0.0
      %v6501 = vmax.f32 %v6353, 0.0
      %v6502 = vmax.f32 %v6358, 0.0
      %v6503 = vmax.f32 %v6363, 0.0
      %v6504 = vmax.f32 %v6368, 0.0
      %v6505 = vmax.f32 %v6373, 0.0
      %v6506 = vmax.f32 %v6378, 0.0
      %v6507 = vmax.f32 %v6383, 0.0
      %v6508 = vmax.f32 %v6388, 0.0
      %v6509 = vmax.f32 %v6393, 0.0
      %v6510 = vmax.f32 %v6398, 0.0
      %v6511 = vmax.f32 %v6403, 0.0
      %v6512 = vmax.f32 %v6408, 0.0
      %v6513 = vmax.f32 %v6413, 0.0
      %v6514 = vmax.f32 %v6418, 0.0
      %v6515 = vmax.f32 %v6423, 0.0
      %v6516 = vmax.f32 %v6428, 0.0
      %v6517 = vmax.f32 %v6433, 0.0
      %v6518 = vmax.f32 %v6438, 0.0
      %v6519 = vmax.f32 %v6443, 0.0
      %v6520 = vmax.f32 %v6448, 0.0
      %v6521 = vmax.f32 %v6453, 0.0
      %v6522 = vmax.f32 %v6458, 0.0
      %v6523 = vmax.f32 %v6463, 0.0
      %v6524 = vmax.f32 %v6468, 0.0
      %v6525 = vmax.f32 %v6473, 0.0
      %6526 = vst.msk [vmem:[%s251] sm:$0xff] %vm3032, %v6476
      %6527 = vst.msk [vmem:[%s251 + $0x8] sm:$0xff] %vm3032, %v6477
      %6528 = vst.msk [vmem:[%s251 + $0x10] sm:$0xff] %vm3032, %v6478
      %6529 = vst.msk [vmem:[%s251 + $0x18] sm:$0xff] %vm3032, %v6479
      %6530 = vst.msk [vmem:[%s251 + $0x20] sm:$0xff] %vm3032, %v6480
      %6531 = vst.msk [vmem:[%s251 + $0x28] sm:$0xff] %vm3032, %v6481
      %6532 = vst.msk [vmem:[%s251 + $0x30] sm:$0xff] %vm3032, %v6482
      %6533 = vst.msk [vmem:[%s251 + $0x38] sm:$0xff] %vm3032, %v6483
      %6534 = vst.msk [vmem:[%s251 + $0x40] sm:$0xff] %vm3032, %v6484
      %6535 = vst.msk [vmem:[%s251 + $0x48] sm:$0xff] %vm3032, %v6485
      %6536 = vst.msk [vmem:[%s251 + $0x50] sm:$0xff] %vm3032, %v6486
      %6537 = vst.msk [vmem:[%s251 + $0x58] sm:$0xff] %vm3032, %v6487
      %6538 = vst.msk [vmem:[%s251 + $0x60] sm:$0xff] %vm3032, %v6488
      %6539 = vst.msk [vmem:[%s251 + $0x68] sm:$0xff] %vm3032, %v6489
      %6540 = vst.msk [vmem:[%s251 + $0x70] sm:$0xff] %vm3032, %v6490
      %6541 = vst.msk [vmem:[%s251 + $0x78] sm:$0xff] %vm3032, %v6491
      %6542 = vst.msk [vmem:[%s251 + $0x80] sm:$0xff] %vm3032, %v6492
      %6543 = vst.msk [vmem:[%s251 + $0x88] sm:$0xff] %vm3032, %v6493
      %6544 = vst.msk [vmem:[%s251 + $0x90] sm:$0xff] %vm3032, %v6494
      %6545 = vst.msk [vmem:[%s251 + $0x98] sm:$0xff] %vm3032, %v6495
      %6546 = vst.msk [vmem:[%s251 + $0xa0] sm:$0xff] %vm3032, %v6496
      %6547 = vst.msk [vmem:[%s251 + $0xa8] sm:$0xff] %vm3032, %v6497
      %6548 = vst.msk [vmem:[%s251 + $0xb0] sm:$0xff] %vm3032, %v6498
      %6549 = vst.msk [vmem:[%s251 + $0xb8] sm:$0xff] %vm3032, %v6499
      %6550 = vst.msk [vmem:[%s251 + $0xc0] sm:$0xff] %vm3032, %v6500
      %6551 = vst.msk [vmem:[%s251 + $0xc8] sm:$0xff] %vm3032, %v6501
      %6552 = vst.msk [vmem:[%s251 + $0xd0] sm:$0xff] %vm3032, %v6502
      %6553 = vst.msk [vmem:[%s251 + $0xd8] sm:$0xff] %vm3032, %v6503
      %6554 = vst.msk [vmem:[%s251 + $0xe0] sm:$0xff] %vm3032, %v6504
      %6555 = vst.msk [vmem:[%s251 + $0xe8] sm:$0xff] %vm3032, %v6505
      %6556 = vst.msk [vmem:[%s251 + $0xf0] sm:$0xff] %vm3032, %v6506
      %6557 = vst.msk [vmem:[%s251 + $0xf8] sm:$0xff] %vm3032, %v6507
      %6558 = vst.msk [vmem:[%s251 + $0x100] sm:$0xff] %vm3032, %v6508
      %6559 = vst.msk [vmem:[%s251 + $0x108] sm:$0xff] %vm3032, %v6509
      %6560 = vst.msk [vmem:[%s251 + $0x110] sm:$0xff] %vm3032, %v6510
      %6561 = vst.msk [vmem:[%s251 + $0x118] sm:$0xff] %vm3032, %v6511
      %6562 = vst.msk [vmem:[%s251 + $0x120] sm:$0xff] %vm3032, %v6512
      %6563 = vst.msk [vmem:[%s251 + $0x128] sm:$0xff] %vm3032, %v6513
      %6564 = vst.msk [vmem:[%s251 + $0x130] sm:$0xff] %vm3032, %v6514
      %6565 = vst.msk [vmem:[%s251 + $0x138] sm:$0xff] %vm3032, %v6515
      %6566 = vst.msk [vmem:[%s251 + $0x140] sm:$0xff] %vm3032, %v6516
      %6567 = vst.msk [vmem:[%s251 + $0x148] sm:$0xff] %vm3032, %v6517
      %6568 = vst.msk [vmem:[%s251 + $0x150] sm:$0xff] %vm3032, %v6518
      %6569 = vst.msk [vmem:[%s251 + $0x158] sm:$0xff] %vm3032, %v6519
      %6570 = vst.msk [vmem:[%s251 + $0x160] sm:$0xff] %vm3032, %v6520
      %6571 = vst.msk [vmem:[%s251 + $0x168] sm:$0xff] %vm3032, %v6521
      %6572 = vst.msk [vmem:[%s251 + $0x170] sm:$0xff] %vm3032, %v6522
      %6573 = vst.msk [vmem:[%s251 + $0x178] sm:$0xff] %vm3032, %v6523
      %6574 = vst.msk [vmem:[%s251 + $0x180] sm:$0xff] %vm3032, %v6524
      %6575 = vst.msk [vmem:[%s251 + $0x188] sm:$0xff] %vm3032, %v6525
      %p6576 = scmp.lt.s32.totalorder %s17, 1
      %s6577 = scalar_select %p6576, %s17, 1
      %s6578 = smul.addr %s6577, 50
      %s6579 = smul.addr %s6578, 8
      %s6580 = scalar_lea.vmem %s6, %s6579
      // Predicated region
      $region45: #{resnet_forward.1} parent=43 // pred_check
        %p6581 = pneg %p166
      $region46: #{resnet_forward.1} parent=43 // pred_check_branch
        %6583 = sbr.rel (%p6581) target = $region48
      $region47: #{resnet_forward.1} parent=43 // pred_region
        _
      $region48: #{resnet_forward.1} parent=43 // pred_fallthru
        _
    $region44: #{resnet_forward.1} parent=5 // pred_fallthru
      _
    %p6584 = scmp.le.s32.totalorder 2, %s12
    // Predicated region
    $region49: #{resnet_forward.1} parent=5 // pred_check
      %p6585 = pneg %p6584
    $region50: #{resnet_forward.1} parent=5 // pred_check_branch
      %6587 = sbr.rel (%p6585) target = $region52
    $region51: #{resnet_forward.1} parent=5 // pred_region
      %s6588 = ssub.s32 %s12, 2
      // Predicated region
      $region53: #{resnet_forward.1} parent=51 // pred_check
        %p6589 = pneg %p172
      $region54: #{resnet_forward.1} parent=51 // pred_check_branch
        %6591 = sbr.rel (%p6589) target = $region56
      $region55: #{resnet_forward.1} parent=51 // pred_region
        %p6592 = scmp.lt.s32.totalorder %s18, 1
        %s6593 = scalar_select %p6592, %s18, 1
        %s6594 = smul.addr %s6593, 50
        %s6595 = smul.addr %s6594, 8
        %s6596 = scalar_lea.vmem %s6, %s6595
      $region56: #{resnet_forward.1} parent=51 // pred_fallthru
        _
    $region52: #{resnet_forward.1} parent=5 // pred_fallthru
      _
  $region6: #{resnet_forward.1} parent=0 // loop_footer
    %s16 = sadd.s32 1, %s12
  $region7: #{resnet_forward.1} parent=0 // loop_footer_branch
    %11 = sbr.rel target = $region3
  $region8: #{resnet_forward.1} parent=0 // loop_exit
    _

</llo_original>
